<compile_context>
chip_gen: v5e
topology: v5e:2x2
jax: 0.10.0
libtpu: 0.0.40
codegen_flags: <defaults>
</compile_context>

<pallas_src>
import functools

import jax
import jax.numpy as jnp
from jax import lax
from jax.experimental import pallas as pl
from jax.experimental.pallas import tpu as pltpu


# ----------------------------- fused Pallas kernel ---------------------------

def _make_fused_kernel(T, B, H, layers, c_pad, unroll):
    """Whole forward (LSTM stack + autoregressive classifier) in one kernel."""
    H4 = 4 * H
    n_in = 1 + 4 * layers + 3   # emb + per-layer (wih, bias, whh_f, whh_b) + cls

    def kernel(*refs):
        emb_ref = refs[0]
        layer_refs = [refs[1 + 4 * l: 1 + 4 * (l + 1)] for l in range(layers)]
        wcls_ref, wpast_ref, bcls_ref = refs[n_in - 3:n_in]
        out_ref = refs[n_in]
        xp_scr, hf_scr, hb_scr, h_scr, c_scr = refs[n_in + 1:n_in + 6]

        # ------------------- bidirectional LSTM stack ----------------------
        for l in range(layers):
            wih_ref, bias_ref, whhf_ref, whhb_ref = layer_refs[l]

            # Input projection for BOTH directions in one matmul per layer
            # ((T*B, F) @ (F, 8H)).  For l > 0 the input features are
            # [h_fwd | h_bwd]; instead of materializing the concat we split the
            # weight rows and use two dots reading the fwd/bwd scratch buffers.
            if l == 0:
                xp = jnp.dot(emb_ref[...], wih_ref[...],
                             preferred_element_type=jnp.float32)
            else:
                xp = (jnp.dot(hf_scr[...], wih_ref[0:H, :],
                              preferred_element_type=jnp.float32)
                      + jnp.dot(hb_scr[...], wih_ref[H:2 * H, :],
                                preferred_element_type=jnp.float32))
            xp_scr[...] = xp + bias_ref[...]          # (T*B, 8H), fwd | bwd

            # Recurrence over time, both directions per step.
            h_scr[...] = jnp.zeros_like(h_scr)        # (2B, H): rows 0:B fwd
            c_scr[...] = jnp.zeros_like(c_scr)        #          rows B:2B bwd
            w_f = whhf_ref[...]                       # hoisted weight loads
            w_b = whhb_ref[...]

            def lstm_step(t, carry, w_f=w_f, w_b=w_b):
                tb = t * B                  # forward processes time t
                rb = (T - 1 - t) * B        # backward processes time T-1-t
                xg_f = xp_scr[pl.ds(tb, B), 0:H4]
                xg_b = xp_scr[pl.ds(rb, B), H4:2 * H4]
                hs = h_scr[...]
                g_f = xg_f + jnp.dot(hs[0:B], w_f,
                                     preferred_element_type=jnp.float32)
                g_b = xg_b + jnp.dot(hs[B:2 * B], w_b,
                                     preferred_element_type=jnp.float32)
                gates = jnp.concatenate([g_f, g_b], axis=0)   # (2B, 4H)
                # PyTorch gate order: i, f, g, o
                i_g = jax.nn.sigmoid(gates[:, 0:H])
                f_g = jax.nn.sigmoid(gates[:, H:2 * H])
                g_g = jnp.tanh(gates[:, 2 * H:3 * H])
                o_g = jax.nn.sigmoid(gates[:, 3 * H:4 * H])
                c_new = f_g * c_scr[...] + i_g * g_g
                h_new = o_g * jnp.tanh(c_new)
                h_scr[...] = h_new
                c_scr[...] = c_new
                hf_scr[pl.ds(tb, B), :] = h_new[0:B]
                hb_scr[pl.ds(rb, B), :] = h_new[B:2 * B]
                return carry

            lax.fori_loop(0, T, lstm_step, 0, unroll=unroll)

        # ---------- autoregressive classifier (past = prev argmax) ----------
        w_h_f = wcls_ref[0:H, :]        # weight rows hitting the fwd half
        w_h_b = wcls_ref[H:2 * H, :]    # weight rows hitting the bwd half
        w_past = wpast_ref[...]         # (1, c_pad)
        b_cls = bcls_ref[...]           # (1, c_pad); pad lanes carry -1e30

        def cls_step(t, past):
            tb = t * B
            x_f = hf_scr[pl.ds(tb, B), :]
            x_b = hb_scr[pl.ds(tb, B), :]
            logits = (jnp.dot(x_f, w_h_f, preferred_element_type=jnp.float32)
                      + jnp.dot(x_b, w_h_b, preferred_element_type=jnp.float32)
                      + b_cls + past * w_past)                 # (B, c_pad)
            m = jnp.max(logits, axis=-1, keepdims=True)
            s = logits - m
            lse = jnp.log(jnp.sum(jnp.exp(s), axis=-1, keepdims=True))
            out_ref[pl.ds(tb, B), :] = s - lse                 # lane-dense store
            # first-max argmax as float (padded lanes at -1e30 never win)
            col = lax.broadcasted_iota(jnp.int32, logits.shape, 1).astype(
                jnp.float32)
            new_past = jnp.min(
                jnp.where(logits == m, col, jnp.float32(c_pad)),
                axis=-1, keepdims=True)
            return new_past

        lax.fori_loop(0, T, cls_step, jnp.zeros((B, 1), jnp.float32),
                      unroll=unroll)

    return kernel


# ------------------------------ forward wrapper ------------------------------

def lstm_ner_tf_forward(params, x_ids, hidden_size, layers, classes):
    # x_ids: (B, T) int32 token ids (PyTorch batch_first layout)
    B, T = x_ids.shape
    H = hidden_size
    c_pad = 128 * ((classes + 127) // 128)   # lane-dense class padding

    # Embedding gather + time-major flat layout done in plain JAX glue.
    # TODO(synk): could be folded into the kernel via a scalar-prefetch
    # pl.Element gather; secondary win compared to the launch fusion above.
    emb = jnp.take(params["embedding"], x_ids, axis=0)            # (B, T, E)
    emb_flat = jnp.transpose(emb, (1, 0, 2)).reshape(T * B, -1)   # (T*B, E)
    E = emb_flat.shape[-1]

    operands = [emb_flat]
    in_specs = [pl.BlockSpec((T * B, E), lambda i: (0, 0))]
    for l in range(layers):
        p = params["lstm"][l]
        f_in = E if l == 0 else 2 * H
        operands += [p["w_ih_t"], p["bias"].reshape(1, 8 * H),
                     p["w_hh_f_t"], p["w_hh_b_t"]]
        in_specs += [
            pl.BlockSpec((f_in, 8 * H), lambda i: (0, 0)),
            pl.BlockSpec((1, 8 * H), lambda i: (0, 0)),
            pl.BlockSpec((H, 4 * H), lambda i: (0, 0)),
            pl.BlockSpec((H, 4 * H), lambda i: (0, 0)),
        ]
    operands += [params["w_cls_t"], params["w_past"], params["b_cls"]]
    in_specs += [
        pl.BlockSpec((2 * H, c_pad), lambda i: (0, 0)),
        pl.BlockSpec((1, c_pad), lambda i: (0, 0)),
        pl.BlockSpec((1, c_pad), lambda i: (0, 0)),
    ]

    kernel = _make_fused_kernel(T, B, H, layers, c_pad, unroll=(T <= 32))

    out = pl.pallas_call(
        kernel,
        out_shape=jax.ShapeDtypeStruct((T * B, c_pad), jnp.float32),
        grid_spec=pltpu.PrefetchScalarGridSpec(
            num_scalar_prefetch=0,
            grid=(1,),
            in_specs=in_specs,
            out_specs=pl.BlockSpec((T * B, c_pad), lambda i: (0, 0)),
            scratch_shapes=[
                pltpu.VMEM((T * B, 8 * H), jnp.float32),  # xproj, both dirs
                pltpu.VMEM((T * B, H), jnp.float32),      # fwd hidden sequence
                pltpu.VMEM((T * B, H), jnp.float32),      # bwd hidden sequence
                pltpu.VMEM((2 * B, H), jnp.float32),      # h state (fwd|bwd)
                pltpu.VMEM((2 * B, H), jnp.float32),      # c state (fwd|bwd)
            ],
        ),
        compiler_params=pltpu.CompilerParams(
            dimension_semantics=("arbitrary",)),
    )(*operands)

    logp = out.reshape(T, B, c_pad)[:, :, :classes]   # drop padded lanes
    return jnp.transpose(logp, (1, 2, 0))             # (B, classes, T)


# --------------------------------- params ------------------------------------

def init_params(key, vocab_size, embedding_size, hidden_size, layers, classes):
    H = hidden_size
    c_pad = 128 * ((classes + 127) // 128)
    params = {}
    key, k = jax.random.split(key)
    params["embedding"] = 0.1 * jax.random.normal(
        k, (vocab_size, embedding_size), jnp.float32)

    lstm = []
    for l in range(layers):
        in_size = embedding_size if l == 0 else 2 * H
        w_ih_t, w_hh_t, biases = [], [], []
        for _d in range(2):                       # forward, backward
            key, k1, k2, k3, k4 = jax.random.split(key, 5)
            w_ih = 0.1 * jax.random.normal(k1, (4 * H, in_size), jnp.float32)
            w_hh = 0.1 * jax.random.normal(k2, (4 * H, H), jnp.float32)
            b_ih = 0.1 * jax.random.normal(k3, (4 * H,), jnp.float32)
            b_hh = 0.1 * jax.random.normal(k4, (4 * H,), jnp.float32)
            w_ih_t.append(w_ih.T)                 # (in_size, 4H)
            w_hh_t.append(w_hh.T)                 # (H, 4H)
            biases.append(b_ih + b_hh)            # (4H,)
        lstm.append(dict(
            w_ih_t=jnp.concatenate(w_ih_t, axis=1),   # (in_size, 8H) fwd|bwd
            bias=jnp.concatenate(biases),              # (8H,)
            w_hh_f_t=w_hh_t[0],
            w_hh_b_t=w_hh_t[1],
        ))
    params["lstm"] = lstm

    # classifier: nn.Linear(2H + 1, classes); last input feature is `past`.
    key, k1, k2 = jax.random.split(key, 3)
    w_cls = 0.1 * jax.random.normal(k1, (classes, 2 * H + 1), jnp.float32)
    b_cls = 0.1 * jax.random.normal(k2, (classes,), jnp.float32)
    pad = c_pad - classes
    params["w_cls_t"] = jnp.pad(w_cls[:, :2 * H].T, ((0, 0), (0, pad)))
    params["w_past"] = jnp.pad(w_cls[:, 2 * H:].T, ((0, 0), (0, pad)))
    params["b_cls"] = jnp.pad(b_cls, (0, pad),
                              constant_values=-1e30).reshape(1, c_pad)
    return params


# ------------------------ pure-JAX reference (check) -------------------------

def _ref_direction(xp, whh_t, H):
    def step(carry, xpt):
        h, c = carry
        gates = xpt + h @ whh_t
        i = jax.nn.sigmoid(gates[:, 0:H])
        f = jax.nn.sigmoid(gates[:, H:2 * H])
        g = jnp.tanh(gates[:, 2 * H:3 * H])
        o = jax.nn.sigmoid(gates[:, 3 * H:4 * H])
        c = f * c + i * g
        h = o * jnp.tanh(c)
        return (h, c), h

    B = xp.shape[1]
    init = (jnp.zeros((B, H), jnp.float32), jnp.zeros((B, H), jnp.float32))
    _, hs = lax.scan(step, init, xp)
    return hs


def reference_forward(params, x_ids, hidden_size, layers, classes):
    B, T = x_ids.shape
    H = hidden_size
    H4 = 4 * H
    emb = jnp.take(params["embedding"], x_ids, axis=0)
    x = jnp.transpose(emb, (1, 0, 2))                       # (T, B, E)
    for l in range(layers):
        p = params["lstm"][l]
        xp_f = x @ p["w_ih_t"][:, :H4] + p["bias"][:H4]
        xp_b = x @ p["w_ih_t"][:, H4:] + p["bias"][H4:]
        h_f = _ref_direction(xp_f, p["w_hh_f_t"], H)
        h_b = jnp.flip(_ref_direction(jnp.flip(xp_b, axis=0),
                                      p["w_hh_b_t"], H), axis=0)
        x = jnp.concatenate([h_f, h_b], axis=-1)            # (T, B, 2H)

    w_h = params["w_cls_t"][:, :classes]
    w_p = params["w_past"][:, :classes]
    b = params["b_cls"][0, :classes]
    past = jnp.zeros((B, 1), jnp.float32)
    ys = []
    for t in range(T):
        logits = x[t] @ w_h + past @ w_p + b
        ys.append(jax.nn.log_softmax(logits, axis=-1))
        past = jnp.argmax(logits, axis=-1)[:, None].astype(jnp.float32)
    y = jnp.stack(ys, axis=0)                               # (T, B, classes)
    return jnp.transpose(y, (1, 2, 0))                      # (B, classes, T)


# ---------------------------------- main --------------------------------------

if __name__ == "__main__":
    vocab_size = 50
    embedding_size = 16
    hidden_size = 32
    layers = 2
    classes = 9
    B, T = 2, 8

    key = jax.random.PRNGKey(0)
    key, pkey, xkey = jax.random.split(key, 3)
    params = init_params(pkey, vocab_size, embedding_size, hidden_size,
                         layers, classes)
    x_ids = jax.random.randint(xkey, (B, T), 0, vocab_size, dtype=jnp.int32)

    fwd = functools.partial(lstm_ner_tf_forward, hidden_size=hidden_size,
                            layers=layers, classes=classes)
    y = jax.jit(fwd)(params, x_ids)
    y = jax.block_until_ready(y)

    assert y.shape == (B, classes, T), y.shape

    y_ref = reference_forward(params, x_ids, hidden_size, layers, classes)
    assert jnp.allclose(y, y_ref, rtol=1e-4, atol=1e-4), float(
        jnp.max(jnp.abs(y - y_ref)))

    print("KERNEL_OK")
</pallas_src>

<mosaic_0001>
module attributes {stable_mosaic.version = 11 : i64} {
  func.func @kernel(%arg0: i32, %arg1: memref<16x16xf32, #tpu.memory_space<vmem>>, %arg2: memref<16x256xf32, #tpu.memory_space<vmem>>, %arg3: memref<1x256xf32, #tpu.memory_space<vmem>>, %arg4: memref<32x128xf32, #tpu.memory_space<vmem>>, %arg5: memref<32x128xf32, #tpu.memory_space<vmem>>, %arg6: memref<64x256xf32, #tpu.memory_space<vmem>>, %arg7: memref<1x256xf32, #tpu.memory_space<vmem>>, %arg8: memref<32x128xf32, #tpu.memory_space<vmem>>, %arg9: memref<32x128xf32, #tpu.memory_space<vmem>>, %arg10: memref<64x128xf32, #tpu.memory_space<vmem>>, %arg11: memref<1x128xf32, #tpu.memory_space<vmem>>, %arg12: memref<1x128xf32, #tpu.memory_space<vmem>>, %arg13: memref<16x128xf32, #tpu.memory_space<vmem>>, %arg14: memref<16x256xf32, #tpu.memory_space<vmem>>, %arg15: memref<16x32xf32, #tpu.memory_space<vmem>>, %arg16: memref<16x32xf32, #tpu.memory_space<vmem>>, %arg17: memref<4x32xf32, #tpu.memory_space<vmem>>, %arg18: memref<4x32xf32, #tpu.memory_space<vmem>>) attributes {dimension_semantics = [#tpu.dimension_semantics<arbitrary>], iteration_bounds = array<i64: 1>, scalar_prefetch = 0 : i64, scratch_operands = 5 : i64, tpu.core_type = #tpu.core_type<tc>, window_params = [{pipeline_mode = #tpu.pipeline_mode<synchronous>, transform_indices = @transform_0, window_bounds = array<i64: 16, 16>}, {pipeline_mode = #tpu.pipeline_mode<synchronous>, transform_indices = @transform_1, window_bounds = array<i64: 16, 256>}, {pipeline_mode = #tpu.pipeline_mode<synchronous>, transform_indices = @transform_2, window_bounds = array<i64: 1, 256>}, {pipeline_mode = #tpu.pipeline_mode<synchronous>, transform_indices = @transform_3, window_bounds = array<i64: 32, 128>}, {pipeline_mode = #tpu.pipeline_mode<synchronous>, transform_indices = @transform_4, window_bounds = array<i64: 32, 128>}, {pipeline_mode = #tpu.pipeline_mode<synchronous>, transform_indices = @transform_5, window_bounds = array<i64: 64, 256>}, {pipeline_mode = #tpu.pipeline_mode<synchronous>, transform_indices = @transform_6, window_bounds = array<i64: 1, 256>}, {pipeline_mode = #tpu.pipeline_mode<synchronous>, transform_indices = @transform_7, window_bounds = array<i64: 32, 128>}, {pipeline_mode = #tpu.pipeline_mode<synchronous>, transform_indices = @transform_8, window_bounds = array<i64: 32, 128>}, {pipeline_mode = #tpu.pipeline_mode<synchronous>, transform_indices = @transform_9, window_bounds = array<i64: 64, 128>}, {pipeline_mode = #tpu.pipeline_mode<synchronous>, transform_indices = @transform_10, window_bounds = array<i64: 1, 128>}, {pipeline_mode = #tpu.pipeline_mode<synchronous>, transform_indices = @transform_11, window_bounds = array<i64: 1, 128>}, {pipeline_mode = #tpu.pipeline_mode<synchronous>, transform_indices = @transform_12, window_bounds = array<i64: 16, 128>}]} {
    %c0 = arith.constant 0 : index
    %c0_0 = arith.constant 0 : index
    %0 = vector.load %arg1[%c0, %c0_0] : memref<16x16xf32, #tpu.memory_space<vmem>>, vector<16x16xf32>
    %c0_1 = arith.constant 0 : index
    %c0_2 = arith.constant 0 : index
    %1 = vector.load %arg2[%c0_1, %c0_2] : memref<16x256xf32, #tpu.memory_space<vmem>>, vector<16x256xf32>
    %cst = arith.constant dense<0.000000e+00> : vector<16x256xf32>
    %2 = tpu.matmul %0, %1, %cst {dimension_numbers = #tpu.dot_dimension_numbers<[1], [0], [0], [1], [0, 0, 1, 1], [], []>} : vector<16x16xf32>, vector<16x256xf32>, vector<16x256xf32> -> vector<16x256xf32>
    %c0_3 = arith.constant 0 : index
    %c0_4 = arith.constant 0 : index
    %3 = vector.load %arg3[%c0_3, %c0_4] : memref<1x256xf32, #tpu.memory_space<vmem>>, vector<1x256xf32>
    %4 = vector.broadcast %3 : vector<1x256xf32> to vector<16x256xf32>
    %5 = arith.addf %2, %4 : vector<16x256xf32>
    %c0_5 = arith.constant 0 : index
    %c0_6 = arith.constant 0 : index
    %6 = vector.load %arg14[%c0_5, %c0_6] : memref<16x256xf32, #tpu.memory_space<vmem>>, vector<16x256xf32>
    tpu.vector_store %arg14[%c0_5, %c0_6], %5 {strides = array<i32>} : memref<16x256xf32, #tpu.memory_space<vmem>>, vector<16x256xf32>,
    %cst_7 = arith.constant 0.000000e+00 : f32
    %7 = vector.broadcast %cst_7 : f32 to vector<4x32xf32>
    %c0_8 = arith.constant 0 : index
    %c0_9 = arith.constant 0 : index
    %8 = vector.load %arg17[%c0_8, %c0_9] : memref<4x32xf32, #tpu.memory_space<vmem>>, vector<4x32xf32>
    tpu.vector_store %arg17[%c0_8, %c0_9], %7 {strides = array<i32>} : memref<4x32xf32, #tpu.memory_space<vmem>>, vector<4x32xf32>,
    %cst_10 = arith.constant 0.000000e+00 : f32
    %9 = vector.broadcast %cst_10 : f32 to vector<4x32xf32>
    %c0_11 = arith.constant 0 : index
    %c0_12 = arith.constant 0 : index
    %10 = vector.load %arg18[%c0_11, %c0_12] : memref<4x32xf32, #tpu.memory_space<vmem>>, vector<4x32xf32>
    tpu.vector_store %arg18[%c0_11, %c0_12], %9 {strides = array<i32>} : memref<4x32xf32, #tpu.memory_space<vmem>>, vector<4x32xf32>,
    %c0_13 = arith.constant 0 : index
    %c0_14 = arith.constant 0 : index
    %11 = vector.load %arg4[%c0_13, %c0_14] : memref<32x128xf32, #tpu.memory_space<vmem>>, vector<32x128xf32>
    %c0_15 = arith.constant 0 : index
    %c0_16 = arith.constant 0 : index
    %12 = vector.load %arg5[%c0_15, %c0_16] : memref<32x128xf32, #tpu.memory_space<vmem>>, vector<32x128xf32>
    %c0_i32 = arith.constant 0 : i32
    %c2_i32 = arith.constant 2 : i32
    %13 = arith.muli %c0_i32, %c2_i32 : i32
    %c7_i32 = arith.constant 7 : i32
    %14 = arith.subi %c7_i32, %c0_i32 : i32
    %c2_i32_17 = arith.constant 2 : i32
    %15 = arith.muli %14, %c2_i32_17 : i32
    %16 = arith.index_cast %13 : i32 to index
    %c0_18 = arith.constant 0 : index
    %17 = vector.load %arg14[%16, %c0_18] : memref<16x256xf32, #tpu.memory_space<vmem>>, vector<2x128xf32>
    %18 = arith.index_cast %15 : i32 to index
    %c128 = arith.constant 128 : index
    %19 = vector.load %arg14[%18, %c128] : memref<16x256xf32, #tpu.memory_space<vmem>>, vector<2x128xf32>
    %c0_19 = arith.constant 0 : index
    %c0_20 = arith.constant 0 : index
    %20 = vector.load %arg17[%c0_19, %c0_20] : memref<4x32xf32, #tpu.memory_space<vmem>>, vector<4x32xf32>
    %21 = vector.extract_strided_slice %20 {offsets = [0, 0], sizes = [2, 32], strides = [1, 1]} : vector<4x32xf32> to vector<2x32xf32>
    %cst_21 = arith.constant dense<0.000000e+00> : vector<2x128xf32>
    %22 = tpu.matmul %21, %11, %cst_21 {dimension_numbers = #tpu.dot_dimension_numbers<[1], [0], [0], [1], [0, 0, 1, 1], [], []>} : vector<2x32xf32>, vector<32x128xf32>, vector<2x128xf32> -> vector<2x128xf32>
    %23 = arith.addf %17, %22 : vector<2x128xf32>
    %24 = vector.extract_strided_slice %20 {offsets = [2, 0], sizes = [2, 32], strides = [1, 1]} : vector<4x32xf32> to vector<2x32xf32>
    %cst_22 = arith.constant dense<0.000000e+00> : vector<2x128xf32>
    %25 = tpu.matmul %24, %12, %cst_22 {dimension_numbers = #tpu.dot_dimension_numbers<[1], [0], [0], [1], [0, 0, 1, 1], [], []>} : vector<2x32xf32>, vector<32x128xf32>, vector<2x128xf32> -> vector<2x128xf32>
    %26 = arith.addf %19, %25 : vector<2x128xf32>
    %27 = tpu.concatenate %23, %26 in 0 : vector<2x128xf32>, vector<2x128xf32> -> vector<4x128xf32>
    %28 = vector.extract_strided_slice %27 {offsets = [0, 0], sizes = [4, 32], strides = [1, 1]} : vector<4x128xf32> to vector<4x32xf32>
    %29 = arith.negf %28 : vector<4x32xf32>
    %30 = math.exp %29 : vector<4x32xf32>
    %cst_23 = arith.constant 1.000000e+00 : f32
    %31 = vector.broadcast %cst_23 : f32 to vector<4x32xf32>
    %32 = arith.addf %31, %30 : vector<4x32xf32>
    %33 = arith.divf %31, %32 : vector<4x32xf32>
    %34 = vector.extract_strided_slice %27 {offsets = [0, 32], sizes = [4, 32], strides = [1, 1]} : vector<4x128xf32> to vector<4x32xf32>
    %35 = arith.negf %34 : vector<4x32xf32>
    %36 = math.exp %35 : vector<4x32xf32>
    %cst_24 = arith.constant 1.000000e+00 : f32
    %37 = vector.broadcast %cst_24 : f32 to vector<4x32xf32>
    %38 = arith.addf %37, %36 : vector<4x32xf32>
    %39 = arith.divf %37, %38 : vector<4x32xf32>
    %40 = vector.extract_strided_slice %27 {offsets = [0, 64], sizes = [4, 32], strides = [1, 1]} : vector<4x128xf32> to vector<4x32xf32>
    %41 = math.tanh %40 : vector<4x32xf32>
    %42 = vector.extract_strided_slice %27 {offsets = [0, 96], sizes = [4, 32], strides = [1, 1]} : vector<4x128xf32> to vector<4x32xf32>
    %43 = arith.negf %42 : vector<4x32xf32>
    %44 = math.exp %43 : vector<4x32xf32>
    %cst_25 = arith.constant 1.000000e+00 : f32
    %45 = vector.broadcast %cst_25 : f32 to vector<4x32xf32>
    %46 = arith.addf %45, %44 : vector<4x32xf32>
    %47 = arith.divf %45, %46 : vector<4x32xf32>
    %c0_26 = arith.constant 0 : index
    %c0_27 = arith.constant 0 : index
    %48 = vector.load %arg18[%c0_26, %c0_27] : memref<4x32xf32, #tpu.memory_space<vmem>>, vector<4x32xf32>
    %49 = arith.mulf %39, %48 : vector<4x32xf32>
    %50 = arith.mulf %33, %41 : vector<4x32xf32>
    %51 = arith.addf %49, %50 : vector<4x32xf32>
    %52 = math.tanh %51 : vector<4x32xf32>
    %53 = arith.mulf %47, %52 : vector<4x32xf32>
    %c0_28 = arith.constant 0 : index
    %c0_29 = arith.constant 0 : index
    %54 = vector.load %arg17[%c0_28, %c0_29] : memref<4x32xf32, #tpu.memory_space<vmem>>, vector<4x32xf32>
    tpu.vector_store %arg17[%c0_28, %c0_29], %53 {strides = array<i32>} : memref<4x32xf32, #tpu.memory_space<vmem>>, vector<4x32xf32>,
    %c0_30 = arith.constant 0 : index
    %c0_31 = arith.constant 0 : index
    %55 = vector.load %arg18[%c0_30, %c0_31] : memref<4x32xf32, #tpu.memory_space<vmem>>, vector<4x32xf32>
    tpu.vector_store %arg18[%c0_30, %c0_31], %51 {strides = array<i32>} : memref<4x32xf32, #tpu.memory_space<vmem>>, vector<4x32xf32>,
    %56 = vector.extract_strided_slice %53 {offsets = [0, 0], sizes = [2, 32], strides = [1, 1]} : vector<4x32xf32> to vector<2x32xf32>
    %57 = arith.index_cast %13 : i32 to index
    %c0_32 = arith.constant 0 : index
    %58 = vector.load %arg15[%57, %c0_32] : memref<16x32xf32, #tpu.memory_space<vmem>>, vector<2x32xf32>
    tpu.vector_store %arg15[%57, %c0_32], %56 {strides = array<i32>} : memref<16x32xf32, #tpu.memory_space<vmem>>, vector<2x32xf32>,
    %59 = vector.extract_strided_slice %53 {offsets = [2, 0], sizes = [2, 32], strides = [1, 1]} : vector<4x32xf32> to vector<2x32xf32>
    %60 = arith.index_cast %15 : i32 to index
    %c0_33 = arith.constant 0 : index
    %61 = vector.load %arg16[%60, %c0_33] : memref<16x32xf32, #tpu.memory_space<vmem>>, vector<2x32xf32>
    tpu.vector_store %arg16[%60, %c0_33], %59 {strides = array<i32>} : memref<16x32xf32, #tpu.memory_space<vmem>>, vector<2x32xf32>,
    %c1_i32 = arith.constant 1 : i32
    %c2_i32_34 = arith.constant 2 : i32
    %62 = arith.muli %c1_i32, %c2_i32_34 : i32
    %c7_i32_35 = arith.constant 7 : i32
    %63 = arith.subi %c7_i32_35, %c1_i32 : i32
    %c2_i32_36 = arith.constant 2 : i32
    %64 = arith.muli %63, %c2_i32_36 : i32
    %65 = arith.index_cast %62 : i32 to index
    %c0_37 = arith.constant 0 : index
    %66 = vector.load %arg14[%65, %c0_37] : memref<16x256xf32, #tpu.memory_space<vmem>>, vector<2x128xf32>
    %67 = arith.index_cast %64 : i32 to index
    %c128_38 = arith.constant 128 : index
    %68 = vector.load %arg14[%67, %c128_38] : memref<16x256xf32, #tpu.memory_space<vmem>>, vector<2x128xf32>
    %c0_39 = arith.constant 0 : index
    %c0_40 = arith.constant 0 : index
    %69 = vector.load %arg17[%c0_39, %c0_40] : memref<4x32xf32, #tpu.memory_space<vmem>>, vector<4x32xf32>
    %70 = vector.extract_strided_slice %69 {offsets = [0, 0], sizes = [2, 32], strides = [1, 1]} : vector<4x32xf32> to vector<2x32xf32>
    %cst_41 = arith.constant dense<0.000000e+00> : vector<2x128xf32>
    %71 = tpu.matmul %70, %11, %cst_41 {dimension_numbers = #tpu.dot_dimension_numbers<[1], [0], [0], [1], [0, 0, 1, 1], [], []>} : vector<2x32xf32>, vector<32x128xf32>, vector<2x128xf32> -> vector<2x128xf32>
    %72 = arith.addf %66, %71 : vector<2x128xf32>
    %73 = vector.extract_strided_slice %69 {offsets = [2, 0], sizes = [2, 32], strides = [1, 1]} : vector<4x32xf32> to vector<2x32xf32>
    %cst_42 = arith.constant dense<0.000000e+00> : vector<2x128xf32>
    %74 = tpu.matmul %73, %12, %cst_42 {dimension_numbers = #tpu.dot_dimension_numbers<[1], [0], [0], [1], [0, 0, 1, 1], [], []>} : vector<2x32xf32>, vector<32x128xf32>, vector<2x128xf32> -> vector<2x128xf32>
    %75 = arith.addf %68, %74 : vector<2x128xf32>
    %76 = tpu.concatenate %72, %75 in 0 : vector<2x128xf32>, vector<2x128xf32> -> vector<4x128xf32>
    %77 = vector.extract_strided_slice %76 {offsets = [0, 0], sizes = [4, 32], strides = [1, 1]} : vector<4x128xf32> to vector<4x32xf32>
    %78 = arith.negf %77 : vector<4x32xf32>
    %79 = math.exp %78 : vector<4x32xf32>
    %cst_43 = arith.constant 1.000000e+00 : f32
    %80 = vector.broadcast %cst_43 : f32 to vector<4x32xf32>
    %81 = arith.addf %80, %79 : vector<4x32xf32>
    %82 = arith.divf %80, %81 : vector<4x32xf32>
    %83 = vector.extract_strided_slice %76 {offsets = [0, 32], sizes = [4, 32], strides = [1, 1]} : vector<4x128xf32> to vector<4x32xf32>
    %84 = arith.negf %83 : vector<4x32xf32>
    %85 = math.exp %84 : vector<4x32xf32>
    %cst_44 = arith.constant 1.000000e+00 : f32
    %86 = vector.broadcast %cst_44 : f32 to vector<4x32xf32>
    %87 = arith.addf %86, %85 : vector<4x32xf32>
    %88 = arith.divf %86, %87 : vector<4x32xf32>
    %89 = vector.extract_strided_slice %76 {offsets = [0, 64], sizes = [4, 32], strides = [1, 1]} : vector<4x128xf32> to vector<4x32xf32>
    %90 = math.tanh %89 : vector<4x32xf32>
    %91 = vector.extract_strided_slice %76 {offsets = [0, 96], sizes = [4, 32], strides = [1, 1]} : vector<4x128xf32> to vector<4x32xf32>
    %92 = arith.negf %91 : vector<4x32xf32>
    %93 = math.exp %92 : vector<4x32xf32>
    %cst_45 = arith.constant 1.000000e+00 : f32
    %94 = vector.broadcast %cst_45 : f32 to vector<4x32xf32>
    %95 = arith.addf %94, %93 : vector<4x32xf32>
    %96 = arith.divf %94, %95 : vector<4x32xf32>
    %c0_46 = arith.constant 0 : index
    %c0_47 = arith.constant 0 : index
    %97 = vector.load %arg18[%c0_46, %c0_47] : memref<4x32xf32, #tpu.memory_space<vmem>>, vector<4x32xf32>
    %98 = arith.mulf %88, %97 : vector<4x32xf32>
    %99 = arith.mulf %82, %90 : vector<4x32xf32>
    %100 = arith.addf %98, %99 : vector<4x32xf32>
    %101 = math.tanh %100 : vector<4x32xf32>
    %102 = arith.mulf %96, %101 : vector<4x32xf32>
    %c0_48 = arith.constant 0 : index
    %c0_49 = arith.constant 0 : index
    %103 = vector.load %arg17[%c0_48, %c0_49] : memref<4x32xf32, #tpu.memory_space<vmem>>, vector<4x32xf32>
    tpu.vector_store %arg17[%c0_48, %c0_49], %102 {strides = array<i32>} : memref<4x32xf32, #tpu.memory_space<vmem>>, vector<4x32xf32>,
    %c0_50 = arith.constant 0 : index
    %c0_51 = arith.constant 0 : index
    %104 = vector.load %arg18[%c0_50, %c0_51] : memref<4x32xf32, #tpu.memory_space<vmem>>, vector<4x32xf32>
    tpu.vector_store %arg18[%c0_50, %c0_51], %100 {strides = array<i32>} : memref<4x32xf32, #tpu.memory_space<vmem>>, vector<4x32xf32>,
    %105 = vector.extract_strided_slice %102 {offsets = [0, 0], sizes = [2, 32], strides = [1, 1]} : vector<4x32xf32> to vector<2x32xf32>
    %106 = arith.index_cast %62 : i32 to index
    %c0_52 = arith.constant 0 : index
    %107 = vector.load %arg15[%106, %c0_52] : memref<16x32xf32, #tpu.memory_space<vmem>>, vector<2x32xf32>
    tpu.vector_store %arg15[%106, %c0_52], %105 {strides = array<i32>} : memref<16x32xf32, #tpu.memory_space<vmem>>, vector<2x32xf32>,
    %108 = vector.extract_strided_slice %102 {offsets = [2, 0], sizes = [2, 32], strides = [1, 1]} : vector<4x32xf32> to vector<2x32xf32>
    %109 = arith.index_cast %64 : i32 to index
    %c0_53 = arith.constant 0 : index
    %110 = vector.load %arg16[%109, %c0_53] : memref<16x32xf32, #tpu.memory_space<vmem>>, vector<2x32xf32>
    tpu.vector_store %arg16[%109, %c0_53], %108 {strides = array<i32>} : memref<16x32xf32, #tpu.memory_space<vmem>>, vector<2x32xf32>,
    %c2_i32_54 = arith.constant 2 : i32
    %c2_i32_55 = arith.constant 2 : i32
    %111 = arith.muli %c2_i32_54, %c2_i32_55 : i32
    %c7_i32_56 = arith.constant 7 : i32
    %112 = arith.subi %c7_i32_56, %c2_i32_54 : i32
    %c2_i32_57 = arith.constant 2 : i32
    %113 = arith.muli %112, %c2_i32_57 : i32
    %114 = arith.index_cast %111 : i32 to index
    %c0_58 = arith.constant 0 : index
    %115 = vector.load %arg14[%114, %c0_58] : memref<16x256xf32, #tpu.memory_space<vmem>>, vector<2x128xf32>
    %116 = arith.index_cast %113 : i32 to index
    %c128_59 = arith.constant 128 : index
    %117 = vector.load %arg14[%116, %c128_59] : memref<16x256xf32, #tpu.memory_space<vmem>>, vector<2x128xf32>
    %c0_60 = arith.constant 0 : index
    %c0_61 = arith.constant 0 : index
    %118 = vector.load %arg17[%c0_60, %c0_61] : memref<4x32xf32, #tpu.memory_space<vmem>>, vector<4x32xf32>
    %119 = vector.extract_strided_slice %118 {offsets = [0, 0], sizes = [2, 32], strides = [1, 1]} : vector<4x32xf32> to vector<2x32xf32>
    %cst_62 = arith.constant dense<0.000000e+00> : vector<2x128xf32>
    %120 = tpu.matmul %119, %11, %cst_62 {dimension_numbers = #tpu.dot_dimension_numbers<[1], [0], [0], [1], [0, 0, 1, 1], [], []>} : vector<2x32xf32>, vector<32x128xf32>, vector<2x128xf32> -> vector<2x128xf32>
    %121 = arith.addf %115, %120 : vector<2x128xf32>
    %122 = vector.extract_strided_slice %118 {offsets = [2, 0], sizes = [2, 32], strides = [1, 1]} : vector<4x32xf32> to vector<2x32xf32>
    %cst_63 = arith.constant dense<0.000000e+00> : vector<2x128xf32>
    %123 = tpu.matmul %122, %12, %cst_63 {dimension_numbers = #tpu.dot_dimension_numbers<[1], [0], [0], [1], [0, 0, 1, 1], [], []>} : vector<2x32xf32>, vector<32x128xf32>, vector<2x128xf32> -> vector<2x128xf32>
    %124 = arith.addf %117, %123 : vector<2x128xf32>
    %125 = tpu.concatenate %121, %124 in 0 : vector<2x128xf32>, vector<2x128xf32> -> vector<4x128xf32>
    %126 = vector.extract_strided_slice %125 {offsets = [0, 0], sizes = [4, 32], strides = [1, 1]} : vector<4x128xf32> to vector<4x32xf32>
    %127 = arith.negf %126 : vector<4x32xf32>
    %128 = math.exp %127 : vector<4x32xf32>
    %cst_64 = arith.constant 1.000000e+00 : f32
    %129 = vector.broadcast %cst_64 : f32 to vector<4x32xf32>
    %130 = arith.addf %129, %128 : vector<4x32xf32>
    %131 = arith.divf %129, %130 : vector<4x32xf32>
    %132 = vector.extract_strided_slice %125 {offsets = [0, 32], sizes = [4, 32], strides = [1, 1]} : vector<4x128xf32> to vector<4x32xf32>
    %133 = arith.negf %132 : vector<4x32xf32>
    %134 = math.exp %133 : vector<4x32xf32>
    %cst_65 = arith.constant 1.000000e+00 : f32
    %135 = vector.broadcast %cst_65 : f32 to vector<4x32xf32>
    %136 = arith.addf %135, %134 : vector<4x32xf32>
    %137 = arith.divf %135, %136 : vector<4x32xf32>
    %138 = vector.extract_strided_slice %125 {offsets = [0, 64], sizes = [4, 32], strides = [1, 1]} : vector<4x128xf32> to vector<4x32xf32>
    %139 = math.tanh %138 : vector<4x32xf32>
    %140 = vector.extract_strided_slice %125 {offsets = [0, 96], sizes = [4, 32], strides = [1, 1]} : vector<4x128xf32> to vector<4x32xf32>
    %141 = arith.negf %140 : vector<4x32xf32>
    %142 = math.exp %141 : vector<4x32xf32>
    %cst_66 = arith.constant 1.000000e+00 : f32
    %143 = vector.broadcast %cst_66 : f32 to vector<4x32xf32>
    %144 = arith.addf %143, %142 : vector<4x32xf32>
    %145 = arith.divf %143, %144 : vector<4x32xf32>
    %c0_67 = arith.constant 0 : index
    %c0_68 = arith.constant 0 : index
    %146 = vector.load %arg18[%c0_67, %c0_68] : memref<4x32xf32, #tpu.memory_space<vmem>>, vector<4x32xf32>
    %147 = arith.mulf %137, %146 : vector<4x32xf32>
    %148 = arith.mulf %131, %139 : vector<4x32xf32>
    %149 = arith.addf %147, %148 : vector<4x32xf32>
    %150 = math.tanh %149 : vector<4x32xf32>
    %151 = arith.mulf %145, %150 : vector<4x32xf32>
    %c0_69 = arith.constant 0 : index
    %c0_70 = arith.constant 0 : index
    %152 = vector.load %arg17[%c0_69, %c0_70] : memref<4x32xf32, #tpu.memory_space<vmem>>, vector<4x32xf32>
    tpu.vector_store %arg17[%c0_69, %c0_70], %151 {strides = array<i32>} : memref<4x32xf32, #tpu.memory_space<vmem>>, vector<4x32xf32>,
    %c0_71 = arith.constant 0 : index
    %c0_72 = arith.constant 0 : index
    %153 = vector.load %arg18[%c0_71, %c0_72] : memref<4x32xf32, #tpu.memory_space<vmem>>, vector<4x32xf32>
    tpu.vector_store %arg18[%c0_71, %c0_72], %149 {strides = array<i32>} : memref<4x32xf32, #tpu.memory_space<vmem>>, vector<4x32xf32>,
    %154 = vector.extract_strided_slice %151 {offsets = [0, 0], sizes = [2, 32], strides = [1, 1]} : vector<4x32xf32> to vector<2x32xf32>
    %155 = arith.index_cast %111 : i32 to index
    %c0_73 = arith.constant 0 : index
    %156 = vector.load %arg15[%155, %c0_73] : memref<16x32xf32, #tpu.memory_space<vmem>>, vector<2x32xf32>
    tpu.vector_store %arg15[%155, %c0_73], %154 {strides = array<i32>} : memref<16x32xf32, #tpu.memory_space<vmem>>, vector<2x32xf32>,
    %157 = vector.extract_strided_slice %151 {offsets = [2, 0], sizes = [2, 32], strides = [1, 1]} : vector<4x32xf32> to vector<2x32xf32>
    %158 = arith.index_cast %113 : i32 to index
    %c0_74 = arith.constant 0 : index
    %159 = vector.load %arg16[%158, %c0_74] : memref<16x32xf32, #tpu.memory_space<vmem>>, vector<2x32xf32>
    tpu.vector_store %arg16[%158, %c0_74], %157 {strides = array<i32>} : memref<16x32xf32, #tpu.memory_space<vmem>>, vector<2x32xf32>,
    %c3_i32 = arith.constant 3 : i32
    %c2_i32_75 = arith.constant 2 : i32
    %160 = arith.muli %c3_i32, %c2_i32_75 : i32
    %c7_i32_76 = arith.constant 7 : i32
    %161 = arith.subi %c7_i32_76, %c3_i32 : i32
    %c2_i32_77 = arith.constant 2 : i32
    %162 = arith.muli %161, %c2_i32_77 : i32
    %163 = arith.index_cast %160 : i32 to index
    %c0_78 = arith.constant 0 : index
    %164 = vector.load %arg14[%163, %c0_78] : memref<16x256xf32, #tpu.memory_space<vmem>>, vector<2x128xf32>
    %165 = arith.index_cast %162 : i32 to index
    %c128_79 = arith.constant 128 : index
    %166 = vector.load %arg14[%165, %c128_79] : memref<16x256xf32, #tpu.memory_space<vmem>>, vector<2x128xf32>
    %c0_80 = arith.constant 0 : index
    %c0_81 = arith.constant 0 : index
    %167 = vector.load %arg17[%c0_80, %c0_81] : memref<4x32xf32, #tpu.memory_space<vmem>>, vector<4x32xf32>
    %168 = vector.extract_strided_slice %167 {offsets = [0, 0], sizes = [2, 32], strides = [1, 1]} : vector<4x32xf32> to vector<2x32xf32>
    %cst_82 = arith.constant dense<0.000000e+00> : vector<2x128xf32>
    %169 = tpu.matmul %168, %11, %cst_82 {dimension_numbers = #tpu.dot_dimension_numbers<[1], [0], [0], [1], [0, 0, 1, 1], [], []>} : vector<2x32xf32>, vector<32x128xf32>, vector<2x128xf32> -> vector<2x128xf32>
    %170 = arith.addf %164, %169 : vector<2x128xf32>
    %171 = vector.extract_strided_slice %167 {offsets = [2, 0], sizes = [2, 32], strides = [1, 1]} : vector<4x32xf32> to vector<2x32xf32>
    %cst_83 = arith.constant dense<0.000000e+00> : vector<2x128xf32>
    %172 = tpu.matmul %171, %12, %cst_83 {dimension_numbers = #tpu.dot_dimension_numbers<[1], [0], [0], [1], [0, 0, 1, 1], [], []>} : vector<2x32xf32>, vector<32x128xf32>, vector<2x128xf32> -> vector<2x128xf32>
    %173 = arith.addf %166, %172 : vector<2x128xf32>
    %174 = tpu.concatenate %170, %173 in 0 : vector<2x128xf32>, vector<2x128xf32> -> vector<4x128xf32>
    %175 = vector.extract_strided_slice %174 {offsets = [0, 0], sizes = [4, 32], strides = [1, 1]} : vector<4x128xf32> to vector<4x32xf32>
    %176 = arith.negf %175 : vector<4x32xf32>
    %177 = math.exp %176 : vector<4x32xf32>
    %cst_84 = arith.constant 1.000000e+00 : f32
    %178 = vector.broadcast %cst_84 : f32 to vector<4x32xf32>
    %179 = arith.addf %178, %177 : vector<4x32xf32>
    %180 = arith.divf %178, %179 : vector<4x32xf32>
    %181 = vector.extract_strided_slice %174 {offsets = [0, 32], sizes = [4, 32], strides = [1, 1]} : vector<4x128xf32> to vector<4x32xf32>
    %182 = arith.negf %181 : vector<4x32xf32>
    %183 = math.exp %182 : vector<4x32xf32>
    %cst_85 = arith.constant 1.000000e+00 : f32
    %184 = vector.broadcast %cst_85 : f32 to vector<4x32xf32>
    %185 = arith.addf %184, %183 : vector<4x32xf32>
    %186 = arith.divf %184, %185 : vector<4x32xf32>
    %187 = vector.extract_strided_slice %174 {offsets = [0, 64], sizes = [4, 32], strides = [1, 1]} : vector<4x128xf32> to vector<4x32xf32>
    %188 = math.tanh %187 : vector<4x32xf32>
    %189 = vector.extract_strided_slice %174 {offsets = [0, 96], sizes = [4, 32], strides = [1, 1]} : vector<4x128xf32> to vector<4x32xf32>
    %190 = arith.negf %189 : vector<4x32xf32>
    %191 = math.exp %190 : vector<4x32xf32>
    %cst_86 = arith.constant 1.000000e+00 : f32
    %192 = vector.broadcast %cst_86 : f32 to vector<4x32xf32>
    %193 = arith.addf %192, %191 : vector<4x32xf32>
    %194 = arith.divf %192, %193 : vector<4x32xf32>
    %c0_87 = arith.constant 0 : index
    %c0_88 = arith.constant 0 : index
    %195 = vector.load %arg18[%c0_87, %c0_88] : memref<4x32xf32, #tpu.memory_space<vmem>>, vector<4x32xf32>
    %196 = arith.mulf %186, %195 : vector<4x32xf32>
    %197 = arith.mulf %180, %188 : vector<4x32xf32>
    %198 = arith.addf %196, %197 : vector<4x32xf32>
    %199 = math.tanh %198 : vector<4x32xf32>
    %200 = arith.mulf %194, %199 : vector<4x32xf32>
    %c0_89 = arith.constant 0 : index
    %c0_90 = arith.constant 0 : index
    %201 = vector.load %arg17[%c0_89, %c0_90] : memref<4x32xf32, #tpu.memory_space<vmem>>, vector<4x32xf32>
    tpu.vector_store %arg17[%c0_89, %c0_90], %200 {strides = array<i32>} : memref<4x32xf32, #tpu.memory_space<vmem>>, vector<4x32xf32>,
    %c0_91 = arith.constant 0 : index
    %c0_92 = arith.constant 0 : index
    %202 = vector.load %arg18[%c0_91, %c0_92] : memref<4x32xf32, #tpu.memory_space<vmem>>, vector<4x32xf32>
    tpu.vector_store %arg18[%c0_91, %c0_92], %198 {strides = array<i32>} : memref<4x32xf32, #tpu.memory_space<vmem>>, vector<4x32xf32>,
    %203 = vector.extract_strided_slice %200 {offsets = [0, 0], sizes = [2, 32], strides = [1, 1]} : vector<4x32xf32> to vector<2x32xf32>
    %204 = arith.index_cast %160 : i32 to index
    %c0_93 = arith.constant 0 : index
    %205 = vector.load %arg15[%204, %c0_93] : memref<16x32xf32, #tpu.memory_space<vmem>>, vector<2x32xf32>
    tpu.vector_store %arg15[%204, %c0_93], %203 {strides = array<i32>} : memref<16x32xf32, #tpu.memory_space<vmem>>, vector<2x32xf32>,
    %206 = vector.extract_strided_slice %200 {offsets = [2, 0], sizes = [2, 32], strides = [1, 1]} : vector<4x32xf32> to vector<2x32xf32>
    %207 = arith.index_cast %162 : i32 to index
    %c0_94 = arith.constant 0 : index
    %208 = vector.load %arg16[%207, %c0_94] : memref<16x32xf32, #tpu.memory_space<vmem>>, vector<2x32xf32>
    tpu.vector_store %arg16[%207, %c0_94], %206 {strides = array<i32>} : memref<16x32xf32, #tpu.memory_space<vmem>>, vector<2x32xf32>,
    %c4_i32 = arith.constant 4 : i32
    %c2_i32_95 = arith.constant 2 : i32
    %209 = arith.muli %c4_i32, %c2_i32_95 : i32
    %c7_i32_96 = arith.constant 7 : i32
    %210 = arith.subi %c7_i32_96, %c4_i32 : i32
    %c2_i32_97 = arith.constant 2 : i32
    %211 = arith.muli %210, %c2_i32_97 : i32
    %212 = arith.index_cast %209 : i32 to index
    %c0_98 = arith.constant 0 : index
    %213 = vector.load %arg14[%212, %c0_98] : memref<16x256xf32, #tpu.memory_space<vmem>>, vector<2x128xf32>
    %214 = arith.index_cast %211 : i32 to index
    %c128_99 = arith.constant 128 : index
    %215 = vector.load %arg14[%214, %c128_99] : memref<16x256xf32, #tpu.memory_space<vmem>>, vector<2x128xf32>
    %c0_100 = arith.constant 0 : index
    %c0_101 = arith.constant 0 : index
    %216 = vector.load %arg17[%c0_100, %c0_101] : memref<4x32xf32, #tpu.memory_space<vmem>>, vector<4x32xf32>
    %217 = vector.extract_strided_slice %216 {offsets = [0, 0], sizes = [2, 32], strides = [1, 1]} : vector<4x32xf32> to vector<2x32xf32>
    %cst_102 = arith.constant dense<0.000000e+00> : vector<2x128xf32>
    %218 = tpu.matmul %217, %11, %cst_102 {dimension_numbers = #tpu.dot_dimension_numbers<[1], [0], [0], [1], [0, 0, 1, 1], [], []>} : vector<2x32xf32>, vector<32x128xf32>, vector<2x128xf32> -> vector<2x128xf32>
    %219 = arith.addf %213, %218 : vector<2x128xf32>
    %220 = vector.extract_strided_slice %216 {offsets = [2, 0], sizes = [2, 32], strides = [1, 1]} : vector<4x32xf32> to vector<2x32xf32>
    %cst_103 = arith.constant dense<0.000000e+00> : vector<2x128xf32>
    %221 = tpu.matmul %220, %12, %cst_103 {dimension_numbers = #tpu.dot_dimension_numbers<[1], [0], [0], [1], [0, 0, 1, 1], [], []>} : vector<2x32xf32>, vector<32x128xf32>, vector<2x128xf32> -> vector<2x128xf32>
    %222 = arith.addf %215, %221 : vector<2x128xf32>
    %223 = tpu.concatenate %219, %222 in 0 : vector<2x128xf32>, vector<2x128xf32> -> vector<4x128xf32>
    %224 = vector.extract_strided_slice %223 {offsets = [0, 0], sizes = [4, 32], strides = [1, 1]} : vector<4x128xf32> to vector<4x32xf32>
    %225 = arith.negf %224 : vector<4x32xf32>
    %226 = math.exp %225 : vector<4x32xf32>
    %cst_104 = arith.constant 1.000000e+00 : f32
    %227 = vector.broadcast %cst_104 : f32 to vector<4x32xf32>
    %228 = arith.addf %227, %226 : vector<4x32xf32>
    %229 = arith.divf %227, %228 : vector<4x32xf32>
    %230 = vector.extract_strided_slice %223 {offsets = [0, 32], sizes = [4, 32], strides = [1, 1]} : vector<4x128xf32> to vector<4x32xf32>
    %231 = arith.negf %230 : vector<4x32xf32>
    %232 = math.exp %231 : vector<4x32xf32>
    %cst_105 = arith.constant 1.000000e+00 : f32
    %233 = vector.broadcast %cst_105 : f32 to vector<4x32xf32>
    %234 = arith.addf %233, %232 : vector<4x32xf32>
    %235 = arith.divf %233, %234 : vector<4x32xf32>
    %236 = vector.extract_strided_slice %223 {offsets = [0, 64], sizes = [4, 32], strides = [1, 1]} : vector<4x128xf32> to vector<4x32xf32>
    %237 = math.tanh %236 : vector<4x32xf32>
    %238 = vector.extract_strided_slice %223 {offsets = [0, 96], sizes = [4, 32], strides = [1, 1]} : vector<4x128xf32> to vector<4x32xf32>
    %239 = arith.negf %238 : vector<4x32xf32>
    %240 = math.exp %239 : vector<4x32xf32>
    %cst_106 = arith.constant 1.000000e+00 : f32
    %241 = vector.broadcast %cst_106 : f32 to vector<4x32xf32>
    %242 = arith.addf %241, %240 : vector<4x32xf32>
    %243 = arith.divf %241, %242 : vector<4x32xf32>
    %c0_107 = arith.constant 0 : index
    %c0_108 = arith.constant 0 : index
    %244 = vector.load %arg18[%c0_107, %c0_108] : memref<4x32xf32, #tpu.memory_space<vmem>>, vector<4x32xf32>
    %245 = arith.mulf %235, %244 : vector<4x32xf32>
    %246 = arith.mulf %229, %237 : vector<4x32xf32>
    %247 = arith.addf %245, %246 : vector<4x32xf32>
    %248 = math.tanh %247 : vector<4x32xf32>
    %249 = arith.mulf %243, %248 : vector<4x32xf32>
    %c0_109 = arith.constant 0 : index
    %c0_110 = arith.constant 0 : index
    %250 = vector.load %arg17[%c0_109, %c0_110] : memref<4x32xf32, #tpu.memory_space<vmem>>, vector<4x32xf32>
    tpu.vector_store %arg17[%c0_109, %c0_110], %249 {strides = array<i32>} : memref<4x32xf32, #tpu.memory_space<vmem>>, vector<4x32xf32>,
    %c0_111 = arith.constant 0 : index
    %c0_112 = arith.constant 0 : index
    %251 = vector.load %arg18[%c0_111, %c0_112] : memref<4x32xf32, #tpu.memory_space<vmem>>, vector<4x32xf32>
    tpu.vector_store %arg18[%c0_111, %c0_112], %247 {strides = array<i32>} : memref<4x32xf32, #tpu.memory_space<vmem>>, vector<4x32xf32>,
    %252 = vector.extract_strided_slice %249 {offsets = [0, 0], sizes = [2, 32], strides = [1, 1]} : vector<4x32xf32> to vector<2x32xf32>
    %253 = arith.index_cast %209 : i32 to index
    %c0_113 = arith.constant 0 : index
    %254 = vector.load %arg15[%253, %c0_113] : memref<16x32xf32, #tpu.memory_space<vmem>>, vector<2x32xf32>
    tpu.vector_store %arg15[%253, %c0_113], %252 {strides = array<i32>} : memref<16x32xf32, #tpu.memory_space<vmem>>, vector<2x32xf32>,
    %255 = vector.extract_strided_slice %249 {offsets = [2, 0], sizes = [2, 32], strides = [1, 1]} : vector<4x32xf32> to vector<2x32xf32>
    %256 = arith.index_cast %211 : i32 to index
    %c0_114 = arith.constant 0 : index
    %257 = vector.load %arg16[%256, %c0_114] : memref<16x32xf32, #tpu.memory_space<vmem>>, vector<2x32xf32>
    tpu.vector_store %arg16[%256, %c0_114], %255 {strides = array<i32>} : memref<16x32xf32, #tpu.memory_space<vmem>>, vector<2x32xf32>,
    %c5_i32 = arith.constant 5 : i32
    %c2_i32_115 = arith.constant 2 : i32
    %258 = arith.muli %c5_i32, %c2_i32_115 : i32
    %c7_i32_116 = arith.constant 7 : i32
    %259 = arith.subi %c7_i32_116, %c5_i32 : i32
    %c2_i32_117 = arith.constant 2 : i32
    %260 = arith.muli %259, %c2_i32_117 : i32
    %261 = arith.index_cast %258 : i32 to index
    %c0_118 = arith.constant 0 : index
    %262 = vector.load %arg14[%261, %c0_118] : memref<16x256xf32, #tpu.memory_space<vmem>>, vector<2x128xf32>
    %263 = arith.index_cast %260 : i32 to index
    %c128_119 = arith.constant 128 : index
    %264 = vector.load %arg14[%263, %c128_119] : memref<16x256xf32, #tpu.memory_space<vmem>>, vector<2x128xf32>
    %c0_120 = arith.constant 0 : index
    %c0_121 = arith.constant 0 : index
    %265 = vector.load %arg17[%c0_120, %c0_121] : memref<4x32xf32, #tpu.memory_space<vmem>>, vector<4x32xf32>
    %266 = vector.extract_strided_slice %265 {offsets = [0, 0], sizes = [2, 32], strides = [1, 1]} : vector<4x32xf32> to vector<2x32xf32>
    %cst_122 = arith.constant dense<0.000000e+00> : vector<2x128xf32>
    %267 = tpu.matmul %266, %11, %cst_122 {dimension_numbers = #tpu.dot_dimension_numbers<[1], [0], [0], [1], [0, 0, 1, 1], [], []>} : vector<2x32xf32>, vector<32x128xf32>, vector<2x128xf32> -> vector<2x128xf32>
    %268 = arith.addf %262, %267 : vector<2x128xf32>
    %269 = vector.extract_strided_slice %265 {offsets = [2, 0], sizes = [2, 32], strides = [1, 1]} : vector<4x32xf32> to vector<2x32xf32>
    %cst_123 = arith.constant dense<0.000000e+00> : vector<2x128xf32>
    %270 = tpu.matmul %269, %12, %cst_123 {dimension_numbers = #tpu.dot_dimension_numbers<[1], [0], [0], [1], [0, 0, 1, 1], [], []>} : vector<2x32xf32>, vector<32x128xf32>, vector<2x128xf32> -> vector<2x128xf32>
    %271 = arith.addf %264, %270 : vector<2x128xf32>
    %272 = tpu.concatenate %268, %271 in 0 : vector<2x128xf32>, vector<2x128xf32> -> vector<4x128xf32>
    %273 = vector.extract_strided_slice %272 {offsets = [0, 0], sizes = [4, 32], strides = [1, 1]} : vector<4x128xf32> to vector<4x32xf32>
    %274 = arith.negf %273 : vector<4x32xf32>
    %275 = math.exp %274 : vector<4x32xf32>
    %cst_124 = arith.constant 1.000000e+00 : f32
    %276 = vector.broadcast %cst_124 : f32 to vector<4x32xf32>
    %277 = arith.addf %276, %275 : vector<4x32xf32>
    %278 = arith.divf %276, %277 : vector<4x32xf32>
    %279 = vector.extract_strided_slice %272 {offsets = [0, 32], sizes = [4, 32], strides = [1, 1]} : vector<4x128xf32> to vector<4x32xf32>
    %280 = arith.negf %279 : vector<4x32xf32>
    %281 = math.exp %280 : vector<4x32xf32>
    %cst_125 = arith.constant 1.000000e+00 : f32
    %282 = vector.broadcast %cst_125 : f32 to vector<4x32xf32>
    %283 = arith.addf %282, %281 : vector<4x32xf32>
    %284 = arith.divf %282, %283 : vector<4x32xf32>
    %285 = vector.extract_strided_slice %272 {offsets = [0, 64], sizes = [4, 32], strides = [1, 1]} : vector<4x128xf32> to vector<4x32xf32>
    %286 = math.tanh %285 : vector<4x32xf32>
    %287 = vector.extract_strided_slice %272 {offsets = [0, 96], sizes = [4, 32], strides = [1, 1]} : vector<4x128xf32> to vector<4x32xf32>
    %288 = arith.negf %287 : vector<4x32xf32>
    %289 = math.exp %288 : vector<4x32xf32>
    %cst_126 = arith.constant 1.000000e+00 : f32
    %290 = vector.broadcast %cst_126 : f32 to vector<4x32xf32>
    %291 = arith.addf %290, %289 : vector<4x32xf32>
    %292 = arith.divf %290, %291 : vector<4x32xf32>
    %c0_127 = arith.constant 0 : index
    %c0_128 = arith.constant 0 : index
    %293 = vector.load %arg18[%c0_127, %c0_128] : memref<4x32xf32, #tpu.memory_space<vmem>>, vector<4x32xf32>
    %294 = arith.mulf %284, %293 : vector<4x32xf32>
    %295 = arith.mulf %278, %286 : vector<4x32xf32>
    %296 = arith.addf %294, %295 : vector<4x32xf32>
    %297 = math.tanh %296 : vector<4x32xf32>
    %298 = arith.mulf %292, %297 : vector<4x32xf32>
    %c0_129 = arith.constant 0 : index
    %c0_130 = arith.constant 0 : index
    %299 = vector.load %arg17[%c0_129, %c0_130] : memref<4x32xf32, #tpu.memory_space<vmem>>, vector<4x32xf32>
    tpu.vector_store %arg17[%c0_129, %c0_130], %298 {strides = array<i32>} : memref<4x32xf32, #tpu.memory_space<vmem>>, vector<4x32xf32>,
    %c0_131 = arith.constant 0 : index
    %c0_132 = arith.constant 0 : index
    %300 = vector.load %arg18[%c0_131, %c0_132] : memref<4x32xf32, #tpu.memory_space<vmem>>, vector<4x32xf32>
    tpu.vector_store %arg18[%c0_131, %c0_132], %296 {strides = array<i32>} : memref<4x32xf32, #tpu.memory_space<vmem>>, vector<4x32xf32>,
    %301 = vector.extract_strided_slice %298 {offsets = [0, 0], sizes = [2, 32], strides = [1, 1]} : vector<4x32xf32> to vector<2x32xf32>
    %302 = arith.index_cast %258 : i32 to index
    %c0_133 = arith.constant 0 : index
    %303 = vector.load %arg15[%302, %c0_133] : memref<16x32xf32, #tpu.memory_space<vmem>>, vector<2x32xf32>
    tpu.vector_store %arg15[%302, %c0_133], %301 {strides = array<i32>} : memref<16x32xf32, #tpu.memory_space<vmem>>, vector<2x32xf32>,
    %304 = vector.extract_strided_slice %298 {offsets = [2, 0], sizes = [2, 32], strides = [1, 1]} : vector<4x32xf32> to vector<2x32xf32>
    %305 = arith.index_cast %260 : i32 to index
    %c0_134 = arith.constant 0 : index
    %306 = vector.load %arg16[%305, %c0_134] : memref<16x32xf32, #tpu.memory_space<vmem>>, vector<2x32xf32>
    tpu.vector_store %arg16[%305, %c0_134], %304 {strides = array<i32>} : memref<16x32xf32, #tpu.memory_space<vmem>>, vector<2x32xf32>,
    %c6_i32 = arith.constant 6 : i32
    %c2_i32_135 = arith.constant 2 : i32
    %307 = arith.muli %c6_i32, %c2_i32_135 : i32
    %c7_i32_136 = arith.constant 7 : i32
    %308 = arith.subi %c7_i32_136, %c6_i32 : i32
    %c2_i32_137 = arith.constant 2 : i32
    %309 = arith.muli %308, %c2_i32_137 : i32
    %310 = arith.index_cast %307 : i32 to index
    %c0_138 = arith.constant 0 : index
    %311 = vector.load %arg14[%310, %c0_138] : memref<16x256xf32, #tpu.memory_space<vmem>>, vector<2x128xf32>
    %312 = arith.index_cast %309 : i32 to index
    %c128_139 = arith.constant 128 : index
    %313 = vector.load %arg14[%312, %c128_139] : memref<16x256xf32, #tpu.memory_space<vmem>>, vector<2x128xf32>
    %c0_140 = arith.constant 0 : index
    %c0_141 = arith.constant 0 : index
    %314 = vector.load %arg17[%c0_140, %c0_141] : memref<4x32xf32, #tpu.memory_space<vmem>>, vector<4x32xf32>
    %315 = vector.extract_strided_slice %314 {offsets = [0, 0], sizes = [2, 32], strides = [1, 1]} : vector<4x32xf32> to vector<2x32xf32>
    %cst_142 = arith.constant dense<0.000000e+00> : vector<2x128xf32>
    %316 = tpu.matmul %315, %11, %cst_142 {dimension_numbers = #tpu.dot_dimension_numbers<[1], [0], [0], [1], [0, 0, 1, 1], [], []>} : vector<2x32xf32>, vector<32x128xf32>, vector<2x128xf32> -> vector<2x128xf32>
    %317 = arith.addf %311, %316 : vector<2x128xf32>
    %318 = vector.extract_strided_slice %314 {offsets = [2, 0], sizes = [2, 32], strides = [1, 1]} : vector<4x32xf32> to vector<2x32xf32>
    %cst_143 = arith.constant dense<0.000000e+00> : vector<2x128xf32>
    %319 = tpu.matmul %318, %12, %cst_143 {dimension_numbers = #tpu.dot_dimension_numbers<[1], [0], [0], [1], [0, 0, 1, 1], [], []>} : vector<2x32xf32>, vector<32x128xf32>, vector<2x128xf32> -> vector<2x128xf32>
    %320 = arith.addf %313, %319 : vector<2x128xf32>
    %321 = tpu.concatenate %317, %320 in 0 : vector<2x128xf32>, vector<2x128xf32> -> vector<4x128xf32>
    %322 = vector.extract_strided_slice %321 {offsets = [0, 0], sizes = [4, 32], strides = [1, 1]} : vector<4x128xf32> to vector<4x32xf32>
    %323 = arith.negf %322 : vector<4x32xf32>
    %324 = math.exp %323 : vector<4x32xf32>
    %cst_144 = arith.constant 1.000000e+00 : f32
    %325 = vector.broadcast %cst_144 : f32 to vector<4x32xf32>
    %326 = arith.addf %325, %324 : vector<4x32xf32>
    %327 = arith.divf %325, %326 : vector<4x32xf32>
    %328 = vector.extract_strided_slice %321 {offsets = [0, 32], sizes = [4, 32], strides = [1, 1]} : vector<4x128xf32> to vector<4x32xf32>
    %329 = arith.negf %328 : vector<4x32xf32>
    %330 = math.exp %329 : vector<4x32xf32>
    %cst_145 = arith.constant 1.000000e+00 : f32
    %331 = vector.broadcast %cst_145 : f32 to vector<4x32xf32>
    %332 = arith.addf %331, %330 : vector<4x32xf32>
    %333 = arith.divf %331, %332 : vector<4x32xf32>
    %334 = vector.extract_strided_slice %321 {offsets = [0, 64], sizes = [4, 32], strides = [1, 1]} : vector<4x128xf32> to vector<4x32xf32>
    %335 = math.tanh %334 : vector<4x32xf32>
    %336 = vector.extract_strided_slice %321 {offsets = [0, 96], sizes = [4, 32], strides = [1, 1]} : vector<4x128xf32> to vector<4x32xf32>
    %337 = arith.negf %336 : vector<4x32xf32>
    %338 = math.exp %337 : vector<4x32xf32>
    %cst_146 = arith.constant 1.000000e+00 : f32
    %339 = vector.broadcast %cst_146 : f32 to vector<4x32xf32>
    %340 = arith.addf %339, %338 : vector<4x32xf32>
    %341 = arith.divf %339, %340 : vector<4x32xf32>
    %c0_147 = arith.constant 0 : index
    %c0_148 = arith.constant 0 : index
    %342 = vector.load %arg18[%c0_147, %c0_148] : memref<4x32xf32, #tpu.memory_space<vmem>>, vector<4x32xf32>
    %343 = arith.mulf %333, %342 : vector<4x32xf32>
    %344 = arith.mulf %327, %335 : vector<4x32xf32>
    %345 = arith.addf %343, %344 : vector<4x32xf32>
    %346 = math.tanh %345 : vector<4x32xf32>
    %347 = arith.mulf %341, %346 : vector<4x32xf32>
    %c0_149 = arith.constant 0 : index
    %c0_150 = arith.constant 0 : index
    %348 = vector.load %arg17[%c0_149, %c0_150] : memref<4x32xf32, #tpu.memory_space<vmem>>, vector<4x32xf32>
    tpu.vector_store %arg17[%c0_149, %c0_150], %347 {strides = array<i32>} : memref<4x32xf32, #tpu.memory_space<vmem>>, vector<4x32xf32>,
    %c0_151 = arith.constant 0 : index
    %c0_152 = arith.constant 0 : index
    %349 = vector.load %arg18[%c0_151, %c0_152] : memref<4x32xf32, #tpu.memory_space<vmem>>, vector<4x32xf32>
    tpu.vector_store %arg18[%c0_151, %c0_152], %345 {strides = array<i32>} : memref<4x32xf32, #tpu.memory_space<vmem>>, vector<4x32xf32>,
    %350 = vector.extract_strided_slice %347 {offsets = [0, 0], sizes = [2, 32], strides = [1, 1]} : vector<4x32xf32> to vector<2x32xf32>
    %351 = arith.index_cast %307 : i32 to index
    %c0_153 = arith.constant 0 : index
    %352 = vector.load %arg15[%351, %c0_153] : memref<16x32xf32, #tpu.memory_space<vmem>>, vector<2x32xf32>
    tpu.vector_store %arg15[%351, %c0_153], %350 {strides = array<i32>} : memref<16x32xf32, #tpu.memory_space<vmem>>, vector<2x32xf32>,
    %353 = vector.extract_strided_slice %347 {offsets = [2, 0], sizes = [2, 32], strides = [1, 1]} : vector<4x32xf32> to vector<2x32xf32>
    %354 = arith.index_cast %309 : i32 to index
    %c0_154 = arith.constant 0 : index
    %355 = vector.load %arg16[%354, %c0_154] : memref<16x32xf32, #tpu.memory_space<vmem>>, vector<2x32xf32>
    tpu.vector_store %arg16[%354, %c0_154], %353 {strides = array<i32>} : memref<16x32xf32, #tpu.memory_space<vmem>>, vector<2x32xf32>,
    %c7_i32_155 = arith.constant 7 : i32
    %c2_i32_156 = arith.constant 2 : i32
    %356 = arith.muli %c7_i32_155, %c2_i32_156 : i32
    %c7_i32_157 = arith.constant 7 : i32
    %357 = arith.subi %c7_i32_157, %c7_i32_155 : i32
    %c2_i32_158 = arith.constant 2 : i32
    %358 = arith.muli %357, %c2_i32_158 : i32
    %359 = arith.index_cast %356 : i32 to index
    %c0_159 = arith.constant 0 : index
    %360 = vector.load %arg14[%359, %c0_159] : memref<16x256xf32, #tpu.memory_space<vmem>>, vector<2x128xf32>
    %361 = arith.index_cast %358 : i32 to index
    %c128_160 = arith.constant 128 : index
    %362 = vector.load %arg14[%361, %c128_160] : memref<16x256xf32, #tpu.memory_space<vmem>>, vector<2x128xf32>
    %c0_161 = arith.constant 0 : index
    %c0_162 = arith.constant 0 : index
    %363 = vector.load %arg17[%c0_161, %c0_162] : memref<4x32xf32, #tpu.memory_space<vmem>>, vector<4x32xf32>
    %364 = vector.extract_strided_slice %363 {offsets = [0, 0], sizes = [2, 32], strides = [1, 1]} : vector<4x32xf32> to vector<2x32xf32>
    %cst_163 = arith.constant dense<0.000000e+00> : vector<2x128xf32>
    %365 = tpu.matmul %364, %11, %cst_163 {dimension_numbers = #tpu.dot_dimension_numbers<[1], [0], [0], [1], [0, 0, 1, 1], [], []>} : vector<2x32xf32>, vector<32x128xf32>, vector<2x128xf32> -> vector<2x128xf32>
    %366 = arith.addf %360, %365 : vector<2x128xf32>
    %367 = vector.extract_strided_slice %363 {offsets = [2, 0], sizes = [2, 32], strides = [1, 1]} : vector<4x32xf32> to vector<2x32xf32>
    %cst_164 = arith.constant dense<0.000000e+00> : vector<2x128xf32>
    %368 = tpu.matmul %367, %12, %cst_164 {dimension_numbers = #tpu.dot_dimension_numbers<[1], [0], [0], [1], [0, 0, 1, 1], [], []>} : vector<2x32xf32>, vector<32x128xf32>, vector<2x128xf32> -> vector<2x128xf32>
    %369 = arith.addf %362, %368 : vector<2x128xf32>
    %370 = tpu.concatenate %366, %369 in 0 : vector<2x128xf32>, vector<2x128xf32> -> vector<4x128xf32>
    %371 = vector.extract_strided_slice %370 {offsets = [0, 0], sizes = [4, 32], strides = [1, 1]} : vector<4x128xf32> to vector<4x32xf32>
    %372 = arith.negf %371 : vector<4x32xf32>
    %373 = math.exp %372 : vector<4x32xf32>
    %cst_165 = arith.constant 1.000000e+00 : f32
    %374 = vector.broadcast %cst_165 : f32 to vector<4x32xf32>
    %375 = arith.addf %374, %373 : vector<4x32xf32>
    %376 = arith.divf %374, %375 : vector<4x32xf32>
    %377 = vector.extract_strided_slice %370 {offsets = [0, 32], sizes = [4, 32], strides = [1, 1]} : vector<4x128xf32> to vector<4x32xf32>
    %378 = arith.negf %377 : vector<4x32xf32>
    %379 = math.exp %378 : vector<4x32xf32>
    %cst_166 = arith.constant 1.000000e+00 : f32
    %380 = vector.broadcast %cst_166 : f32 to vector<4x32xf32>
    %381 = arith.addf %380, %379 : vector<4x32xf32>
    %382 = arith.divf %380, %381 : vector<4x32xf32>
    %383 = vector.extract_strided_slice %370 {offsets = [0, 64], sizes = [4, 32], strides = [1, 1]} : vector<4x128xf32> to vector<4x32xf32>
    %384 = math.tanh %383 : vector<4x32xf32>
    %385 = vector.extract_strided_slice %370 {offsets = [0, 96], sizes = [4, 32], strides = [1, 1]} : vector<4x128xf32> to vector<4x32xf32>
    %386 = arith.negf %385 : vector<4x32xf32>
    %387 = math.exp %386 : vector<4x32xf32>
    %cst_167 = arith.constant 1.000000e+00 : f32
    %388 = vector.broadcast %cst_167 : f32 to vector<4x32xf32>
    %389 = arith.addf %388, %387 : vector<4x32xf32>
    %390 = arith.divf %388, %389 : vector<4x32xf32>
    %c0_168 = arith.constant 0 : index
    %c0_169 = arith.constant 0 : index
    %391 = vector.load %arg18[%c0_168, %c0_169] : memref<4x32xf32, #tpu.memory_space<vmem>>, vector<4x32xf32>
    %392 = arith.mulf %382, %391 : vector<4x32xf32>
    %393 = arith.mulf %376, %384 : vector<4x32xf32>
    %394 = arith.addf %392, %393 : vector<4x32xf32>
    %395 = math.tanh %394 : vector<4x32xf32>
    %396 = arith.mulf %390, %395 : vector<4x32xf32>
    %c0_170 = arith.constant 0 : index
    %c0_171 = arith.constant 0 : index
    %397 = vector.load %arg17[%c0_170, %c0_171] : memref<4x32xf32, #tpu.memory_space<vmem>>, vector<4x32xf32>
    tpu.vector_store %arg17[%c0_170, %c0_171], %396 {strides = array<i32>} : memref<4x32xf32, #tpu.memory_space<vmem>>, vector<4x32xf32>,
    %c0_172 = arith.constant 0 : index
    %c0_173 = arith.constant 0 : index
    %398 = vector.load %arg18[%c0_172, %c0_173] : memref<4x32xf32, #tpu.memory_space<vmem>>, vector<4x32xf32>
    tpu.vector_store %arg18[%c0_172, %c0_173], %394 {strides = array<i32>} : memref<4x32xf32, #tpu.memory_space<vmem>>, vector<4x32xf32>,
    %399 = vector.extract_strided_slice %396 {offsets = [0, 0], sizes = [2, 32], strides = [1, 1]} : vector<4x32xf32> to vector<2x32xf32>
    %400 = arith.index_cast %356 : i32 to index
    %c0_174 = arith.constant 0 : index
    %401 = vector.load %arg15[%400, %c0_174] : memref<16x32xf32, #tpu.memory_space<vmem>>, vector<2x32xf32>
    tpu.vector_store %arg15[%400, %c0_174], %399 {strides = array<i32>} : memref<16x32xf32, #tpu.memory_space<vmem>>, vector<2x32xf32>,
    %402 = vector.extract_strided_slice %396 {offsets = [2, 0], sizes = [2, 32], strides = [1, 1]} : vector<4x32xf32> to vector<2x32xf32>
    %403 = arith.index_cast %358 : i32 to index
    %c0_175 = arith.constant 0 : index
    %404 = vector.load %arg16[%403, %c0_175] : memref<16x32xf32, #tpu.memory_space<vmem>>, vector<2x32xf32>
    tpu.vector_store %arg16[%403, %c0_175], %402 {strides = array<i32>} : memref<16x32xf32, #tpu.memory_space<vmem>>, vector<2x32xf32>,
    %c8_i32 = arith.constant 8 : i32
    %c0_176 = arith.constant 0 : index
    %c0_177 = arith.constant 0 : index
    %405 = vector.load %arg15[%c0_176, %c0_177] : memref<16x32xf32, #tpu.memory_space<vmem>>, vector<16x32xf32>
    %c0_178 = arith.constant 0 : index
    %c0_179 = arith.constant 0 : index
    %406 = vector.load %arg6[%c0_178, %c0_179] : memref<64x256xf32, #tpu.memory_space<vmem>>, vector<32x256xf32>
    %cst_180 = arith.constant dense<0.000000e+00> : vector<16x256xf32>
    %407 = tpu.matmul %405, %406, %cst_180 {dimension_numbers = #tpu.dot_dimension_numbers<[1], [0], [0], [1], [0, 0, 1, 1], [], []>} : vector<16x32xf32>, vector<32x256xf32>, vector<16x256xf32> -> vector<16x256xf32>
    %c0_181 = arith.constant 0 : index
    %c0_182 = arith.constant 0 : index
    %408 = vector.load %arg16[%c0_181, %c0_182] : memref<16x32xf32, #tpu.memory_space<vmem>>, vector<16x32xf32>
    %c32 = arith.constant 32 : index
    %c0_183 = arith.constant 0 : index
    %409 = vector.load %arg6[%c32, %c0_183] : memref<64x256xf32, #tpu.memory_space<vmem>>, vector<32x256xf32>
    %cst_184 = arith.constant dense<0.000000e+00> : vector<16x256xf32>
    %410 = tpu.matmul %408, %409, %cst_184 {dimension_numbers = #tpu.dot_dimension_numbers<[1], [0], [0], [1], [0, 0, 1, 1], [], []>} : vector<16x32xf32>, vector<32x256xf32>, vector<16x256xf32> -> vector<16x256xf32>
    %411 = arith.addf %407, %410 : vector<16x256xf32>
    %c0_185 = arith.constant 0 : index
    %c0_186 = arith.constant 0 : index
    %412 = vector.load %arg7[%c0_185, %c0_186] : memref<1x256xf32, #tpu.memory_space<vmem>>, vector<1x256xf32>
    %413 = vector.broadcast %412 : vector<1x256xf32> to vector<16x256xf32>
    %414 = arith.addf %411, %413 : vector<16x256xf32>
    %c0_187 = arith.constant 0 : index
    %c0_188 = arith.constant 0 : index
    %415 = vector.load %arg14[%c0_187, %c0_188] : memref<16x256xf32, #tpu.memory_space<vmem>>, vector<16x256xf32>
    tpu.vector_store %arg14[%c0_187, %c0_188], %414 {strides = array<i32>} : memref<16x256xf32, #tpu.memory_space<vmem>>, vector<16x256xf32>,
    %cst_189 = arith.constant 0.000000e+00 : f32
    %416 = vector.broadcast %cst_189 : f32 to vector<4x32xf32>
    %c0_190 = arith.constant 0 : index
    %c0_191 = arith.constant 0 : index
    %417 = vector.load %arg17[%c0_190, %c0_191] : memref<4x32xf32, #tpu.memory_space<vmem>>, vector<4x32xf32>
    tpu.vector_store %arg17[%c0_190, %c0_191], %416 {strides = array<i32>} : memref<4x32xf32, #tpu.memory_space<vmem>>, vector<4x32xf32>,
    %cst_192 = arith.constant 0.000000e+00 : f32
    %418 = vector.broadcast %cst_192 : f32 to vector<4x32xf32>
    %c0_193 = arith.constant 0 : index
    %c0_194 = arith.constant 0 : index
    %419 = vector.load %arg18[%c0_193, %c0_194] : memref<4x32xf32, #tpu.memory_space<vmem>>, vector<4x32xf32>
    tpu.vector_store %arg18[%c0_193, %c0_194], %418 {strides = array<i32>} : memref<4x32xf32, #tpu.memory_space<vmem>>, vector<4x32xf32>,
    %c0_195 = arith.constant 0 : index
    %c0_196 = arith.constant 0 : index
    %420 = vector.load %arg8[%c0_195, %c0_196] : memref<32x128xf32, #tpu.memory_space<vmem>>, vector<32x128xf32>
    %c0_197 = arith.constant 0 : index
    %c0_198 = arith.constant 0 : index
    %421 = vector.load %arg9[%c0_197, %c0_198] : memref<32x128xf32, #tpu.memory_space<vmem>>, vector<32x128xf32>
    %c0_i32_199 = arith.constant 0 : i32
    %c2_i32_200 = arith.constant 2 : i32
    %422 = arith.muli %c0_i32_199, %c2_i32_200 : i32
    %c7_i32_201 = arith.constant 7 : i32
    %423 = arith.subi %c7_i32_201, %c0_i32_199 : i32
    %c2_i32_202 = arith.constant 2 : i32
    %424 = arith.muli %423, %c2_i32_202 : i32
    %425 = arith.index_cast %422 : i32 to index
    %c0_203 = arith.constant 0 : index
    %426 = vector.load %arg14[%425, %c0_203] : memref<16x256xf32, #tpu.memory_space<vmem>>, vector<2x128xf32>
    %427 = arith.index_cast %424 : i32 to index
    %c128_204 = arith.constant 128 : index
    %428 = vector.load %arg14[%427, %c128_204] : memref<16x256xf32, #tpu.memory_space<vmem>>, vector<2x128xf32>
    %c0_205 = arith.constant 0 : index
    %c0_206 = arith.constant 0 : index
    %429 = vector.load %arg17[%c0_205, %c0_206] : memref<4x32xf32, #tpu.memory_space<vmem>>, vector<4x32xf32>
    %430 = vector.extract_strided_slice %429 {offsets = [0, 0], sizes = [2, 32], strides = [1, 1]} : vector<4x32xf32> to vector<2x32xf32>
    %cst_207 = arith.constant dense<0.000000e+00> : vector<2x128xf32>
    %431 = tpu.matmul %430, %420, %cst_207 {dimension_numbers = #tpu.dot_dimension_numbers<[1], [0], [0], [1], [0, 0, 1, 1], [], []>} : vector<2x32xf32>, vector<32x128xf32>, vector<2x128xf32> -> vector<2x128xf32>
    %432 = arith.addf %426, %431 : vector<2x128xf32>
    %433 = vector.extract_strided_slice %429 {offsets = [2, 0], sizes = [2, 32], strides = [1, 1]} : vector<4x32xf32> to vector<2x32xf32>
    %cst_208 = arith.constant dense<0.000000e+00> : vector<2x128xf32>
    %434 = tpu.matmul %433, %421, %cst_208 {dimension_numbers = #tpu.dot_dimension_numbers<[1], [0], [0], [1], [0, 0, 1, 1], [], []>} : vector<2x32xf32>, vector<32x128xf32>, vector<2x128xf32> -> vector<2x128xf32>
    %435 = arith.addf %428, %434 : vector<2x128xf32>
    %436 = tpu.concatenate %432, %435 in 0 : vector<2x128xf32>, vector<2x128xf32> -> vector<4x128xf32>
    %437 = vector.extract_strided_slice %436 {offsets = [0, 0], sizes = [4, 32], strides = [1, 1]} : vector<4x128xf32> to vector<4x32xf32>
    %438 = arith.negf %437 : vector<4x32xf32>
    %439 = math.exp %438 : vector<4x32xf32>
    %cst_209 = arith.constant 1.000000e+00 : f32
    %440 = vector.broadcast %cst_209 : f32 to vector<4x32xf32>
    %441 = arith.addf %440, %439 : vector<4x32xf32>
    %442 = arith.divf %440, %441 : vector<4x32xf32>
    %443 = vector.extract_strided_slice %436 {offsets = [0, 32], sizes = [4, 32], strides = [1, 1]} : vector<4x128xf32> to vector<4x32xf32>
    %444 = arith.negf %443 : vector<4x32xf32>
    %445 = math.exp %444 : vector<4x32xf32>
    %cst_210 = arith.constant 1.000000e+00 : f32
    %446 = vector.broadcast %cst_210 : f32 to vector<4x32xf32>
    %447 = arith.addf %446, %445 : vector<4x32xf32>
    %448 = arith.divf %446, %447 : vector<4x32xf32>
    %449 = vector.extract_strided_slice %436 {offsets = [0, 64], sizes = [4, 32], strides = [1, 1]} : vector<4x128xf32> to vector<4x32xf32>
    %450 = math.tanh %449 : vector<4x32xf32>
    %451 = vector.extract_strided_slice %436 {offsets = [0, 96], sizes = [4, 32], strides = [1, 1]} : vector<4x128xf32> to vector<4x32xf32>
    %452 = arith.negf %451 : vector<4x32xf32>
    %453 = math.exp %452 : vector<4x32xf32>
    %cst_211 = arith.constant 1.000000e+00 : f32
    %454 = vector.broadcast %cst_211 : f32 to vector<4x32xf32>
    %455 = arith.addf %454, %453 : vector<4x32xf32>
    %456 = arith.divf %454, %455 : vector<4x32xf32>
    %c0_212 = arith.constant 0 : index
    %c0_213 = arith.constant 0 : index
    %457 = vector.load %arg18[%c0_212, %c0_213] : memref<4x32xf32, #tpu.memory_space<vmem>>, vector<4x32xf32>
    %458 = arith.mulf %448, %457 : vector<4x32xf32>
    %459 = arith.mulf %442, %450 : vector<4x32xf32>
    %460 = arith.addf %458, %459 : vector<4x32xf32>
    %461 = math.tanh %460 : vector<4x32xf32>
    %462 = arith.mulf %456, %461 : vector<4x32xf32>
    %c0_214 = arith.constant 0 : index
    %c0_215 = arith.constant 0 : index
    %463 = vector.load %arg17[%c0_214, %c0_215] : memref<4x32xf32, #tpu.memory_space<vmem>>, vector<4x32xf32>
    tpu.vector_store %arg17[%c0_214, %c0_215], %462 {strides = array<i32>} : memref<4x32xf32, #tpu.memory_space<vmem>>, vector<4x32xf32>,
    %c0_216 = arith.constant 0 : index
    %c0_217 = arith.constant 0 : index
    %464 = vector.load %arg18[%c0_216, %c0_217] : memref<4x32xf32, #tpu.memory_space<vmem>>, vector<4x32xf32>
    tpu.vector_store %arg18[%c0_216, %c0_217], %460 {strides = array<i32>} : memref<4x32xf32, #tpu.memory_space<vmem>>, vector<4x32xf32>,
    %465 = vector.extract_strided_slice %462 {offsets = [0, 0], sizes = [2, 32], strides = [1, 1]} : vector<4x32xf32> to vector<2x32xf32>
    %466 = arith.index_cast %422 : i32 to index
    %c0_218 = arith.constant 0 : index
    %467 = vector.load %arg15[%466, %c0_218] : memref<16x32xf32, #tpu.memory_space<vmem>>, vector<2x32xf32>
    tpu.vector_store %arg15[%466, %c0_218], %465 {strides = array<i32>} : memref<16x32xf32, #tpu.memory_space<vmem>>, vector<2x32xf32>,
    %468 = vector.extract_strided_slice %462 {offsets = [2, 0], sizes = [2, 32], strides = [1, 1]} : vector<4x32xf32> to vector<2x32xf32>
    %469 = arith.index_cast %424 : i32 to index
    %c0_219 = arith.constant 0 : index
    %470 = vector.load %arg16[%469, %c0_219] : memref<16x32xf32, #tpu.memory_space<vmem>>, vector<2x32xf32>
    tpu.vector_store %arg16[%469, %c0_219], %468 {strides = array<i32>} : memref<16x32xf32, #tpu.memory_space<vmem>>, vector<2x32xf32>,
    %c1_i32_220 = arith.constant 1 : i32
    %c2_i32_221 = arith.constant 2 : i32
    %471 = arith.muli %c1_i32_220, %c2_i32_221 : i32
    %c7_i32_222 = arith.constant 7 : i32
    %472 = arith.subi %c7_i32_222, %c1_i32_220 : i32
    %c2_i32_223 = arith.constant 2 : i32
    %473 = arith.muli %472, %c2_i32_223 : i32
    %474 = arith.index_cast %471 : i32 to index
    %c0_224 = arith.constant 0 : index
    %475 = vector.load %arg14[%474, %c0_224] : memref<16x256xf32, #tpu.memory_space<vmem>>, vector<2x128xf32>
    %476 = arith.index_cast %473 : i32 to index
    %c128_225 = arith.constant 128 : index
    %477 = vector.load %arg14[%476, %c128_225] : memref<16x256xf32, #tpu.memory_space<vmem>>, vector<2x128xf32>
    %c0_226 = arith.constant 0 : index
    %c0_227 = arith.constant 0 : index
    %478 = vector.load %arg17[%c0_226, %c0_227] : memref<4x32xf32, #tpu.memory_space<vmem>>, vector<4x32xf32>
    %479 = vector.extract_strided_slice %478 {offsets = [0, 0], sizes = [2, 32], strides = [1, 1]} : vector<4x32xf32> to vector<2x32xf32>
    %cst_228 = arith.constant dense<0.000000e+00> : vector<2x128xf32>
    %480 = tpu.matmul %479, %420, %cst_228 {dimension_numbers = #tpu.dot_dimension_numbers<[1], [0], [0], [1], [0, 0, 1, 1], [], []>} : vector<2x32xf32>, vector<32x128xf32>, vector<2x128xf32> -> vector<2x128xf32>
    %481 = arith.addf %475, %480 : vector<2x128xf32>
    %482 = vector.extract_strided_slice %478 {offsets = [2, 0], sizes = [2, 32], strides = [1, 1]} : vector<4x32xf32> to vector<2x32xf32>
    %cst_229 = arith.constant dense<0.000000e+00> : vector<2x128xf32>
    %483 = tpu.matmul %482, %421, %cst_229 {dimension_numbers = #tpu.dot_dimension_numbers<[1], [0], [0], [1], [0, 0, 1, 1], [], []>} : vector<2x32xf32>, vector<32x128xf32>, vector<2x128xf32> -> vector<2x128xf32>
    %484 = arith.addf %477, %483 : vector<2x128xf32>
    %485 = tpu.concatenate %481, %484 in 0 : vector<2x128xf32>, vector<2x128xf32> -> vector<4x128xf32>
    %486 = vector.extract_strided_slice %485 {offsets = [0, 0], sizes = [4, 32], strides = [1, 1]} : vector<4x128xf32> to vector<4x32xf32>
    %487 = arith.negf %486 : vector<4x32xf32>
    %488 = math.exp %487 : vector<4x32xf32>
    %cst_230 = arith.constant 1.000000e+00 : f32
    %489 = vector.broadcast %cst_230 : f32 to vector<4x32xf32>
    %490 = arith.addf %489, %488 : vector<4x32xf32>
    %491 = arith.divf %489, %490 : vector<4x32xf32>
    %492 = vector.extract_strided_slice %485 {offsets = [0, 32], sizes = [4, 32], strides = [1, 1]} : vector<4x128xf32> to vector<4x32xf32>
    %493 = arith.negf %492 : vector<4x32xf32>
    %494 = math.exp %493 : vector<4x32xf32>
    %cst_231 = arith.constant 1.000000e+00 : f32
    %495 = vector.broadcast %cst_231 : f32 to vector<4x32xf32>
    %496 = arith.addf %495, %494 : vector<4x32xf32>
    %497 = arith.divf %495, %496 : vector<4x32xf32>
    %498 = vector.extract_strided_slice %485 {offsets = [0, 64], sizes = [4, 32], strides = [1, 1]} : vector<4x128xf32> to vector<4x32xf32>
    %499 = math.tanh %498 : vector<4x32xf32>
    %500 = vector.extract_strided_slice %485 {offsets = [0, 96], sizes = [4, 32], strides = [1, 1]} : vector<4x128xf32> to vector<4x32xf32>
    %501 = arith.negf %500 : vector<4x32xf32>
    %502 = math.exp %501 : vector<4x32xf32>
    %cst_232 = arith.constant 1.000000e+00 : f32
    %503 = vector.broadcast %cst_232 : f32 to vector<4x32xf32>
    %504 = arith.addf %503, %502 : vector<4x32xf32>
    %505 = arith.divf %503, %504 : vector<4x32xf32>
    %c0_233 = arith.constant 0 : index
    %c0_234 = arith.constant 0 : index
    %506 = vector.load %arg18[%c0_233, %c0_234] : memref<4x32xf32, #tpu.memory_space<vmem>>, vector<4x32xf32>
    %507 = arith.mulf %497, %506 : vector<4x32xf32>
    %508 = arith.mulf %491, %499 : vector<4x32xf32>
    %509 = arith.addf %507, %508 : vector<4x32xf32>
    %510 = math.tanh %509 : vector<4x32xf32>
    %511 = arith.mulf %505, %510 : vector<4x32xf32>
    %c0_235 = arith.constant 0 : index
    %c0_236 = arith.constant 0 : index
    %512 = vector.load %arg17[%c0_235, %c0_236] : memref<4x32xf32, #tpu.memory_space<vmem>>, vector<4x32xf32>
    tpu.vector_store %arg17[%c0_235, %c0_236], %511 {strides = array<i32>} : memref<4x32xf32, #tpu.memory_space<vmem>>, vector<4x32xf32>,
    %c0_237 = arith.constant 0 : index
    %c0_238 = arith.constant 0 : index
    %513 = vector.load %arg18[%c0_237, %c0_238] : memref<4x32xf32, #tpu.memory_space<vmem>>, vector<4x32xf32>
    tpu.vector_store %arg18[%c0_237, %c0_238], %509 {strides = array<i32>} : memref<4x32xf32, #tpu.memory_space<vmem>>, vector<4x32xf32>,
    %514 = vector.extract_strided_slice %511 {offsets = [0, 0], sizes = [2, 32], strides = [1, 1]} : vector<4x32xf32> to vector<2x32xf32>
    %515 = arith.index_cast %471 : i32 to index
    %c0_239 = arith.constant 0 : index
    %516 = vector.load %arg15[%515, %c0_239] : memref<16x32xf32, #tpu.memory_space<vmem>>, vector<2x32xf32>
    tpu.vector_store %arg15[%515, %c0_239], %514 {strides = array<i32>} : memref<16x32xf32, #tpu.memory_space<vmem>>, vector<2x32xf32>,
    %517 = vector.extract_strided_slice %511 {offsets = [2, 0], sizes = [2, 32], strides = [1, 1]} : vector<4x32xf32> to vector<2x32xf32>
    %518 = arith.index_cast %473 : i32 to index
    %c0_240 = arith.constant 0 : index
    %519 = vector.load %arg16[%518, %c0_240] : memref<16x32xf32, #tpu.memory_space<vmem>>, vector<2x32xf32>
    tpu.vector_store %arg16[%518, %c0_240], %517 {strides = array<i32>} : memref<16x32xf32, #tpu.memory_space<vmem>>, vector<2x32xf32>,
    %c2_i32_241 = arith.constant 2 : i32
    %c2_i32_242 = arith.constant 2 : i32
    %520 = arith.muli %c2_i32_241, %c2_i32_242 : i32
    %c7_i32_243 = arith.constant 7 : i32
    %521 = arith.subi %c7_i32_243, %c2_i32_241 : i32
    %c2_i32_244 = arith.constant 2 : i32
    %522 = arith.muli %521, %c2_i32_244 : i32
    %523 = arith.index_cast %520 : i32 to index
    %c0_245 = arith.constant 0 : index
    %524 = vector.load %arg14[%523, %c0_245] : memref<16x256xf32, #tpu.memory_space<vmem>>, vector<2x128xf32>
    %525 = arith.index_cast %522 : i32 to index
    %c128_246 = arith.constant 128 : index
    %526 = vector.load %arg14[%525, %c128_246] : memref<16x256xf32, #tpu.memory_space<vmem>>, vector<2x128xf32>
    %c0_247 = arith.constant 0 : index
    %c0_248 = arith.constant 0 : index
    %527 = vector.load %arg17[%c0_247, %c0_248] : memref<4x32xf32, #tpu.memory_space<vmem>>, vector<4x32xf32>
    %528 = vector.extract_strided_slice %527 {offsets = [0, 0], sizes = [2, 32], strides = [1, 1]} : vector<4x32xf32> to vector<2x32xf32>
    %cst_249 = arith.constant dense<0.000000e+00> : vector<2x128xf32>
    %529 = tpu.matmul %528, %420, %cst_249 {dimension_numbers = #tpu.dot_dimension_numbers<[1], [0], [0], [1], [0, 0, 1, 1], [], []>} : vector<2x32xf32>, vector<32x128xf32>, vector<2x128xf32> -> vector<2x128xf32>
    %530 = arith.addf %524, %529 : vector<2x128xf32>
    %531 = vector.extract_strided_slice %527 {offsets = [2, 0], sizes = [2, 32], strides = [1, 1]} : vector<4x32xf32> to vector<2x32xf32>
    %cst_250 = arith.constant dense<0.000000e+00> : vector<2x128xf32>
    %532 = tpu.matmul %531, %421, %cst_250 {dimension_numbers = #tpu.dot_dimension_numbers<[1], [0], [0], [1], [0, 0, 1, 1], [], []>} : vector<2x32xf32>, vector<32x128xf32>, vector<2x128xf32> -> vector<2x128xf32>
    %533 = arith.addf %526, %532 : vector<2x128xf32>
    %534 = tpu.concatenate %530, %533 in 0 : vector<2x128xf32>, vector<2x128xf32> -> vector<4x128xf32>
    %535 = vector.extract_strided_slice %534 {offsets = [0, 0], sizes = [4, 32], strides = [1, 1]} : vector<4x128xf32> to vector<4x32xf32>
    %536 = arith.negf %535 : vector<4x32xf32>
    %537 = math.exp %536 : vector<4x32xf32>
    %cst_251 = arith.constant 1.000000e+00 : f32
    %538 = vector.broadcast %cst_251 : f32 to vector<4x32xf32>
    %539 = arith.addf %538, %537 : vector<4x32xf32>
    %540 = arith.divf %538, %539 : vector<4x32xf32>
    %541 = vector.extract_strided_slice %534 {offsets = [0, 32], sizes = [4, 32], strides = [1, 1]} : vector<4x128xf32> to vector<4x32xf32>
    %542 = arith.negf %541 : vector<4x32xf32>
    %543 = math.exp %542 : vector<4x32xf32>
    %cst_252 = arith.constant 1.000000e+00 : f32
    %544 = vector.broadcast %cst_252 : f32 to vector<4x32xf32>
    %545 = arith.addf %544, %543 : vector<4x32xf32>
    %546 = arith.divf %544, %545 : vector<4x32xf32>
    %547 = vector.extract_strided_slice %534 {offsets = [0, 64], sizes = [4, 32], strides = [1, 1]} : vector<4x128xf32> to vector<4x32xf32>
    %548 = math.tanh %547 : vector<4x32xf32>
    %549 = vector.extract_strided_slice %534 {offsets = [0, 96], sizes = [4, 32], strides = [1, 1]} : vector<4x128xf32> to vector<4x32xf32>
    %550 = arith.negf %549 : vector<4x32xf32>
    %551 = math.exp %550 : vector<4x32xf32>
    %cst_253 = arith.constant 1.000000e+00 : f32
    %552 = vector.broadcast %cst_253 : f32 to vector<4x32xf32>
    %553 = arith.addf %552, %551 : vector<4x32xf32>
    %554 = arith.divf %552, %553 : vector<4x32xf32>
    %c0_254 = arith.constant 0 : index
    %c0_255 = arith.constant 0 : index
    %555 = vector.load %arg18[%c0_254, %c0_255] : memref<4x32xf32, #tpu.memory_space<vmem>>, vector<4x32xf32>
    %556 = arith.mulf %546, %555 : vector<4x32xf32>
    %557 = arith.mulf %540, %548 : vector<4x32xf32>
    %558 = arith.addf %556, %557 : vector<4x32xf32>
    %559 = math.tanh %558 : vector<4x32xf32>
    %560 = arith.mulf %554, %559 : vector<4x32xf32>
    %c0_256 = arith.constant 0 : index
    %c0_257 = arith.constant 0 : index
    %561 = vector.load %arg17[%c0_256, %c0_257] : memref<4x32xf32, #tpu.memory_space<vmem>>, vector<4x32xf32>
    tpu.vector_store %arg17[%c0_256, %c0_257], %560 {strides = array<i32>} : memref<4x32xf32, #tpu.memory_space<vmem>>, vector<4x32xf32>,
    %c0_258 = arith.constant 0 : index
    %c0_259 = arith.constant 0 : index
    %562 = vector.load %arg18[%c0_258, %c0_259] : memref<4x32xf32, #tpu.memory_space<vmem>>, vector<4x32xf32>
    tpu.vector_store %arg18[%c0_258, %c0_259], %558 {strides = array<i32>} : memref<4x32xf32, #tpu.memory_space<vmem>>, vector<4x32xf32>,
    %563 = vector.extract_strided_slice %560 {offsets = [0, 0], sizes = [2, 32], strides = [1, 1]} : vector<4x32xf32> to vector<2x32xf32>
    %564 = arith.index_cast %520 : i32 to index
    %c0_260 = arith.constant 0 : index
    %565 = vector.load %arg15[%564, %c0_260] : memref<16x32xf32, #tpu.memory_space<vmem>>, vector<2x32xf32>
    tpu.vector_store %arg15[%564, %c0_260], %563 {strides = array<i32>} : memref<16x32xf32, #tpu.memory_space<vmem>>, vector<2x32xf32>,
    %566 = vector.extract_strided_slice %560 {offsets = [2, 0], sizes = [2, 32], strides = [1, 1]} : vector<4x32xf32> to vector<2x32xf32>
    %567 = arith.index_cast %522 : i32 to index
    %c0_261 = arith.constant 0 : index
    %568 = vector.load %arg16[%567, %c0_261] : memref<16x32xf32, #tpu.memory_space<vmem>>, vector<2x32xf32>
    tpu.vector_store %arg16[%567, %c0_261], %566 {strides = array<i32>} : memref<16x32xf32, #tpu.memory_space<vmem>>, vector<2x32xf32>,
    %c3_i32_262 = arith.constant 3 : i32
    %c2_i32_263 = arith.constant 2 : i32
    %569 = arith.muli %c3_i32_262, %c2_i32_263 : i32
    %c7_i32_264 = arith.constant 7 : i32
    %570 = arith.subi %c7_i32_264, %c3_i32_262 : i32
    %c2_i32_265 = arith.constant 2 : i32
    %571 = arith.muli %570, %c2_i32_265 : i32
    %572 = arith.index_cast %569 : i32 to index
    %c0_266 = arith.constant 0 : index
    %573 = vector.load %arg14[%572, %c0_266] : memref<16x256xf32, #tpu.memory_space<vmem>>, vector<2x128xf32>
    %574 = arith.index_cast %571 : i32 to index
    %c128_267 = arith.constant 128 : index
    %575 = vector.load %arg14[%574, %c128_267] : memref<16x256xf32, #tpu.memory_space<vmem>>, vector<2x128xf32>
    %c0_268 = arith.constant 0 : index
    %c0_269 = arith.constant 0 : index
    %576 = vector.load %arg17[%c0_268, %c0_269] : memref<4x32xf32, #tpu.memory_space<vmem>>, vector<4x32xf32>
    %577 = vector.extract_strided_slice %576 {offsets = [0, 0], sizes = [2, 32], strides = [1, 1]} : vector<4x32xf32> to vector<2x32xf32>
    %cst_270 = arith.constant dense<0.000000e+00> : vector<2x128xf32>
    %578 = tpu.matmul %577, %420, %cst_270 {dimension_numbers = #tpu.dot_dimension_numbers<[1], [0], [0], [1], [0, 0, 1, 1], [], []>} : vector<2x32xf32>, vector<32x128xf32>, vector<2x128xf32> -> vector<2x128xf32>
    %579 = arith.addf %573, %578 : vector<2x128xf32>
    %580 = vector.extract_strided_slice %576 {offsets = [2, 0], sizes = [2, 32], strides = [1, 1]} : vector<4x32xf32> to vector<2x32xf32>
    %cst_271 = arith.constant dense<0.000000e+00> : vector<2x128xf32>
    %581 = tpu.matmul %580, %421, %cst_271 {dimension_numbers = #tpu.dot_dimension_numbers<[1], [0], [0], [1], [0, 0, 1, 1], [], []>} : vector<2x32xf32>, vector<32x128xf32>, vector<2x128xf32> -> vector<2x128xf32>
    %582 = arith.addf %575, %581 : vector<2x128xf32>
    %583 = tpu.concatenate %579, %582 in 0 : vector<2x128xf32>, vector<2x128xf32> -> vector<4x128xf32>
    %584 = vector.extract_strided_slice %583 {offsets = [0, 0], sizes = [4, 32], strides = [1, 1]} : vector<4x128xf32> to vector<4x32xf32>
    %585 = arith.negf %584 : vector<4x32xf32>
    %586 = math.exp %585 : vector<4x32xf32>
    %cst_272 = arith.constant 1.000000e+00 : f32
    %587 = vector.broadcast %cst_272 : f32 to vector<4x32xf32>
    %588 = arith.addf %587, %586 : vector<4x32xf32>
    %589 = arith.divf %587, %588 : vector<4x32xf32>
    %590 = vector.extract_strided_slice %583 {offsets = [0, 32], sizes = [4, 32], strides = [1, 1]} : vector<4x128xf32> to vector<4x32xf32>
    %591 = arith.negf %590 : vector<4x32xf32>
    %592 = math.exp %591 : vector<4x32xf32>
    %cst_273 = arith.constant 1.000000e+00 : f32
    %593 = vector.broadcast %cst_273 : f32 to vector<4x32xf32>
    %594 = arith.addf %593, %592 : vector<4x32xf32>
    %595 = arith.divf %593, %594 : vector<4x32xf32>
    %596 = vector.extract_strided_slice %583 {offsets = [0, 64], sizes = [4, 32], strides = [1, 1]} : vector<4x128xf32> to vector<4x32xf32>
    %597 = math.tanh %596 : vector<4x32xf32>
    %598 = vector.extract_strided_slice %583 {offsets = [0, 96], sizes = [4, 32], strides = [1, 1]} : vector<4x128xf32> to vector<4x32xf32>
    %599 = arith.negf %598 : vector<4x32xf32>
    %600 = math.exp %599 : vector<4x32xf32>
    %cst_274 = arith.constant 1.000000e+00 : f32
    %601 = vector.broadcast %cst_274 : f32 to vector<4x32xf32>
    %602 = arith.addf %601, %600 : vector<4x32xf32>
    %603 = arith.divf %601, %602 : vector<4x32xf32>
    %c0_275 = arith.constant 0 : index
    %c0_276 = arith.constant 0 : index
    %604 = vector.load %arg18[%c0_275, %c0_276] : memref<4x32xf32, #tpu.memory_space<vmem>>, vector<4x32xf32>
    %605 = arith.mulf %595, %604 : vector<4x32xf32>
    %606 = arith.mulf %589, %597 : vector<4x32xf32>
    %607 = arith.addf %605, %606 : vector<4x32xf32>
    %608 = math.tanh %607 : vector<4x32xf32>
    %609 = arith.mulf %603, %608 : vector<4x32xf32>
    %c0_277 = arith.constant 0 : index
    %c0_278 = arith.constant 0 : index
    %610 = vector.load %arg17[%c0_277, %c0_278] : memref<4x32xf32, #tpu.memory_space<vmem>>, vector<4x32xf32>
    tpu.vector_store %arg17[%c0_277, %c0_278], %609 {strides = array<i32>} : memref<4x32xf32, #tpu.memory_space<vmem>>, vector<4x32xf32>,
    %c0_279 = arith.constant 0 : index
    %c0_280 = arith.constant 0 : index
    %611 = vector.load %arg18[%c0_279, %c0_280] : memref<4x32xf32, #tpu.memory_space<vmem>>, vector<4x32xf32>
    tpu.vector_store %arg18[%c0_279, %c0_280], %607 {strides = array<i32>} : memref<4x32xf32, #tpu.memory_space<vmem>>, vector<4x32xf32>,
    %612 = vector.extract_strided_slice %609 {offsets = [0, 0], sizes = [2, 32], strides = [1, 1]} : vector<4x32xf32> to vector<2x32xf32>
    %613 = arith.index_cast %569 : i32 to index
    %c0_281 = arith.constant 0 : index
    %614 = vector.load %arg15[%613, %c0_281] : memref<16x32xf32, #tpu.memory_space<vmem>>, vector<2x32xf32>
    tpu.vector_store %arg15[%613, %c0_281], %612 {strides = array<i32>} : memref<16x32xf32, #tpu.memory_space<vmem>>, vector<2x32xf32>,
    %615 = vector.extract_strided_slice %609 {offsets = [2, 0], sizes = [2, 32], strides = [1, 1]} : vector<4x32xf32> to vector<2x32xf32>
    %616 = arith.index_cast %571 : i32 to index
    %c0_282 = arith.constant 0 : index
    %617 = vector.load %arg16[%616, %c0_282] : memref<16x32xf32, #tpu.memory_space<vmem>>, vector<2x32xf32>
    tpu.vector_store %arg16[%616, %c0_282], %615 {strides = array<i32>} : memref<16x32xf32, #tpu.memory_space<vmem>>, vector<2x32xf32>,
    %c4_i32_283 = arith.constant 4 : i32
    %c2_i32_284 = arith.constant 2 : i32
    %618 = arith.muli %c4_i32_283, %c2_i32_284 : i32
    %c7_i32_285 = arith.constant 7 : i32
    %619 = arith.subi %c7_i32_285, %c4_i32_283 : i32
    %c2_i32_286 = arith.constant 2 : i32
    %620 = arith.muli %619, %c2_i32_286 : i32
    %621 = arith.index_cast %618 : i32 to index
    %c0_287 = arith.constant 0 : index
    %622 = vector.load %arg14[%621, %c0_287] : memref<16x256xf32, #tpu.memory_space<vmem>>, vector<2x128xf32>
    %623 = arith.index_cast %620 : i32 to index
    %c128_288 = arith.constant 128 : index
    %624 = vector.load %arg14[%623, %c128_288] : memref<16x256xf32, #tpu.memory_space<vmem>>, vector<2x128xf32>
    %c0_289 = arith.constant 0 : index
    %c0_290 = arith.constant 0 : index
    %625 = vector.load %arg17[%c0_289, %c0_290] : memref<4x32xf32, #tpu.memory_space<vmem>>, vector<4x32xf32>
    %626 = vector.extract_strided_slice %625 {offsets = [0, 0], sizes = [2, 32], strides = [1, 1]} : vector<4x32xf32> to vector<2x32xf32>
    %cst_291 = arith.constant dense<0.000000e+00> : vector<2x128xf32>
    %627 = tpu.matmul %626, %420, %cst_291 {dimension_numbers = #tpu.dot_dimension_numbers<[1], [0], [0], [1], [0, 0, 1, 1], [], []>} : vector<2x32xf32>, vector<32x128xf32>, vector<2x128xf32> -> vector<2x128xf32>
    %628 = arith.addf %622, %627 : vector<2x128xf32>
    %629 = vector.extract_strided_slice %625 {offsets = [2, 0], sizes = [2, 32], strides = [1, 1]} : vector<4x32xf32> to vector<2x32xf32>
    %cst_292 = arith.constant dense<0.000000e+00> : vector<2x128xf32>
    %630 = tpu.matmul %629, %421, %cst_292 {dimension_numbers = #tpu.dot_dimension_numbers<[1], [0], [0], [1], [0, 0, 1, 1], [], []>} : vector<2x32xf32>, vector<32x128xf32>, vector<2x128xf32> -> vector<2x128xf32>
    %631 = arith.addf %624, %630 : vector<2x128xf32>
    %632 = tpu.concatenate %628, %631 in 0 : vector<2x128xf32>, vector<2x128xf32> -> vector<4x128xf32>
    %633 = vector.extract_strided_slice %632 {offsets = [0, 0], sizes = [4, 32], strides = [1, 1]} : vector<4x128xf32> to vector<4x32xf32>
    %634 = arith.negf %633 : vector<4x32xf32>
    %635 = math.exp %634 : vector<4x32xf32>
    %cst_293 = arith.constant 1.000000e+00 : f32
    %636 = vector.broadcast %cst_293 : f32 to vector<4x32xf32>
    %637 = arith.addf %636, %635 : vector<4x32xf32>
    %638 = arith.divf %636, %637 : vector<4x32xf32>
    %639 = vector.extract_strided_slice %632 {offsets = [0, 32], sizes = [4, 32], strides = [1, 1]} : vector<4x128xf32> to vector<4x32xf32>
    %640 = arith.negf %639 : vector<4x32xf32>
    %641 = math.exp %640 : vector<4x32xf32>
    %cst_294 = arith.constant 1.000000e+00 : f32
    %642 = vector.broadcast %cst_294 : f32 to vector<4x32xf32>
    %643 = arith.addf %642, %641 : vector<4x32xf32>
    %644 = arith.divf %642, %643 : vector<4x32xf32>
    %645 = vector.extract_strided_slice %632 {offsets = [0, 64], sizes = [4, 32], strides = [1, 1]} : vector<4x128xf32> to vector<4x32xf32>
    %646 = math.tanh %645 : vector<4x32xf32>
    %647 = vector.extract_strided_slice %632 {offsets = [0, 96], sizes = [4, 32], strides = [1, 1]} : vector<4x128xf32> to vector<4x32xf32>
    %648 = arith.negf %647 : vector<4x32xf32>
    %649 = math.exp %648 : vector<4x32xf32>
    %cst_295 = arith.constant 1.000000e+00 : f32
    %650 = vector.broadcast %cst_295 : f32 to vector<4x32xf32>
    %651 = arith.addf %650, %649 : vector<4x32xf32>
    %652 = arith.divf %650, %651 : vector<4x32xf32>
    %c0_296 = arith.constant 0 : index
    %c0_297 = arith.constant 0 : index
    %653 = vector.load %arg18[%c0_296, %c0_297] : memref<4x32xf32, #tpu.memory_space<vmem>>, vector<4x32xf32>
    %654 = arith.mulf %644, %653 : vector<4x32xf32>
    %655 = arith.mulf %638, %646 : vector<4x32xf32>
    %656 = arith.addf %654, %655 : vector<4x32xf32>
    %657 = math.tanh %656 : vector<4x32xf32>
    %658 = arith.mulf %652, %657 : vector<4x32xf32>
    %c0_298 = arith.constant 0 : index
    %c0_299 = arith.constant 0 : index
    %659 = vector.load %arg17[%c0_298, %c0_299] : memref<4x32xf32, #tpu.memory_space<vmem>>, vector<4x32xf32>
    tpu.vector_store %arg17[%c0_298, %c0_299], %658 {strides = array<i32>} : memref<4x32xf32, #tpu.memory_space<vmem>>, vector<4x32xf32>,
    %c0_300 = arith.constant 0 : index
    %c0_301 = arith.constant 0 : index
    %660 = vector.load %arg18[%c0_300, %c0_301] : memref<4x32xf32, #tpu.memory_space<vmem>>, vector<4x32xf32>
    tpu.vector_store %arg18[%c0_300, %c0_301], %656 {strides = array<i32>} : memref<4x32xf32, #tpu.memory_space<vmem>>, vector<4x32xf32>,
    %661 = vector.extract_strided_slice %658 {offsets = [0, 0], sizes = [2, 32], strides = [1, 1]} : vector<4x32xf32> to vector<2x32xf32>
    %662 = arith.index_cast %618 : i32 to index
    %c0_302 = arith.constant 0 : index
    %663 = vector.load %arg15[%662, %c0_302] : memref<16x32xf32, #tpu.memory_space<vmem>>, vector<2x32xf32>
    tpu.vector_store %arg15[%662, %c0_302], %661 {strides = array<i32>} : memref<16x32xf32, #tpu.memory_space<vmem>>, vector<2x32xf32>,
    %664 = vector.extract_strided_slice %658 {offsets = [2, 0], sizes = [2, 32], strides = [1, 1]} : vector<4x32xf32> to vector<2x32xf32>
    %665 = arith.index_cast %620 : i32 to index
    %c0_303 = arith.constant 0 : index
    %666 = vector.load %arg16[%665, %c0_303] : memref<16x32xf32, #tpu.memory_space<vmem>>, vector<2x32xf32>
    tpu.vector_store %arg16[%665, %c0_303], %664 {strides = array<i32>} : memref<16x32xf32, #tpu.memory_space<vmem>>, vector<2x32xf32>,
    %c5_i32_304 = arith.constant 5 : i32
    %c2_i32_305 = arith.constant 2 : i32
    %667 = arith.muli %c5_i32_304, %c2_i32_305 : i32
    %c7_i32_306 = arith.constant 7 : i32
    %668 = arith.subi %c7_i32_306, %c5_i32_304 : i32
    %c2_i32_307 = arith.constant 2 : i32
    %669 = arith.muli %668, %c2_i32_307 : i32
    %670 = arith.index_cast %667 : i32 to index
    %c0_308 = arith.constant 0 : index
    %671 = vector.load %arg14[%670, %c0_308] : memref<16x256xf32, #tpu.memory_space<vmem>>, vector<2x128xf32>
    %672 = arith.index_cast %669 : i32 to index
    %c128_309 = arith.constant 128 : index
    %673 = vector.load %arg14[%672, %c128_309] : memref<16x256xf32, #tpu.memory_space<vmem>>, vector<2x128xf32>
    %c0_310 = arith.constant 0 : index
    %c0_311 = arith.constant 0 : index
    %674 = vector.load %arg17[%c0_310, %c0_311] : memref<4x32xf32, #tpu.memory_space<vmem>>, vector<4x32xf32>
    %675 = vector.extract_strided_slice %674 {offsets = [0, 0], sizes = [2, 32], strides = [1, 1]} : vector<4x32xf32> to vector<2x32xf32>
    %cst_312 = arith.constant dense<0.000000e+00> : vector<2x128xf32>
    %676 = tpu.matmul %675, %420, %cst_312 {dimension_numbers = #tpu.dot_dimension_numbers<[1], [0], [0], [1], [0, 0, 1, 1], [], []>} : vector<2x32xf32>, vector<32x128xf32>, vector<2x128xf32> -> vector<2x128xf32>
    %677 = arith.addf %671, %676 : vector<2x128xf32>
    %678 = vector.extract_strided_slice %674 {offsets = [2, 0], sizes = [2, 32], strides = [1, 1]} : vector<4x32xf32> to vector<2x32xf32>
    %cst_313 = arith.constant dense<0.000000e+00> : vector<2x128xf32>
    %679 = tpu.matmul %678, %421, %cst_313 {dimension_numbers = #tpu.dot_dimension_numbers<[1], [0], [0], [1], [0, 0, 1, 1], [], []>} : vector<2x32xf32>, vector<32x128xf32>, vector<2x128xf32> -> vector<2x128xf32>
    %680 = arith.addf %673, %679 : vector<2x128xf32>
    %681 = tpu.concatenate %677, %680 in 0 : vector<2x128xf32>, vector<2x128xf32> -> vector<4x128xf32>
    %682 = vector.extract_strided_slice %681 {offsets = [0, 0], sizes = [4, 32], strides = [1, 1]} : vector<4x128xf32> to vector<4x32xf32>
    %683 = arith.negf %682 : vector<4x32xf32>
    %684 = math.exp %683 : vector<4x32xf32>
    %cst_314 = arith.constant 1.000000e+00 : f32
    %685 = vector.broadcast %cst_314 : f32 to vector<4x32xf32>
    %686 = arith.addf %685, %684 : vector<4x32xf32>
    %687 = arith.divf %685, %686 : vector<4x32xf32>
    %688 = vector.extract_strided_slice %681 {offsets = [0, 32], sizes = [4, 32], strides = [1, 1]} : vector<4x128xf32> to vector<4x32xf32>
    %689 = arith.negf %688 : vector<4x32xf32>
    %690 = math.exp %689 : vector<4x32xf32>
    %cst_315 = arith.constant 1.000000e+00 : f32
    %691 = vector.broadcast %cst_315 : f32 to vector<4x32xf32>
    %692 = arith.addf %691, %690 : vector<4x32xf32>
    %693 = arith.divf %691, %692 : vector<4x32xf32>
    %694 = vector.extract_strided_slice %681 {offsets = [0, 64], sizes = [4, 32], strides = [1, 1]} : vector<4x128xf32> to vector<4x32xf32>
    %695 = math.tanh %694 : vector<4x32xf32>
    %696 = vector.extract_strided_slice %681 {offsets = [0, 96], sizes = [4, 32], strides = [1, 1]} : vector<4x128xf32> to vector<4x32xf32>
    %697 = arith.negf %696 : vector<4x32xf32>
    %698 = math.exp %697 : vector<4x32xf32>
    %cst_316 = arith.constant 1.000000e+00 : f32
    %699 = vector.broadcast %cst_316 : f32 to vector<4x32xf32>
    %700 = arith.addf %699, %698 : vector<4x32xf32>
    %701 = arith.divf %699, %700 : vector<4x32xf32>
    %c0_317 = arith.constant 0 : index
    %c0_318 = arith.constant 0 : index
    %702 = vector.load %arg18[%c0_317, %c0_318] : memref<4x32xf32, #tpu.memory_space<vmem>>, vector<4x32xf32>
    %703 = arith.mulf %693, %702 : vector<4x32xf32>
    %704 = arith.mulf %687, %695 : vector<4x32xf32>
    %705 = arith.addf %703, %704 : vector<4x32xf32>
    %706 = math.tanh %705 : vector<4x32xf32>
    %707 = arith.mulf %701, %706 : vector<4x32xf32>
    %c0_319 = arith.constant 0 : index
    %c0_320 = arith.constant 0 : index
    %708 = vector.load %arg17[%c0_319, %c0_320] : memref<4x32xf32, #tpu.memory_space<vmem>>, vector<4x32xf32>
    tpu.vector_store %arg17[%c0_319, %c0_320], %707 {strides = array<i32>} : memref<4x32xf32, #tpu.memory_space<vmem>>, vector<4x32xf32>,
    %c0_321 = arith.constant 0 : index
    %c0_322 = arith.constant 0 : index
    %709 = vector.load %arg18[%c0_321, %c0_322] : memref<4x32xf32, #tpu.memory_space<vmem>>, vector<4x32xf32>
    tpu.vector_store %arg18[%c0_321, %c0_322], %705 {strides = array<i32>} : memref<4x32xf32, #tpu.memory_space<vmem>>, vector<4x32xf32>,
    %710 = vector.extract_strided_slice %707 {offsets = [0, 0], sizes = [2, 32], strides = [1, 1]} : vector<4x32xf32> to vector<2x32xf32>
    %711 = arith.index_cast %667 : i32 to index
    %c0_323 = arith.constant 0 : index
    %712 = vector.load %arg15[%711, %c0_323] : memref<16x32xf32, #tpu.memory_space<vmem>>, vector<2x32xf32>
    tpu.vector_store %arg15[%711, %c0_323], %710 {strides = array<i32>} : memref<16x32xf32, #tpu.memory_space<vmem>>, vector<2x32xf32>,
    %713 = vector.extract_strided_slice %707 {offsets = [2, 0], sizes = [2, 32], strides = [1, 1]} : vector<4x32xf32> to vector<2x32xf32>
    %714 = arith.index_cast %669 : i32 to index
    %c0_324 = arith.constant 0 : index
    %715 = vector.load %arg16[%714, %c0_324] : memref<16x32xf32, #tpu.memory_space<vmem>>, vector<2x32xf32>
    tpu.vector_store %arg16[%714, %c0_324], %713 {strides = array<i32>} : memref<16x32xf32, #tpu.memory_space<vmem>>, vector<2x32xf32>,
    %c6_i32_325 = arith.constant 6 : i32
    %c2_i32_326 = arith.constant 2 : i32
    %716 = arith.muli %c6_i32_325, %c2_i32_326 : i32
    %c7_i32_327 = arith.constant 7 : i32
    %717 = arith.subi %c7_i32_327, %c6_i32_325 : i32
    %c2_i32_328 = arith.constant 2 : i32
    %718 = arith.muli %717, %c2_i32_328 : i32
    %719 = arith.index_cast %716 : i32 to index
    %c0_329 = arith.constant 0 : index
    %720 = vector.load %arg14[%719, %c0_329] : memref<16x256xf32, #tpu.memory_space<vmem>>, vector<2x128xf32>
    %721 = arith.index_cast %718 : i32 to index
    %c128_330 = arith.constant 128 : index
    %722 = vector.load %arg14[%721, %c128_330] : memref<16x256xf32, #tpu.memory_space<vmem>>, vector<2x128xf32>
    %c0_331 = arith.constant 0 : index
    %c0_332 = arith.constant 0 : index
    %723 = vector.load %arg17[%c0_331, %c0_332] : memref<4x32xf32, #tpu.memory_space<vmem>>, vector<4x32xf32>
    %724 = vector.extract_strided_slice %723 {offsets = [0, 0], sizes = [2, 32], strides = [1, 1]} : vector<4x32xf32> to vector<2x32xf32>
    %cst_333 = arith.constant dense<0.000000e+00> : vector<2x128xf32>
    %725 = tpu.matmul %724, %420, %cst_333 {dimension_numbers = #tpu.dot_dimension_numbers<[1], [0], [0], [1], [0, 0, 1, 1], [], []>} : vector<2x32xf32>, vector<32x128xf32>, vector<2x128xf32> -> vector<2x128xf32>
    %726 = arith.addf %720, %725 : vector<2x128xf32>
    %727 = vector.extract_strided_slice %723 {offsets = [2, 0], sizes = [2, 32], strides = [1, 1]} : vector<4x32xf32> to vector<2x32xf32>
    %cst_334 = arith.constant dense<0.000000e+00> : vector<2x128xf32>
    %728 = tpu.matmul %727, %421, %cst_334 {dimension_numbers = #tpu.dot_dimension_numbers<[1], [0], [0], [1], [0, 0, 1, 1], [], []>} : vector<2x32xf32>, vector<32x128xf32>, vector<2x128xf32> -> vector<2x128xf32>
    %729 = arith.addf %722, %728 : vector<2x128xf32>
    %730 = tpu.concatenate %726, %729 in 0 : vector<2x128xf32>, vector<2x128xf32> -> vector<4x128xf32>
    %731 = vector.extract_strided_slice %730 {offsets = [0, 0], sizes = [4, 32], strides = [1, 1]} : vector<4x128xf32> to vector<4x32xf32>
    %732 = arith.negf %731 : vector<4x32xf32>
    %733 = math.exp %732 : vector<4x32xf32>
    %cst_335 = arith.constant 1.000000e+00 : f32
    %734 = vector.broadcast %cst_335 : f32 to vector<4x32xf32>
    %735 = arith.addf %734, %733 : vector<4x32xf32>
    %736 = arith.divf %734, %735 : vector<4x32xf32>
    %737 = vector.extract_strided_slice %730 {offsets = [0, 32], sizes = [4, 32], strides = [1, 1]} : vector<4x128xf32> to vector<4x32xf32>
    %738 = arith.negf %737 : vector<4x32xf32>
    %739 = math.exp %738 : vector<4x32xf32>
    %cst_336 = arith.constant 1.000000e+00 : f32
    %740 = vector.broadcast %cst_336 : f32 to vector<4x32xf32>
    %741 = arith.addf %740, %739 : vector<4x32xf32>
    %742 = arith.divf %740, %741 : vector<4x32xf32>
    %743 = vector.extract_strided_slice %730 {offsets = [0, 64], sizes = [4, 32], strides = [1, 1]} : vector<4x128xf32> to vector<4x32xf32>
    %744 = math.tanh %743 : vector<4x32xf32>
    %745 = vector.extract_strided_slice %730 {offsets = [0, 96], sizes = [4, 32], strides = [1, 1]} : vector<4x128xf32> to vector<4x32xf32>
    %746 = arith.negf %745 : vector<4x32xf32>
    %747 = math.exp %746 : vector<4x32xf32>
    %cst_337 = arith.constant 1.000000e+00 : f32
    %748 = vector.broadcast %cst_337 : f32 to vector<4x32xf32>
    %749 = arith.addf %748, %747 : vector<4x32xf32>
    %750 = arith.divf %748, %749 : vector<4x32xf32>
    %c0_338 = arith.constant 0 : index
    %c0_339 = arith.constant 0 : index
    %751 = vector.load %arg18[%c0_338, %c0_339] : memref<4x32xf32, #tpu.memory_space<vmem>>, vector<4x32xf32>
    %752 = arith.mulf %742, %751 : vector<4x32xf32>
    %753 = arith.mulf %736, %744 : vector<4x32xf32>
    %754 = arith.addf %752, %753 : vector<4x32xf32>
    %755 = math.tanh %754 : vector<4x32xf32>
    %756 = arith.mulf %750, %755 : vector<4x32xf32>
    %c0_340 = arith.constant 0 : index
    %c0_341 = arith.constant 0 : index
    %757 = vector.load %arg17[%c0_340, %c0_341] : memref<4x32xf32, #tpu.memory_space<vmem>>, vector<4x32xf32>
    tpu.vector_store %arg17[%c0_340, %c0_341], %756 {strides = array<i32>} : memref<4x32xf32, #tpu.memory_space<vmem>>, vector<4x32xf32>,
    %c0_342 = arith.constant 0 : index
    %c0_343 = arith.constant 0 : index
    %758 = vector.load %arg18[%c0_342, %c0_343] : memref<4x32xf32, #tpu.memory_space<vmem>>, vector<4x32xf32>
    tpu.vector_store %arg18[%c0_342, %c0_343], %754 {strides = array<i32>} : memref<4x32xf32, #tpu.memory_space<vmem>>, vector<4x32xf32>,
    %759 = vector.extract_strided_slice %756 {offsets = [0, 0], sizes = [2, 32], strides = [1, 1]} : vector<4x32xf32> to vector<2x32xf32>
    %760 = arith.index_cast %716 : i32 to index
    %c0_344 = arith.constant 0 : index
    %761 = vector.load %arg15[%760, %c0_344] : memref<16x32xf32, #tpu.memory_space<vmem>>, vector<2x32xf32>
    tpu.vector_store %arg15[%760, %c0_344], %759 {strides = array<i32>} : memref<16x32xf32, #tpu.memory_space<vmem>>, vector<2x32xf32>,
    %762 = vector.extract_strided_slice %756 {offsets = [2, 0], sizes = [2, 32], strides = [1, 1]} : vector<4x32xf32> to vector<2x32xf32>
    %763 = arith.index_cast %718 : i32 to index
    %c0_345 = arith.constant 0 : index
    %764 = vector.load %arg16[%763, %c0_345] : memref<16x32xf32, #tpu.memory_space<vmem>>, vector<2x32xf32>
    tpu.vector_store %arg16[%763, %c0_345], %762 {strides = array<i32>} : memref<16x32xf32, #tpu.memory_space<vmem>>, vector<2x32xf32>,
    %c7_i32_346 = arith.constant 7 : i32
    %c2_i32_347 = arith.constant 2 : i32
    %765 = arith.muli %c7_i32_346, %c2_i32_347 : i32
    %c7_i32_348 = arith.constant 7 : i32
    %766 = arith.subi %c7_i32_348, %c7_i32_346 : i32
    %c2_i32_349 = arith.constant 2 : i32
    %767 = arith.muli %766, %c2_i32_349 : i32
    %768 = arith.index_cast %765 : i32 to index
    %c0_350 = arith.constant 0 : index
    %769 = vector.load %arg14[%768, %c0_350] : memref<16x256xf32, #tpu.memory_space<vmem>>, vector<2x128xf32>
    %770 = arith.index_cast %767 : i32 to index
    %c128_351 = arith.constant 128 : index
    %771 = vector.load %arg14[%770, %c128_351] : memref<16x256xf32, #tpu.memory_space<vmem>>, vector<2x128xf32>
    %c0_352 = arith.constant 0 : index
    %c0_353 = arith.constant 0 : index
    %772 = vector.load %arg17[%c0_352, %c0_353] : memref<4x32xf32, #tpu.memory_space<vmem>>, vector<4x32xf32>
    %773 = vector.extract_strided_slice %772 {offsets = [0, 0], sizes = [2, 32], strides = [1, 1]} : vector<4x32xf32> to vector<2x32xf32>
    %cst_354 = arith.constant dense<0.000000e+00> : vector<2x128xf32>
    %774 = tpu.matmul %773, %420, %cst_354 {dimension_numbers = #tpu.dot_dimension_numbers<[1], [0], [0], [1], [0, 0, 1, 1], [], []>} : vector<2x32xf32>, vector<32x128xf32>, vector<2x128xf32> -> vector<2x128xf32>
    %775 = arith.addf %769, %774 : vector<2x128xf32>
    %776 = vector.extract_strided_slice %772 {offsets = [2, 0], sizes = [2, 32], strides = [1, 1]} : vector<4x32xf32> to vector<2x32xf32>
    %cst_355 = arith.constant dense<0.000000e+00> : vector<2x128xf32>
    %777 = tpu.matmul %776, %421, %cst_355 {dimension_numbers = #tpu.dot_dimension_numbers<[1], [0], [0], [1], [0, 0, 1, 1], [], []>} : vector<2x32xf32>, vector<32x128xf32>, vector<2x128xf32> -> vector<2x128xf32>
    %778 = arith.addf %771, %777 : vector<2x128xf32>
    %779 = tpu.concatenate %775, %778 in 0 : vector<2x128xf32>, vector<2x128xf32> -> vector<4x128xf32>
    %780 = vector.extract_strided_slice %779 {offsets = [0, 0], sizes = [4, 32], strides = [1, 1]} : vector<4x128xf32> to vector<4x32xf32>
    %781 = arith.negf %780 : vector<4x32xf32>
    %782 = math.exp %781 : vector<4x32xf32>
    %cst_356 = arith.constant 1.000000e+00 : f32
    %783 = vector.broadcast %cst_356 : f32 to vector<4x32xf32>
    %784 = arith.addf %783, %782 : vector<4x32xf32>
    %785 = arith.divf %783, %784 : vector<4x32xf32>
    %786 = vector.extract_strided_slice %779 {offsets = [0, 32], sizes = [4, 32], strides = [1, 1]} : vector<4x128xf32> to vector<4x32xf32>
    %787 = arith.negf %786 : vector<4x32xf32>
    %788 = math.exp %787 : vector<4x32xf32>
    %cst_357 = arith.constant 1.000000e+00 : f32
    %789 = vector.broadcast %cst_357 : f32 to vector<4x32xf32>
    %790 = arith.addf %789, %788 : vector<4x32xf32>
    %791 = arith.divf %789, %790 : vector<4x32xf32>
    %792 = vector.extract_strided_slice %779 {offsets = [0, 64], sizes = [4, 32], strides = [1, 1]} : vector<4x128xf32> to vector<4x32xf32>
    %793 = math.tanh %792 : vector<4x32xf32>
    %794 = vector.extract_strided_slice %779 {offsets = [0, 96], sizes = [4, 32], strides = [1, 1]} : vector<4x128xf32> to vector<4x32xf32>
    %795 = arith.negf %794 : vector<4x32xf32>
    %796 = math.exp %795 : vector<4x32xf32>
    %cst_358 = arith.constant 1.000000e+00 : f32
    %797 = vector.broadcast %cst_358 : f32 to vector<4x32xf32>
    %798 = arith.addf %797, %796 : vector<4x32xf32>
    %799 = arith.divf %797, %798 : vector<4x32xf32>
    %c0_359 = arith.constant 0 : index
    %c0_360 = arith.constant 0 : index
    %800 = vector.load %arg18[%c0_359, %c0_360] : memref<4x32xf32, #tpu.memory_space<vmem>>, vector<4x32xf32>
    %801 = arith.mulf %791, %800 : vector<4x32xf32>
    %802 = arith.mulf %785, %793 : vector<4x32xf32>
    %803 = arith.addf %801, %802 : vector<4x32xf32>
    %804 = math.tanh %803 : vector<4x32xf32>
    %805 = arith.mulf %799, %804 : vector<4x32xf32>
    %c0_361 = arith.constant 0 : index
    %c0_362 = arith.constant 0 : index
    %806 = vector.load %arg17[%c0_361, %c0_362] : memref<4x32xf32, #tpu.memory_space<vmem>>, vector<4x32xf32>
    tpu.vector_store %arg17[%c0_361, %c0_362], %805 {strides = array<i32>} : memref<4x32xf32, #tpu.memory_space<vmem>>, vector<4x32xf32>,
    %c0_363 = arith.constant 0 : index
    %c0_364 = arith.constant 0 : index
    %807 = vector.load %arg18[%c0_363, %c0_364] : memref<4x32xf32, #tpu.memory_space<vmem>>, vector<4x32xf32>
    tpu.vector_store %arg18[%c0_363, %c0_364], %803 {strides = array<i32>} : memref<4x32xf32, #tpu.memory_space<vmem>>, vector<4x32xf32>,
    %808 = vector.extract_strided_slice %805 {offsets = [0, 0], sizes = [2, 32], strides = [1, 1]} : vector<4x32xf32> to vector<2x32xf32>
    %809 = arith.index_cast %765 : i32 to index
    %c0_365 = arith.constant 0 : index
    %810 = vector.load %arg15[%809, %c0_365] : memref<16x32xf32, #tpu.memory_space<vmem>>, vector<2x32xf32>
    tpu.vector_store %arg15[%809, %c0_365], %808 {strides = array<i32>} : memref<16x32xf32, #tpu.memory_space<vmem>>, vector<2x32xf32>,
    %811 = vector.extract_strided_slice %805 {offsets = [2, 0], sizes = [2, 32], strides = [1, 1]} : vector<4x32xf32> to vector<2x32xf32>
    %812 = arith.index_cast %767 : i32 to index
    %c0_366 = arith.constant 0 : index
    %813 = vector.load %arg16[%812, %c0_366] : memref<16x32xf32, #tpu.memory_space<vmem>>, vector<2x32xf32>
    tpu.vector_store %arg16[%812, %c0_366], %811 {strides = array<i32>} : memref<16x32xf32, #tpu.memory_space<vmem>>, vector<2x32xf32>,
    %c8_i32_367 = arith.constant 8 : i32
    %c0_368 = arith.constant 0 : index
    %c0_369 = arith.constant 0 : index
    %814 = vector.load %arg10[%c0_368, %c0_369] : memref<64x128xf32, #tpu.memory_space<vmem>>, vector<32x128xf32>
    %c32_370 = arith.constant 32 : index
    %c0_371 = arith.constant 0 : index
    %815 = vector.load %arg10[%c32_370, %c0_371] : memref<64x128xf32, #tpu.memory_space<vmem>>, vector<32x128xf32>
    %c0_372 = arith.constant 0 : index
    %c0_373 = arith.constant 0 : index
    %816 = vector.load %arg11[%c0_372, %c0_373] : memref<1x128xf32, #tpu.memory_space<vmem>>, vector<1x128xf32>
    %c0_374 = arith.constant 0 : index
    %c0_375 = arith.constant 0 : index
    %817 = vector.load %arg12[%c0_374, %c0_375] : memref<1x128xf32, #tpu.memory_space<vmem>>, vector<1x128xf32>
    %cst_376 = arith.constant 0.000000e+00 : f32
    %818 = vector.broadcast %cst_376 : f32 to vector<2x1xf32>
    %c0_i32_377 = arith.constant 0 : i32
    %c2_i32_378 = arith.constant 2 : i32
    %819 = arith.muli %c0_i32_377, %c2_i32_378 : i32
    %820 = arith.index_cast %819 : i32 to index
    %c0_379 = arith.constant 0 : index
    %821 = vector.load %arg15[%820, %c0_379] : memref<16x32xf32, #tpu.memory_space<vmem>>, vector<2x32xf32>
    %822 = arith.index_cast %819 : i32 to index
    %c0_380 = arith.constant 0 : index
    %823 = vector.load %arg16[%822, %c0_380] : memref<16x32xf32, #tpu.memory_space<vmem>>, vector<2x32xf32>
    %cst_381 = arith.constant dense<0.000000e+00> : vector<2x128xf32>
    %824 = tpu.matmul %821, %814, %cst_381 {dimension_numbers = #tpu.dot_dimension_numbers<[1], [0], [0], [1], [0, 0, 1, 1], [], []>} : vector<2x32xf32>, vector<32x128xf32>, vector<2x128xf32> -> vector<2x128xf32>
    %cst_382 = arith.constant dense<0.000000e+00> : vector<2x128xf32>
    %825 = tpu.matmul %823, %815, %cst_382 {dimension_numbers = #tpu.dot_dimension_numbers<[1], [0], [0], [1], [0, 0, 1, 1], [], []>} : vector<2x32xf32>, vector<32x128xf32>, vector<2x128xf32> -> vector<2x128xf32>
    %826 = arith.addf %824, %825 : vector<2x128xf32>
    %827 = vector.broadcast %817 : vector<1x128xf32> to vector<2x128xf32>
    %828 = arith.addf %826, %827 : vector<2x128xf32>
    %829 = vector.broadcast %818 : vector<2x1xf32> to vector<2x128xf32>
    %830 = vector.broadcast %816 : vector<1x128xf32> to vector<2x128xf32>
    %831 = arith.mulf %829, %830 : vector<2x128xf32>
    %832 = arith.addf %828, %831 : vector<2x128xf32>
    %cst_383 = arith.constant dense<0xFF800000> : vector<2xf32>
    %833 = vector.multi_reduction <maximumf>, %832, %cst_383 [1] : vector<2x128xf32> to vector<2xf32>
    %834 = vector.shape_cast %833 : vector<2xf32> to vector<2x1xf32>
    %835 = vector.broadcast %834 : vector<2x1xf32> to vector<2x128xf32>
    %836 = arith.subf %832, %835 : vector<2x128xf32>
    %837 = math.exp %836 : vector<2x128xf32>
    %cst_384 = arith.constant dense<0.000000e+00> : vector<2xf32>
    %838 = vector.multi_reduction <add>, %837, %cst_384 [1] : vector<2x128xf32> to vector<2xf32>
    %839 = vector.shape_cast %838 : vector<2xf32> to vector<2x1xf32>
    %840 = math.log %839 : vector<2x1xf32>
    %841 = vector.broadcast %840 : vector<2x1xf32> to vector<2x128xf32>
    %842 = arith.subf %836, %841 : vector<2x128xf32>
    %843 = arith.index_cast %819 : i32 to index
    %c0_385 = arith.constant 0 : index
    %844 = vector.load %arg13[%843, %c0_385] : memref<16x128xf32, #tpu.memory_space<vmem>>, vector<2x128xf32>
    tpu.vector_store %arg13[%843, %c0_385], %842 {strides = array<i32>} : memref<16x128xf32, #tpu.memory_space<vmem>>, vector<2x128xf32>,
    %845 = tpu.iota {dimensions = array<i32: 1>} : vector<2x128xi32>
    %846 = arith.sitofp %845 : vector<2x128xi32> to vector<2x128xf32>
    %847 = vector.broadcast %834 : vector<2x1xf32> to vector<2x128xf32>
    %848 = arith.cmpf oeq, %832, %847 : vector<2x128xf32>
    %cst_386 = arith.constant 1.280000e+02 : f32
    %849 = vector.broadcast %cst_386 : f32 to vector<2x128xf32>
    %850 = arith.select %848, %846, %849 : vector<2x128xi1>, vector<2x128xf32>
    %cst_387 = arith.constant dense<0x7F800000> : vector<2xf32>
    %851 = vector.multi_reduction <minimumf>, %850, %cst_387 [1] : vector<2x128xf32> to vector<2xf32>
    %852 = vector.shape_cast %851 : vector<2xf32> to vector<2x1xf32>
    %c1_i32_388 = arith.constant 1 : i32
    %c2_i32_389 = arith.constant 2 : i32
    %853 = arith.muli %c1_i32_388, %c2_i32_389 : i32
    %854 = arith.index_cast %853 : i32 to index
    %c0_390 = arith.constant 0 : index
    %855 = vector.load %arg15[%854, %c0_390] : memref<16x32xf32, #tpu.memory_space<vmem>>, vector<2x32xf32>
    %856 = arith.index_cast %853 : i32 to index
    %c0_391 = arith.constant 0 : index
    %857 = vector.load %arg16[%856, %c0_391] : memref<16x32xf32, #tpu.memory_space<vmem>>, vector<2x32xf32>
    %cst_392 = arith.constant dense<0.000000e+00> : vector<2x128xf32>
    %858 = tpu.matmul %855, %814, %cst_392 {dimension_numbers = #tpu.dot_dimension_numbers<[1], [0], [0], [1], [0, 0, 1, 1], [], []>} : vector<2x32xf32>, vector<32x128xf32>, vector<2x128xf32> -> vector<2x128xf32>
    %cst_393 = arith.constant dense<0.000000e+00> : vector<2x128xf32>
    %859 = tpu.matmul %857, %815, %cst_393 {dimension_numbers = #tpu.dot_dimension_numbers<[1], [0], [0], [1], [0, 0, 1, 1], [], []>} : vector<2x32xf32>, vector<32x128xf32>, vector<2x128xf32> -> vector<2x128xf32>
    %860 = arith.addf %858, %859 : vector<2x128xf32>
    %861 = vector.broadcast %817 : vector<1x128xf32> to vector<2x128xf32>
    %862 = arith.addf %860, %861 : vector<2x128xf32>
    %863 = vector.broadcast %852 : vector<2x1xf32> to vector<2x128xf32>
    %864 = vector.broadcast %816 : vector<1x128xf32> to vector<2x128xf32>
    %865 = arith.mulf %863, %864 : vector<2x128xf32>
    %866 = arith.addf %862, %865 : vector<2x128xf32>
    %cst_394 = arith.constant dense<0xFF800000> : vector<2xf32>
    %867 = vector.multi_reduction <maximumf>, %866, %cst_394 [1] : vector<2x128xf32> to vector<2xf32>
    %868 = vector.shape_cast %867 : vector<2xf32> to vector<2x1xf32>
    %869 = vector.broadcast %868 : vector<2x1xf32> to vector<2x128xf32>
    %870 = arith.subf %866, %869 : vector<2x128xf32>
    %871 = math.exp %870 : vector<2x128xf32>
    %cst_395 = arith.constant dense<0.000000e+00> : vector<2xf32>
    %872 = vector.multi_reduction <add>, %871, %cst_395 [1] : vector<2x128xf32> to vector<2xf32>
    %873 = vector.shape_cast %872 : vector<2xf32> to vector<2x1xf32>
    %874 = math.log %873 : vector<2x1xf32>
    %875 = vector.broadcast %874 : vector<2x1xf32> to vector<2x128xf32>
    %876 = arith.subf %870, %875 : vector<2x128xf32>
    %877 = arith.index_cast %853 : i32 to index
    %c0_396 = arith.constant 0 : index
    %878 = vector.load %arg13[%877, %c0_396] : memref<16x128xf32, #tpu.memory_space<vmem>>, vector<2x128xf32>
    tpu.vector_store %arg13[%877, %c0_396], %876 {strides = array<i32>} : memref<16x128xf32, #tpu.memory_space<vmem>>, vector<2x128xf32>,
    %879 = tpu.iota {dimensions = array<i32: 1>} : vector<2x128xi32>
    %880 = arith.sitofp %879 : vector<2x128xi32> to vector<2x128xf32>
    %881 = vector.broadcast %868 : vector<2x1xf32> to vector<2x128xf32>
    %882 = arith.cmpf oeq, %866, %881 : vector<2x128xf32>
    %cst_397 = arith.constant 1.280000e+02 : f32
    %883 = vector.broadcast %cst_397 : f32 to vector<2x128xf32>
    %884 = arith.select %882, %880, %883 : vector<2x128xi1>, vector<2x128xf32>
    %cst_398 = arith.constant dense<0x7F800000> : vector<2xf32>
    %885 = vector.multi_reduction <minimumf>, %884, %cst_398 [1] : vector<2x128xf32> to vector<2xf32>
    %886 = vector.shape_cast %885 : vector<2xf32> to vector<2x1xf32>
    %c2_i32_399 = arith.constant 2 : i32
    %c2_i32_400 = arith.constant 2 : i32
    %887 = arith.muli %c2_i32_399, %c2_i32_400 : i32
    %888 = arith.index_cast %887 : i32 to index
    %c0_401 = arith.constant 0 : index
    %889 = vector.load %arg15[%888, %c0_401] : memref<16x32xf32, #tpu.memory_space<vmem>>, vector<2x32xf32>
    %890 = arith.index_cast %887 : i32 to index
    %c0_402 = arith.constant 0 : index
    %891 = vector.load %arg16[%890, %c0_402] : memref<16x32xf32, #tpu.memory_space<vmem>>, vector<2x32xf32>
    %cst_403 = arith.constant dense<0.000000e+00> : vector<2x128xf32>
    %892 = tpu.matmul %889, %814, %cst_403 {dimension_numbers = #tpu.dot_dimension_numbers<[1], [0], [0], [1], [0, 0, 1, 1], [], []>} : vector<2x32xf32>, vector<32x128xf32>, vector<2x128xf32> -> vector<2x128xf32>
    %cst_404 = arith.constant dense<0.000000e+00> : vector<2x128xf32>
    %893 = tpu.matmul %891, %815, %cst_404 {dimension_numbers = #tpu.dot_dimension_numbers<[1], [0], [0], [1], [0, 0, 1, 1], [], []>} : vector<2x32xf32>, vector<32x128xf32>, vector<2x128xf32> -> vector<2x128xf32>
    %894 = arith.addf %892, %893 : vector<2x128xf32>
    %895 = vector.broadcast %817 : vector<1x128xf32> to vector<2x128xf32>
    %896 = arith.addf %894, %895 : vector<2x128xf32>
    %897 = vector.broadcast %886 : vector<2x1xf32> to vector<2x128xf32>
    %898 = vector.broadcast %816 : vector<1x128xf32> to vector<2x128xf32>
    %899 = arith.mulf %897, %898 : vector<2x128xf32>
    %900 = arith.addf %896, %899 : vector<2x128xf32>
    %cst_405 = arith.constant dense<0xFF800000> : vector<2xf32>
    %901 = vector.multi_reduction <maximumf>, %900, %cst_405 [1] : vector<2x128xf32> to vector<2xf32>
    %902 = vector.shape_cast %901 : vector<2xf32> to vector<2x1xf32>
    %903 = vector.broadcast %902 : vector<2x1xf32> to vector<2x128xf32>
    %904 = arith.subf %900, %903 : vector<2x128xf32>
    %905 = math.exp %904 : vector<2x128xf32>
    %cst_406 = arith.constant dense<0.000000e+00> : vector<2xf32>
    %906 = vector.multi_reduction <add>, %905, %cst_406 [1] : vector<2x128xf32> to vector<2xf32>
    %907 = vector.shape_cast %906 : vector<2xf32> to vector<2x1xf32>
    %908 = math.log %907 : vector<2x1xf32>
    %909 = vector.broadcast %908 : vector<2x1xf32> to vector<2x128xf32>
    %910 = arith.subf %904, %909 : vector<2x128xf32>
    %911 = arith.index_cast %887 : i32 to index
    %c0_407 = arith.constant 0 : index
    %912 = vector.load %arg13[%911, %c0_407] : memref<16x128xf32, #tpu.memory_space<vmem>>, vector<2x128xf32>
    tpu.vector_store %arg13[%911, %c0_407], %910 {strides = array<i32>} : memref<16x128xf32, #tpu.memory_space<vmem>>, vector<2x128xf32>,
    %913 = tpu.iota {dimensions = array<i32: 1>} : vector<2x128xi32>
    %914 = arith.sitofp %913 : vector<2x128xi32> to vector<2x128xf32>
    %915 = vector.broadcast %902 : vector<2x1xf32> to vector<2x128xf32>
    %916 = arith.cmpf oeq, %900, %915 : vector<2x128xf32>
    %cst_408 = arith.constant 1.280000e+02 : f32
    %917 = vector.broadcast %cst_408 : f32 to vector<2x128xf32>
    %918 = arith.select %916, %914, %917 : vector<2x128xi1>, vector<2x128xf32>
    %cst_409 = arith.constant dense<0x7F800000> : vector<2xf32>
    %919 = vector.multi_reduction <minimumf>, %918, %cst_409 [1] : vector<2x128xf32> to vector<2xf32>
    %920 = vector.shape_cast %919 : vector<2xf32> to vector<2x1xf32>
    %c3_i32_410 = arith.constant 3 : i32
    %c2_i32_411 = arith.constant 2 : i32
    %921 = arith.muli %c3_i32_410, %c2_i32_411 : i32
    %922 = arith.index_cast %921 : i32 to index
    %c0_412 = arith.constant 0 : index
    %923 = vector.load %arg15[%922, %c0_412] : memref<16x32xf32, #tpu.memory_space<vmem>>, vector<2x32xf32>
    %924 = arith.index_cast %921 : i32 to index
    %c0_413 = arith.constant 0 : index
    %925 = vector.load %arg16[%924, %c0_413] : memref<16x32xf32, #tpu.memory_space<vmem>>, vector<2x32xf32>
    %cst_414 = arith.constant dense<0.000000e+00> : vector<2x128xf32>
    %926 = tpu.matmul %923, %814, %cst_414 {dimension_numbers = #tpu.dot_dimension_numbers<[1], [0], [0], [1], [0, 0, 1, 1], [], []>} : vector<2x32xf32>, vector<32x128xf32>, vector<2x128xf32> -> vector<2x128xf32>
    %cst_415 = arith.constant dense<0.000000e+00> : vector<2x128xf32>
    %927 = tpu.matmul %925, %815, %cst_415 {dimension_numbers = #tpu.dot_dimension_numbers<[1], [0], [0], [1], [0, 0, 1, 1], [], []>} : vector<2x32xf32>, vector<32x128xf32>, vector<2x128xf32> -> vector<2x128xf32>
    %928 = arith.addf %926, %927 : vector<2x128xf32>
    %929 = vector.broadcast %817 : vector<1x128xf32> to vector<2x128xf32>
    %930 = arith.addf %928, %929 : vector<2x128xf32>
    %931 = vector.broadcast %920 : vector<2x1xf32> to vector<2x128xf32>
    %932 = vector.broadcast %816 : vector<1x128xf32> to vector<2x128xf32>
    %933 = arith.mulf %931, %932 : vector<2x128xf32>
    %934 = arith.addf %930, %933 : vector<2x128xf32>
    %cst_416 = arith.constant dense<0xFF800000> : vector<2xf32>
    %935 = vector.multi_reduction <maximumf>, %934, %cst_416 [1] : vector<2x128xf32> to vector<2xf32>
    %936 = vector.shape_cast %935 : vector<2xf32> to vector<2x1xf32>
    %937 = vector.broadcast %936 : vector<2x1xf32> to vector<2x128xf32>
    %938 = arith.subf %934, %937 : vector<2x128xf32>
    %939 = math.exp %938 : vector<2x128xf32>
    %cst_417 = arith.constant dense<0.000000e+00> : vector<2xf32>
    %940 = vector.multi_reduction <add>, %939, %cst_417 [1] : vector<2x128xf32> to vector<2xf32>
    %941 = vector.shape_cast %940 : vector<2xf32> to vector<2x1xf32>
    %942 = math.log %941 : vector<2x1xf32>
    %943 = vector.broadcast %942 : vector<2x1xf32> to vector<2x128xf32>
    %944 = arith.subf %938, %943 : vector<2x128xf32>
    %945 = arith.index_cast %921 : i32 to index
    %c0_418 = arith.constant 0 : index
    %946 = vector.load %arg13[%945, %c0_418] : memref<16x128xf32, #tpu.memory_space<vmem>>, vector<2x128xf32>
    tpu.vector_store %arg13[%945, %c0_418], %944 {strides = array<i32>} : memref<16x128xf32, #tpu.memory_space<vmem>>, vector<2x128xf32>,
    %947 = tpu.iota {dimensions = array<i32: 1>} : vector<2x128xi32>
    %948 = arith.sitofp %947 : vector<2x128xi32> to vector<2x128xf32>
    %949 = vector.broadcast %936 : vector<2x1xf32> to vector<2x128xf32>
    %950 = arith.cmpf oeq, %934, %949 : vector<2x128xf32>
    %cst_419 = arith.constant 1.280000e+02 : f32
    %951 = vector.broadcast %cst_419 : f32 to vector<2x128xf32>
    %952 = arith.select %950, %948, %951 : vector<2x128xi1>, vector<2x128xf32>
    %cst_420 = arith.constant dense<0x7F800000> : vector<2xf32>
    %953 = vector.multi_reduction <minimumf>, %952, %cst_420 [1] : vector<2x128xf32> to vector<2xf32>
    %954 = vector.shape_cast %953 : vector<2xf32> to vector<2x1xf32>
    %c4_i32_421 = arith.constant 4 : i32
    %c2_i32_422 = arith.constant 2 : i32
    %955 = arith.muli %c4_i32_421, %c2_i32_422 : i32
    %956 = arith.index_cast %955 : i32 to index
    %c0_423 = arith.constant 0 : index
    %957 = vector.load %arg15[%956, %c0_423] : memref<16x32xf32, #tpu.memory_space<vmem>>, vector<2x32xf32>
    %958 = arith.index_cast %955 : i32 to index
    %c0_424 = arith.constant 0 : index
    %959 = vector.load %arg16[%958, %c0_424] : memref<16x32xf32, #tpu.memory_space<vmem>>, vector<2x32xf32>
    %cst_425 = arith.constant dense<0.000000e+00> : vector<2x128xf32>
    %960 = tpu.matmul %957, %814, %cst_425 {dimension_numbers = #tpu.dot_dimension_numbers<[1], [0], [0], [1], [0, 0, 1, 1], [], []>} : vector<2x32xf32>, vector<32x128xf32>, vector<2x128xf32> -> vector<2x128xf32>
    %cst_426 = arith.constant dense<0.000000e+00> : vector<2x128xf32>
    %961 = tpu.matmul %959, %815, %cst_426 {dimension_numbers = #tpu.dot_dimension_numbers<[1], [0], [0], [1], [0, 0, 1, 1], [], []>} : vector<2x32xf32>, vector<32x128xf32>, vector<2x128xf32> -> vector<2x128xf32>
    %962 = arith.addf %960, %961 : vector<2x128xf32>
    %963 = vector.broadcast %817 : vector<1x128xf32> to vector<2x128xf32>
    %964 = arith.addf %962, %963 : vector<2x128xf32>
    %965 = vector.broadcast %954 : vector<2x1xf32> to vector<2x128xf32>
    %966 = vector.broadcast %816 : vector<1x128xf32> to vector<2x128xf32>
    %967 = arith.mulf %965, %966 : vector<2x128xf32>
    %968 = arith.addf %964, %967 : vector<2x128xf32>
    %cst_427 = arith.constant dense<0xFF800000> : vector<2xf32>
    %969 = vector.multi_reduction <maximumf>, %968, %cst_427 [1] : vector<2x128xf32> to vector<2xf32>
    %970 = vector.shape_cast %969 : vector<2xf32> to vector<2x1xf32>
    %971 = vector.broadcast %970 : vector<2x1xf32> to vector<2x128xf32>
    %972 = arith.subf %968, %971 : vector<2x128xf32>
    %973 = math.exp %972 : vector<2x128xf32>
    %cst_428 = arith.constant dense<0.000000e+00> : vector<2xf32>
    %974 = vector.multi_reduction <add>, %973, %cst_428 [1] : vector<2x128xf32> to vector<2xf32>
    %975 = vector.shape_cast %974 : vector<2xf32> to vector<2x1xf32>
    %976 = math.log %975 : vector<2x1xf32>
    %977 = vector.broadcast %976 : vector<2x1xf32> to vector<2x128xf32>
    %978 = arith.subf %972, %977 : vector<2x128xf32>
    %979 = arith.index_cast %955 : i32 to index
    %c0_429 = arith.constant 0 : index
    %980 = vector.load %arg13[%979, %c0_429] : memref<16x128xf32, #tpu.memory_space<vmem>>, vector<2x128xf32>
    tpu.vector_store %arg13[%979, %c0_429], %978 {strides = array<i32>} : memref<16x128xf32, #tpu.memory_space<vmem>>, vector<2x128xf32>,
    %981 = tpu.iota {dimensions = array<i32: 1>} : vector<2x128xi32>
    %982 = arith.sitofp %981 : vector<2x128xi32> to vector<2x128xf32>
    %983 = vector.broadcast %970 : vector<2x1xf32> to vector<2x128xf32>
    %984 = arith.cmpf oeq, %968, %983 : vector<2x128xf32>
    %cst_430 = arith.constant 1.280000e+02 : f32
    %985 = vector.broadcast %cst_430 : f32 to vector<2x128xf32>
    %986 = arith.select %984, %982, %985 : vector<2x128xi1>, vector<2x128xf32>
    %cst_431 = arith.constant dense<0x7F800000> : vector<2xf32>
    %987 = vector.multi_reduction <minimumf>, %986, %cst_431 [1] : vector<2x128xf32> to vector<2xf32>
    %988 = vector.shape_cast %987 : vector<2xf32> to vector<2x1xf32>
    %c5_i32_432 = arith.constant 5 : i32
    %c2_i32_433 = arith.constant 2 : i32
    %989 = arith.muli %c5_i32_432, %c2_i32_433 : i32
    %990 = arith.index_cast %989 : i32 to index
    %c0_434 = arith.constant 0 : index
    %991 = vector.load %arg15[%990, %c0_434] : memref<16x32xf32, #tpu.memory_space<vmem>>, vector<2x32xf32>
    %992 = arith.index_cast %989 : i32 to index
    %c0_435 = arith.constant 0 : index
    %993 = vector.load %arg16[%992, %c0_435] : memref<16x32xf32, #tpu.memory_space<vmem>>, vector<2x32xf32>
    %cst_436 = arith.constant dense<0.000000e+00> : vector<2x128xf32>
    %994 = tpu.matmul %991, %814, %cst_436 {dimension_numbers = #tpu.dot_dimension_numbers<[1], [0], [0], [1], [0, 0, 1, 1], [], []>} : vector<2x32xf32>, vector<32x128xf32>, vector<2x128xf32> -> vector<2x128xf32>
    %cst_437 = arith.constant dense<0.000000e+00> : vector<2x128xf32>
    %995 = tpu.matmul %993, %815, %cst_437 {dimension_numbers = #tpu.dot_dimension_numbers<[1], [0], [0], [1], [0, 0, 1, 1], [], []>} : vector<2x32xf32>, vector<32x128xf32>, vector<2x128xf32> -> vector<2x128xf32>
    %996 = arith.addf %994, %995 : vector<2x128xf32>
    %997 = vector.broadcast %817 : vector<1x128xf32> to vector<2x128xf32>
    %998 = arith.addf %996, %997 : vector<2x128xf32>
    %999 = vector.broadcast %988 : vector<2x1xf32> to vector<2x128xf32>
    %1000 = vector.broadcast %816 : vector<1x128xf32> to vector<2x128xf32>
    %1001 = arith.mulf %999, %1000 : vector<2x128xf32>
    %1002 = arith.addf %998, %1001 : vector<2x128xf32>
    %cst_438 = arith.constant dense<0xFF800000> : vector<2xf32>
    %1003 = vector.multi_reduction <maximumf>, %1002, %cst_438 [1] : vector<2x128xf32> to vector<2xf32>
    %1004 = vector.shape_cast %1003 : vector<2xf32> to vector<2x1xf32>
    %1005 = vector.broadcast %1004 : vector<2x1xf32> to vector<2x128xf32>
    %1006 = arith.subf %1002, %1005 : vector<2x128xf32>
    %1007 = math.exp %1006 : vector<2x128xf32>
    %cst_439 = arith.constant dense<0.000000e+00> : vector<2xf32>
    %1008 = vector.multi_reduction <add>, %1007, %cst_439 [1] : vector<2x128xf32> to vector<2xf32>
    %1009 = vector.shape_cast %1008 : vector<2xf32> to vector<2x1xf32>
    %1010 = math.log %1009 : vector<2x1xf32>
    %1011 = vector.broadcast %1010 : vector<2x1xf32> to vector<2x128xf32>
    %1012 = arith.subf %1006, %1011 : vector<2x128xf32>
    %1013 = arith.index_cast %989 : i32 to index
    %c0_440 = arith.constant 0 : index
    %1014 = vector.load %arg13[%1013, %c0_440] : memref<16x128xf32, #tpu.memory_space<vmem>>, vector<2x128xf32>
    tpu.vector_store %arg13[%1013, %c0_440], %1012 {strides = array<i32>} : memref<16x128xf32, #tpu.memory_space<vmem>>, vector<2x128xf32>,
    %1015 = tpu.iota {dimensions = array<i32: 1>} : vector<2x128xi32>
    %1016 = arith.sitofp %1015 : vector<2x128xi32> to vector<2x128xf32>
    %1017 = vector.broadcast %1004 : vector<2x1xf32> to vector<2x128xf32>
    %1018 = arith.cmpf oeq, %1002, %1017 : vector<2x128xf32>
    %cst_441 = arith.constant 1.280000e+02 : f32
    %1019 = vector.broadcast %cst_441 : f32 to vector<2x128xf32>
    %1020 = arith.select %1018, %1016, %1019 : vector<2x128xi1>, vector<2x128xf32>
    %cst_442 = arith.constant dense<0x7F800000> : vector<2xf32>
    %1021 = vector.multi_reduction <minimumf>, %1020, %cst_442 [1] : vector<2x128xf32> to vector<2xf32>
    %1022 = vector.shape_cast %1021 : vector<2xf32> to vector<2x1xf32>
    %c6_i32_443 = arith.constant 6 : i32
    %c2_i32_444 = arith.constant 2 : i32
    %1023 = arith.muli %c6_i32_443, %c2_i32_444 : i32
    %1024 = arith.index_cast %1023 : i32 to index
    %c0_445 = arith.constant 0 : index
    %1025 = vector.load %arg15[%1024, %c0_445] : memref<16x32xf32, #tpu.memory_space<vmem>>, vector<2x32xf32>
    %1026 = arith.index_cast %1023 : i32 to index
    %c0_446 = arith.constant 0 : index
    %1027 = vector.load %arg16[%1026, %c0_446] : memref<16x32xf32, #tpu.memory_space<vmem>>, vector<2x32xf32>
    %cst_447 = arith.constant dense<0.000000e+00> : vector<2x128xf32>
    %1028 = tpu.matmul %1025, %814, %cst_447 {dimension_numbers = #tpu.dot_dimension_numbers<[1], [0], [0], [1], [0, 0, 1, 1], [], []>} : vector<2x32xf32>, vector<32x128xf32>, vector<2x128xf32> -> vector<2x128xf32>
    %cst_448 = arith.constant dense<0.000000e+00> : vector<2x128xf32>
    %1029 = tpu.matmul %1027, %815, %cst_448 {dimension_numbers = #tpu.dot_dimension_numbers<[1], [0], [0], [1], [0, 0, 1, 1], [], []>} : vector<2x32xf32>, vector<32x128xf32>, vector<2x128xf32> -> vector<2x128xf32>
    %1030 = arith.addf %1028, %1029 : vector<2x128xf32>
    %1031 = vector.broadcast %817 : vector<1x128xf32> to vector<2x128xf32>
    %1032 = arith.addf %1030, %1031 : vector<2x128xf32>
    %1033 = vector.broadcast %1022 : vector<2x1xf32> to vector<2x128xf32>
    %1034 = vector.broadcast %816 : vector<1x128xf32> to vector<2x128xf32>
    %1035 = arith.mulf %1033, %1034 : vector<2x128xf32>
    %1036 = arith.addf %1032, %1035 : vector<2x128xf32>
    %cst_449 = arith.constant dense<0xFF800000> : vector<2xf32>
    %1037 = vector.multi_reduction <maximumf>, %1036, %cst_449 [1] : vector<2x128xf32> to vector<2xf32>
    %1038 = vector.shape_cast %1037 : vector<2xf32> to vector<2x1xf32>
    %1039 = vector.broadcast %1038 : vector<2x1xf32> to vector<2x128xf32>
    %1040 = arith.subf %1036, %1039 : vector<2x128xf32>
    %1041 = math.exp %1040 : vector<2x128xf32>
    %cst_450 = arith.constant dense<0.000000e+00> : vector<2xf32>
    %1042 = vector.multi_reduction <add>, %1041, %cst_450 [1] : vector<2x128xf32> to vector<2xf32>
    %1043 = vector.shape_cast %1042 : vector<2xf32> to vector<2x1xf32>
    %1044 = math.log %1043 : vector<2x1xf32>
    %1045 = vector.broadcast %1044 : vector<2x1xf32> to vector<2x128xf32>
    %1046 = arith.subf %1040, %1045 : vector<2x128xf32>
    %1047 = arith.index_cast %1023 : i32 to index
    %c0_451 = arith.constant 0 : index
    %1048 = vector.load %arg13[%1047, %c0_451] : memref<16x128xf32, #tpu.memory_space<vmem>>, vector<2x128xf32>
    tpu.vector_store %arg13[%1047, %c0_451], %1046 {strides = array<i32>} : memref<16x128xf32, #tpu.memory_space<vmem>>, vector<2x128xf32>,
    %1049 = tpu.iota {dimensions = array<i32: 1>} : vector<2x128xi32>
    %1050 = arith.sitofp %1049 : vector<2x128xi32> to vector<2x128xf32>
    %1051 = vector.broadcast %1038 : vector<2x1xf32> to vector<2x128xf32>
    %1052 = arith.cmpf oeq, %1036, %1051 : vector<2x128xf32>
    %cst_452 = arith.constant 1.280000e+02 : f32
    %1053 = vector.broadcast %cst_452 : f32 to vector<2x128xf32>
    %1054 = arith.select %1052, %1050, %1053 : vector<2x128xi1>, vector<2x128xf32>
    %cst_453 = arith.constant dense<0x7F800000> : vector<2xf32>
    %1055 = vector.multi_reduction <minimumf>, %1054, %cst_453 [1] : vector<2x128xf32> to vector<2xf32>
    %1056 = vector.shape_cast %1055 : vector<2xf32> to vector<2x1xf32>
    %c7_i32_454 = arith.constant 7 : i32
    %c2_i32_455 = arith.constant 2 : i32
    %1057 = arith.muli %c7_i32_454, %c2_i32_455 : i32
    %1058 = arith.index_cast %1057 : i32 to index
    %c0_456 = arith.constant 0 : index
    %1059 = vector.load %arg15[%1058, %c0_456] : memref<16x32xf32, #tpu.memory_space<vmem>>, vector<2x32xf32>
    %1060 = arith.index_cast %1057 : i32 to index
    %c0_457 = arith.constant 0 : index
    %1061 = vector.load %arg16[%1060, %c0_457] : memref<16x32xf32, #tpu.memory_space<vmem>>, vector<2x32xf32>
    %cst_458 = arith.constant dense<0.000000e+00> : vector<2x128xf32>
    %1062 = tpu.matmul %1059, %814, %cst_458 {dimension_numbers = #tpu.dot_dimension_numbers<[1], [0], [0], [1], [0, 0, 1, 1], [], []>} : vector<2x32xf32>, vector<32x128xf32>, vector<2x128xf32> -> vector<2x128xf32>
    %cst_459 = arith.constant dense<0.000000e+00> : vector<2x128xf32>
    %1063 = tpu.matmul %1061, %815, %cst_459 {dimension_numbers = #tpu.dot_dimension_numbers<[1], [0], [0], [1], [0, 0, 1, 1], [], []>} : vector<2x32xf32>, vector<32x128xf32>, vector<2x128xf32> -> vector<2x128xf32>
    %1064 = arith.addf %1062, %1063 : vector<2x128xf32>
    %1065 = vector.broadcast %817 : vector<1x128xf32> to vector<2x128xf32>
    %1066 = arith.addf %1064, %1065 : vector<2x128xf32>
    %1067 = vector.broadcast %1056 : vector<2x1xf32> to vector<2x128xf32>
    %1068 = vector.broadcast %816 : vector<1x128xf32> to vector<2x128xf32>
    %1069 = arith.mulf %1067, %1068 : vector<2x128xf32>
    %1070 = arith.addf %1066, %1069 : vector<2x128xf32>
    %cst_460 = arith.constant dense<0xFF800000> : vector<2xf32>
    %1071 = vector.multi_reduction <maximumf>, %1070, %cst_460 [1] : vector<2x128xf32> to vector<2xf32>
    %1072 = vector.shape_cast %1071 : vector<2xf32> to vector<2x1xf32>
    %1073 = vector.broadcast %1072 : vector<2x1xf32> to vector<2x128xf32>
    %1074 = arith.subf %1070, %1073 : vector<2x128xf32>
    %1075 = math.exp %1074 : vector<2x128xf32>
    %cst_461 = arith.constant dense<0.000000e+00> : vector<2xf32>
    %1076 = vector.multi_reduction <add>, %1075, %cst_461 [1] : vector<2x128xf32> to vector<2xf32>
    %1077 = vector.shape_cast %1076 : vector<2xf32> to vector<2x1xf32>
    %1078 = math.log %1077 : vector<2x1xf32>
    %1079 = vector.broadcast %1078 : vector<2x1xf32> to vector<2x128xf32>
    %1080 = arith.subf %1074, %1079 : vector<2x128xf32>
    %1081 = arith.index_cast %1057 : i32 to index
    %c0_462 = arith.constant 0 : index
    %1082 = vector.load %arg13[%1081, %c0_462] : memref<16x128xf32, #tpu.memory_space<vmem>>, vector<2x128xf32>
    tpu.vector_store %arg13[%1081, %c0_462], %1080 {strides = array<i32>} : memref<16x128xf32, #tpu.memory_space<vmem>>, vector<2x128xf32>,
    %1083 = tpu.iota {dimensions = array<i32: 1>} : vector<2x128xi32>
    %1084 = arith.sitofp %1083 : vector<2x128xi32> to vector<2x128xf32>
    %1085 = vector.broadcast %1072 : vector<2x1xf32> to vector<2x128xf32>
    %1086 = arith.cmpf oeq, %1070, %1085 : vector<2x128xf32>
    %cst_463 = arith.constant 1.280000e+02 : f32
    %1087 = vector.broadcast %cst_463 : f32 to vector<2x128xf32>
    %1088 = arith.select %1086, %1084, %1087 : vector<2x128xi1>, vector<2x128xf32>
    %cst_464 = arith.constant dense<0x7F800000> : vector<2xf32>
    %1089 = vector.multi_reduction <minimumf>, %1088, %cst_464 [1] : vector<2x128xf32> to vector<2xf32>
    %1090 = vector.shape_cast %1089 : vector<2xf32> to vector<2x1xf32>
    %c8_i32_465 = arith.constant 8 : i32
    return
  }
  func.func @transform_0(%arg0: i32) -> (i32, i32) {
    %c0_i32 = arith.constant 0 : i32
    %c0_i32_0 = arith.constant 0 : i32
    %c0_i32_1 = arith.constant 0 : i32
    return %c0_i32, %c0_i32_0 : i32, i32
  }
  func.func @transform_1(%arg0: i32) -> (i32, i32) {
    %c0_i32 = arith.constant 0 : i32
    %c0_i32_0 = arith.constant 0 : i32
    %c0_i32_1 = arith.constant 0 : i32
    return %c0_i32, %c0_i32_0 : i32, i32
  }
  func.func @transform_2(%arg0: i32) -> (i32, i32) {
    %c0_i32 = arith.constant 0 : i32
    %c0_i32_0 = arith.constant 0 : i32
    %c0_i32_1 = arith.constant 0 : i32
    return %c0_i32, %c0_i32_0 : i32, i32
  }
  func.func @transform_3(%arg0: i32) -> (i32, i32) {
    %c0_i32 = arith.constant 0 : i32
    %c0_i32_0 = arith.constant 0 : i32
    %c0_i32_1 = arith.constant 0 : i32
    return %c0_i32, %c0_i32_0 : i32, i32
  }
  func.func @transform_4(%arg0: i32) -> (i32, i32) {
    %c0_i32 = arith.constant 0 : i32
    %c0_i32_0 = arith.constant 0 : i32
    %c0_i32_1 = arith.constant 0 : i32
    return %c0_i32, %c0_i32_0 : i32, i32
  }
  func.func @transform_5(%arg0: i32) -> (i32, i32) {
    %c0_i32 = arith.constant 0 : i32
    %c0_i32_0 = arith.constant 0 : i32
    %c0_i32_1 = arith.constant 0 : i32
    return %c0_i32, %c0_i32_0 : i32, i32
  }
  func.func @transform_6(%arg0: i32) -> (i32, i32) {
    %c0_i32 = arith.constant 0 : i32
    %c0_i32_0 = arith.constant 0 : i32
    %c0_i32_1 = arith.constant 0 : i32
    return %c0_i32, %c0_i32_0 : i32, i32
  }
  func.func @transform_7(%arg0: i32) -> (i32, i32) {
    %c0_i32 = arith.constant 0 : i32
    %c0_i32_0 = arith.constant 0 : i32
    %c0_i32_1 = arith.constant 0 : i32
    return %c0_i32, %c0_i32_0 : i32, i32
  }
  func.func @transform_8(%arg0: i32) -> (i32, i32) {
    %c0_i32 = arith.constant 0 : i32
    %c0_i32_0 = arith.constant 0 : i32
    %c0_i32_1 = arith.constant 0 : i32
    return %c0_i32, %c0_i32_0 : i32, i32
  }
  func.func @transform_9(%arg0: i32) -> (i32, i32) {
    %c0_i32 = arith.constant 0 : i32
    %c0_i32_0 = arith.constant 0 : i32
    %c0_i32_1 = arith.constant 0 : i32
    return %c0_i32, %c0_i32_0 : i32, i32
  }
  func.func @transform_10(%arg0: i32) -> (i32, i32) {
    %c0_i32 = arith.constant 0 : i32
    %c0_i32_0 = arith.constant 0 : i32
    %c0_i32_1 = arith.constant 0 : i32
    return %c0_i32, %c0_i32_0 : i32, i32
  }
  func.func @transform_11(%arg0: i32) -> (i32, i32) {
    %c0_i32 = arith.constant 0 : i32
    %c0_i32_0 = arith.constant 0 : i32
    %c0_i32_1 = arith.constant 0 : i32
    return %c0_i32, %c0_i32_0 : i32, i32
  }
  func.func @transform_12(%arg0: i32) -> (i32, i32) {
    %c0_i32 = arith.constant 0 : i32
    %c0_i32_0 = arith.constant 0 : i32
    %c0_i32_1 = arith.constant 0 : i32
    return %c0_i32, %c0_i32_0 : i32, i32
  }
}

</mosaic_0001>

<llo_original>
// kernel: lstm_ner_tf_forward.1
$region0: #{lstm_ner_tf_forward.1}
  #allocation0 [shape = 'u32[]', space=smem, size = 0x4, offset = 0x4, fixed_abs, tag = 'smem constant byte address 0x4 - core index']
  #allocation1 [shape = 'u32[72,128]{1,0:T(1,128)}', space=vmem, size = 0x9000, scoped, tag = 'internal scratch']
  #allocation2 [shape = 'f32[16,256]{1,0:T(8,128)}', space=vmem, size = 0x4000, scoped, tag = 'scratch operand']
  #allocation3 [shape = 'f32[16,32]{1,0:T(8,128)}', space=vmem, size = 0x2000, scoped, tag = 'scratch operand']
  #allocation4 [shape = 'f32[16,32]{1,0:T(8,128)}', space=vmem, size = 0x2000, scoped, tag = 'scratch operand']
  #allocation5 [shape = 'f32[4,32]{1,0:T(4,128)}', space=vmem, size = 0x800, scoped, tag = 'scratch operand']
  #allocation6 [shape = 'f32[4,32]{1,0:T(4,128)}', space=vmem, size = 0x800, scoped, tag = 'scratch operand']
  %s0 = inlined_call_operand.vmem [shape: f32[16,16], index: 0, kind: input, shape index: {}]
  %s1 = inlined_call_operand.vmem [shape: f32[16,256], index: 1, kind: input, shape index: {}]
  %s2 = inlined_call_operand.vmem [shape: f32[1,256], index: 2, kind: input, shape index: {}]
  %s3 = inlined_call_operand.vmem [shape: f32[32,128], index: 3, kind: input, shape index: {}]
  %s4 = inlined_call_operand.hbm [shape: f32[32,128], index: 4, kind: input, shape index: {}]
  %s5 = inlined_call_operand.vmem [shape: f32[64,256], index: 5, kind: input, shape index: {}]
  %s6 = inlined_call_operand.vmem [shape: f32[1,256], index: 6, kind: input, shape index: {}]
  %s7 = inlined_call_operand.hbm [shape: f32[32,128], index: 7, kind: input, shape index: {}]
  %s8 = inlined_call_operand.hbm [shape: f32[32,128], index: 8, kind: input, shape index: {}]
  %s9 = inlined_call_operand.vmem [shape: f32[64,128], index: 9, kind: input, shape index: {}]
  %s10 = inlined_call_operand.vmem [shape: f32[1,128], index: 10, kind: input, shape index: {}]
  %s11 = inlined_call_operand.vmem [shape: f32[1,128], index: 11, kind: input, shape index: {}]
  %s12 = inlined_call_operand.vmem [shape: f32[16,128], index: 12, kind: output, shape index: {}]
  %s13 = sld [smem:[#allocation0]]
  $region70: #{lstm_ner_tf_forward.1} parent=0
    _
  %s15 = ssub.s32 1, %s13
  %s16 = scalar_select 0, %s15, %s13
  $region1: #{lstm_ner_tf_forward.1} parent=0
    #allocation7 [shape = 'u8[16384]{0}', space=vmem, size = 0x4000, scoped, tag = 'input window, operand 4, single buffered']
    #allocation8 [shape = 's32[1]{0}', space=sflag, size = 0x4, scoped, tag = 'scoped memory for lstm_ner_tf_forward.1']
    #allocation9 [shape = 'u8[16384]{0}', space=vmem, size = 0x4000, scoped, tag = 'input window, operand 7, single buffered']
    #allocation10 [shape = 's32[1]{0}', space=sflag, size = 0x4, scoped, tag = 'scoped memory for lstm_ner_tf_forward.1']
    #allocation11 [shape = 'u8[16384]{0}', space=vmem, size = 0x4000, scoped, tag = 'input window, operand 8, single buffered']
    %17 = vsyncpa [#allocation8], 0
    %18 = vsyncpa [#allocation10], 0
    // Predicated region
    $region2: #{lstm_ner_tf_forward.1} parent=1 // pred_check
      _
    $region3: #{lstm_ner_tf_forward.1} parent=1 // pred_check_branch
      %20 = sbr.rel (0) target = $region5
    $region4: #{lstm_ner_tf_forward.1} parent=1 // pred_region
      _
    $region5: #{lstm_ner_tf_forward.1} parent=1 // pred_fallthru
      _
    // Predicated region
    $region6: #{lstm_ner_tf_forward.1} parent=1 // pred_check
      _
    $region7: #{lstm_ner_tf_forward.1} parent=1 // pred_check_branch
      %22 = sbr.rel (0) target = $region9
    $region8: #{lstm_ner_tf_forward.1} parent=1 // pred_region
      _
    $region9: #{lstm_ner_tf_forward.1} parent=1 // pred_fallthru
      _
    // Predicated region
    $region10: #{lstm_ner_tf_forward.1} parent=1 // pred_check
      _
    $region11: #{lstm_ner_tf_forward.1} parent=1 // pred_check_branch
      %24 = sbr.rel (0) target = $region13
    $region12: #{lstm_ner_tf_forward.1} parent=1 // pred_region
      _
    $region13: #{lstm_ner_tf_forward.1} parent=1 // pred_fallthru
      _
    // Predicated region
    $region14: #{lstm_ner_tf_forward.1} parent=1 // pred_check
      _
    $region15: #{lstm_ner_tf_forward.1} parent=1 // pred_check_branch
      %26 = sbr.rel (0) target = $region17
    $region16: #{lstm_ner_tf_forward.1} parent=1 // pred_region
      _
    $region17: #{lstm_ner_tf_forward.1} parent=1 // pred_fallthru
      _
    // Predicated region
    $region18: #{lstm_ner_tf_forward.1} parent=1 // pred_check
      _
    $region19: #{lstm_ner_tf_forward.1} parent=1 // pred_check_branch
      %28 = sbr.rel (0) target = $region21
    $region20: #{lstm_ner_tf_forward.1} parent=1 // pred_region
      %30 = vsyncadd [#allocation8], 0
      %s31 = sshll.u32 %s4, 4
      %s32 = int_to_ptr.hbm [resolvable:$true] %s31
      %s33 = sshll.u32 [#allocation7], 4
      %s34 = int_to_ptr.vmem [resolvable:$true] %s33
      %39 = dma.hbm_to_vmem [thread:$0]  %s32, 512, %s34, [#allocation8], 128, 128, 8
    $region21: #{lstm_ner_tf_forward.1} parent=1 // pred_fallthru
      _
    // Predicated region
    $region22: #{lstm_ner_tf_forward.1} parent=1 // pred_check
      _
    $region23: #{lstm_ner_tf_forward.1} parent=1 // pred_check_branch
      %41 = sbr.rel (0) target = $region25
    $region24: #{lstm_ner_tf_forward.1} parent=1 // pred_region
      _
    $region25: #{lstm_ner_tf_forward.1} parent=1 // pred_fallthru
      _
    // Predicated region
    $region26: #{lstm_ner_tf_forward.1} parent=1 // pred_check
      _
    $region27: #{lstm_ner_tf_forward.1} parent=1 // pred_check_branch
      %43 = sbr.rel (0) target = $region29
    $region28: #{lstm_ner_tf_forward.1} parent=1 // pred_region
      _
    $region29: #{lstm_ner_tf_forward.1} parent=1 // pred_fallthru
      _
    // Predicated region
    $region30: #{lstm_ner_tf_forward.1} parent=1 // pred_check
      _
    $region31: #{lstm_ner_tf_forward.1} parent=1 // pred_check_branch
      %45 = sbr.rel (0) target = $region33
    $region32: #{lstm_ner_tf_forward.1} parent=1 // pred_region
      %47 = vsyncadd [#allocation10], 0
      %s48 = sshll.u32 %s7, 4
      %s49 = int_to_ptr.hbm [resolvable:$true] %s48
      %s50 = sshll.u32 [#allocation9], 4
      %s51 = int_to_ptr.vmem [resolvable:$true] %s50
      %56 = dma.hbm_to_vmem [thread:$0]  %s49, 512, %s51, [#allocation10], 128, 128, 8
    $region33: #{lstm_ner_tf_forward.1} parent=1 // pred_fallthru
      _
    // Predicated region
    $region34: #{lstm_ner_tf_forward.1} parent=1 // pred_check
      _
    $region35: #{lstm_ner_tf_forward.1} parent=1 // pred_check_branch
      %58 = sbr.rel (0) target = $region37
    $region36: #{lstm_ner_tf_forward.1} parent=1 // pred_region
      %60 = vsyncadd [#allocation10], 0
      %s61 = sshll.u32 %s8, 4
      %s62 = int_to_ptr.hbm [resolvable:$true] %s61
      %s63 = sshll.u32 [#allocation11], 4
      %s64 = int_to_ptr.vmem [resolvable:$true] %s63
      %69 = dma.hbm_to_vmem [thread:$0]  %s62, 512, %s64, [#allocation10], 128, 128, 8
    $region37: #{lstm_ner_tf_forward.1} parent=1 // pred_fallthru
      _
    // Predicated region
    $region38: #{lstm_ner_tf_forward.1} parent=1 // pred_check
      _
    $region39: #{lstm_ner_tf_forward.1} parent=1 // pred_check_branch
      %71 = sbr.rel (0) target = $region41
    $region40: #{lstm_ner_tf_forward.1} parent=1 // pred_region
      _
    $region41: #{lstm_ner_tf_forward.1} parent=1 // pred_fallthru
      _
    // Predicated region
    $region42: #{lstm_ner_tf_forward.1} parent=1 // pred_check
      _
    $region43: #{lstm_ner_tf_forward.1} parent=1 // pred_check_branch
      %73 = sbr.rel (0) target = $region45
    $region44: #{lstm_ner_tf_forward.1} parent=1 // pred_region
      _
    $region45: #{lstm_ner_tf_forward.1} parent=1 // pred_fallthru
      _
    // Predicated region
    $region46: #{lstm_ner_tf_forward.1} parent=1 // pred_check
      _
    $region47: #{lstm_ner_tf_forward.1} parent=1 // pred_check_branch
      %75 = sbr.rel (0) target = $region49
    $region48: #{lstm_ner_tf_forward.1} parent=1 // pred_region
      _
    $region49: #{lstm_ner_tf_forward.1} parent=1 // pred_fallthru
      _
    // Predicated region
    $region50: #{lstm_ner_tf_forward.1} parent=1 // pred_check
      _
    $region51: #{lstm_ner_tf_forward.1} parent=1 // pred_check_branch
      %77 = sbr.rel (0) target = $region53
    $region52: #{lstm_ner_tf_forward.1} parent=1 // pred_region
      %79 = dma.done [#allocation8], 512
    $region53: #{lstm_ner_tf_forward.1} parent=1 // pred_fallthru
      _
    // Predicated region
    $region54: #{lstm_ner_tf_forward.1} parent=1 // pred_check
      _
    $region55: #{lstm_ner_tf_forward.1} parent=1 // pred_check_branch
      %81 = sbr.rel (0) target = $region57
    $region56: #{lstm_ner_tf_forward.1} parent=1 // pred_region
      %83 = dma.done [#allocation10], 512
    $region57: #{lstm_ner_tf_forward.1} parent=1 // pred_fallthru
      _
    // Predicated region
    $region58: #{lstm_ner_tf_forward.1} parent=1 // pred_check
      _
    $region59: #{lstm_ner_tf_forward.1} parent=1 // pred_check_branch
      %85 = sbr.rel (0) target = $region61
    $region60: #{lstm_ner_tf_forward.1} parent=1 // pred_region
      %87 = dma.done [#allocation10], 512
    $region61: #{lstm_ner_tf_forward.1} parent=1 // pred_fallthru
      _
    %v88 = vld [vmem:[%s0] sm:$0xff]
    %v89 = vld [vmem:[%s0 + $0x8] sm:$0xff]
    %v90 = vld [vmem:[%s1] sm:$0xff]
    %v91 = vld [vmem:[%s1 + $0x8] sm:$0xff]
    %v92 = vld [vmem:[%s1 + $0x10] sm:$0xff]
    %v93 = vld [vmem:[%s1 + $0x18] sm:$0xff]
    %v94 = vld [vmem:[%s2] sm:$0x3]
    %v96 = vperm.slane %v94, 0
    %v97 = vperm.slane %v94, 1
    %vm100 = vcmask 130048
    %v102 = vsel %vm100, %v88, 0
    %v105 = vsel %vm100, %v89, 0
    %107 = vmatpush.msra.mxu0 0.0
    %108 = vmatpush.msra.mxu0 0.0
    %109 = vmatpush.msra.mxu0 0.0
    %110 = vmatpush.msra.mxu0 0.0
    %111 = vmatpush.msra.mxu0 0.0
    %112 = vmatpush.msra.mxu0 0.0
    %113 = vmatpush.msra.mxu0 0.0
    %114 = vmatpush.msra.mxu0 0.0
    %115 = vmatpush.msra.mxu0 0.0
    %116 = vmatpush.msra.mxu0 0.0
    %117 = vmatpush.msra.mxu0 0.0
    %118 = vmatpush.msra.mxu0 0.0
    %119 = vmatpush.msra.mxu0 0.0
    %120 = vmatpush.msra.mxu0 0.0
    %121 = vmatpush.msra.mxu0 %v92
    %122 = vmatpush.msra.mxu0 %v90
    %123 = vmatmul.f32.gmra.mxu0 %v102
    %v124 = vpop.f32.mrf.mxu0
    %v125 = vadd.f32 %v96, %v124
    %126 = vmatmul.f32.gmra.mxu0 %v105
    %v127 = vpop.f32.mrf.mxu0
    %v128 = vadd.f32 %v96, %v127
    %129 = vdwg.mxu0
    %130 = vmatpush.msra.mxu0 0.0
    %131 = vmatpush.msra.mxu0 0.0
    %132 = vmatpush.msra.mxu0 0.0
    %133 = vmatpush.msra.mxu0 0.0
    %134 = vmatpush.msra.mxu0 0.0
    %135 = vmatpush.msra.mxu0 0.0
    %136 = vmatpush.msra.mxu0 0.0
    %137 = vmatpush.msra.mxu0 0.0
    %138 = vmatpush.msra.mxu0 0.0
    %139 = vmatpush.msra.mxu0 0.0
    %140 = vmatpush.msra.mxu0 0.0
    %141 = vmatpush.msra.mxu0 0.0
    %142 = vmatpush.msra.mxu0 0.0
    %143 = vmatpush.msra.mxu0 0.0
    %144 = vmatpush.msra.mxu0 %v93
    %145 = vmatpush.msra.mxu0 %v91
    %146 = vmatmul.f32.gmra.mxu0 %v102
    %v147 = vpop.f32.mrf.mxu0
    %v148 = vadd.f32 %v97, %v147
    %149 = vmatmul.f32.gmra.mxu0 %v105
    %v150 = vpop.f32.mrf.mxu0
    %v151 = vadd.f32 %v97, %v150
    %152 = vdwg.mxu0
    %153 = vst [vmem:[#allocation2] sm:$0xff] %v125
    %154 = vst [vmem:[#allocation2 + $0x8] sm:$0xff] %v148
    %155 = vst [vmem:[#allocation2 + $0x10] sm:$0xff] %v128
    %156 = vst [vmem:[#allocation2 + $0x18] sm:$0xff] %v151
    %vm157 = vcmask 257024
    %158 = vst.msk [vmem:[#allocation5] sm:$0xf] %vm157, 0.0
    %159 = vst.msk [vmem:[#allocation6] sm:$0xf] %vm157, 0.0
    %v160 = vld [vmem:[%s3] sm:$0xff]
    %v161 = vld [vmem:[%s3 + $0x8] sm:$0xff]
    %v162 = vld [vmem:[%s3 + $0x10] sm:$0xff]
    %v163 = vld [vmem:[%s3 + $0x18] sm:$0xff]
    %v164 = vld [vmem:[#allocation7] sm:$0xff]
    %v165 = vld [vmem:[#allocation7 + $0x8] sm:$0xff]
    %v166 = vld [vmem:[#allocation7 + $0x10] sm:$0xff]
    %v167 = vld [vmem:[#allocation7 + $0x18] sm:$0xff]
    %v168 = vld [vmem:[#allocation2] sm:$0x3]
    %v169 = vld [vmem:[#allocation2 + $0x18] sm:$0xc0]
    %v170 = vld [vmem:[#allocation5] sm:$0xf]
    %vm171 = vcmask 261120
    %v173 = vsel %vm171, %v170, 0
    %175 = vmatpush.msra.mxu0 0.0
    %176 = vmatpush.msra.mxu0 0.0
    %177 = vmatpush.msra.mxu0 0.0
    %178 = vmatpush.msra.mxu0 0.0
    %179 = vmatpush.msra.mxu0 0.0
    %180 = vmatpush.msra.mxu0 0.0
    %181 = vmatpush.msra.mxu0 0.0
    %182 = vmatpush.msra.mxu0 0.0
    %183 = vmatpush.msra.mxu0 0.0
    %184 = vmatpush.msra.mxu0 0.0
    %185 = vmatpush.msra.mxu0 0.0
    %186 = vmatpush.msra.mxu0 0.0
    %187 = vmatpush.msra.mxu0 %v163
    %188 = vmatpush.msra.mxu0 %v162
    %189 = vmatpush.msra.mxu0 %v161
    %190 = vmatpush.msra.mxu0 %v160
    %191 = vmatmul.f32.gmra.mxu0 %v173
    %v192 = vpop.f32.mrf.mxu0
    %v193 = vadd.f32 0.0, %v192
    %194 = vdwg.mxu0
    %v195 = vadd.f32 %v168, %v193
    %v196 = vrot.slane %v170, 2
    %v197 = vsel %vm171, %v196, 0
    %199 = vmatpush.msra.mxu0 0.0
    %200 = vmatpush.msra.mxu0 0.0
    %201 = vmatpush.msra.mxu0 0.0
    %202 = vmatpush.msra.mxu0 0.0
    %203 = vmatpush.msra.mxu0 0.0
    %204 = vmatpush.msra.mxu0 0.0
    %205 = vmatpush.msra.mxu0 0.0
    %206 = vmatpush.msra.mxu0 0.0
    %207 = vmatpush.msra.mxu0 0.0
    %208 = vmatpush.msra.mxu0 0.0
    %209 = vmatpush.msra.mxu0 0.0
    %210 = vmatpush.msra.mxu0 0.0
    %211 = vmatpush.msra.mxu0 %v167
    %212 = vmatpush.msra.mxu0 %v166
    %213 = vmatpush.msra.mxu0 %v165
    %214 = vmatpush.msra.mxu0 %v164
    %215 = vmatmul.f32.gmra.mxu0 %v197
    %v216 = vpop.f32.mrf.mxu0
    %v217 = vadd.f32 0.0, %v216
    %218 = vdwg.mxu0
    %v220 = vrot.slane %v217, 2
    %v222 = vadd.f32 %v169, %v220
    %v224 = vrot.slane %v222, 4
    %vm226 = vcmask 1041408
    %v227 = vsel %vm226, %v195, %v224
    %v228 = vxor.u32 %v227, 2147483648
    %v229 = vmul.f32 %v228, 1.442695
    %v230 = vpow.pop %v229
    %v231 = vadd.f32 %v230, 1.0
    %v232 = vrcp.pop %v231
    %v233 = vmul.f32 %v231, %v232
    %v234 = vsub.f32 1.0, %v233
    %v235 = vmul.f32 %v232, %v234
    %v236 = vadd.f32 %v232, %v235
    %vm237 = vweird.f32 %v231
    %vm238 = vweird.f32 %v232
    %vm239 = vmor %vm237, %vm238
    %v240 = vsel %vm239, %v232, %v236
    %v241 = vand.u32 2147483647, %v231
    %vm242 = vcmp.eq.f32.partialorder %v241, 8.507059e+37
    %v243 = vand.u32 %v231, 2147483648
    %v244 = vor.u32 1.1754944e-38, %v243
    %v245 = vsel %vm242, %v244, %v240
    %v246 = vmul.f32 1.0, %v245
    %v247 = vtanh.pop %v227
    %v248 = vld [vmem:[#allocation6] sm:$0xf]
    %250 = vrot.lane.b32.xlu0 %v248, 32
    %v251 = vpop.permute.xlu0 %250
    %v253 = vmul.f32 %v246, %v251
    %255 = vrot.lane.b32.xlu0 %v247, 64
    %v256 = vpop.permute.xlu0 %255
    %v258 = vmul.f32 %v246, %v256
    %260 = vrot.lane.b32.xlu0 %v258, 32
    %v261 = vpop.permute.xlu0 %260
    %v263 = vadd.f32 %v253, %v261
    %v264 = vtanh.pop %v263
    %266 = vrot.lane.b32.xlu0 %v264, 64
    %v267 = vpop.permute.xlu0 %266
    %v269 = vmul.f32 %v246, %v267
    %271 = vrot.lane.b32.xlu0 %v269, 32
    %v272 = vpop.permute.xlu0 %271
    %274 = vst.msk [vmem:[#allocation5] sm:$0xf] %vm157, %v272
    %276 = vrot.lane.b32.xlu0 %v263, 96
    %v277 = vpop.permute.xlu0 %276
    %279 = vst.msk [vmem:[#allocation6] sm:$0xf] %vm157, %v277
    %vm280 = vcmask 254976
    %281 = vst.msk [vmem:[#allocation3] sm:$0x3] %vm280, %v272
    %vm282 = vcmask 257026
    %283 = vst.msk [vmem:[#allocation4 + $0xc] sm:$0xc] %vm282, %v272
    %v284 = vld [vmem:[#allocation2] sm:$0xc]
    %v285 = vld [vmem:[#allocation2 + $0x18] sm:$0x30]
    %v286 = vld [vmem:[#allocation5] sm:$0xf]
    %v288 = vsel %vm171, %v286, 0
    %290 = vmatpush.msra.mxu0 0.0
    %291 = vmatpush.msra.mxu0 0.0
    %292 = vmatpush.msra.mxu0 0.0
    %293 = vmatpush.msra.mxu0 0.0
    %294 = vmatpush.msra.mxu0 0.0
    %295 = vmatpush.msra.mxu0 0.0
    %296 = vmatpush.msra.mxu0 0.0
    %297 = vmatpush.msra.mxu0 0.0
    %298 = vmatpush.msra.mxu0 0.0
    %299 = vmatpush.msra.mxu0 0.0
    %300 = vmatpush.msra.mxu0 0.0
    %301 = vmatpush.msra.mxu0 0.0
    %302 = vmatpush.msra.mxu0 %v163
    %303 = vmatpush.msra.mxu0 %v162
    %304 = vmatpush.msra.mxu0 %v161
    %305 = vmatpush.msra.mxu0 %v160
    %306 = vmatmul.f32.gmra.mxu0 %v288
    %v307 = vpop.f32.mrf.mxu0
    %v308 = vadd.f32 0.0, %v307
    %309 = vdwg.mxu0
    %v311 = vrot.slane %v308, 6
    %v313 = vadd.f32 %v284, %v311
    %v314 = vrot.slane %v286, 2
    %v315 = vsel %vm171, %v314, 0
    %317 = vmatpush.msra.mxu0 0.0
    %318 = vmatpush.msra.mxu0 0.0
    %319 = vmatpush.msra.mxu0 0.0
    %320 = vmatpush.msra.mxu0 0.0
    %321 = vmatpush.msra.mxu0 0.0
    %322 = vmatpush.msra.mxu0 0.0
    %323 = vmatpush.msra.mxu0 0.0
    %324 = vmatpush.msra.mxu0 0.0
    %325 = vmatpush.msra.mxu0 0.0
    %326 = vmatpush.msra.mxu0 0.0
    %327 = vmatpush.msra.mxu0 0.0
    %328 = vmatpush.msra.mxu0 0.0
    %329 = vmatpush.msra.mxu0 %v167
    %330 = vmatpush.msra.mxu0 %v166
    %331 = vmatpush.msra.mxu0 %v165
    %332 = vmatpush.msra.mxu0 %v164
    %333 = vmatmul.f32.gmra.mxu0 %v315
    %v334 = vpop.f32.mrf.mxu0
    %v335 = vadd.f32 0.0, %v334
    %336 = vdwg.mxu0
    %v338 = vrot.slane %v335, 4
    %v340 = vadd.f32 %v285, %v338
    %v342 = vrot.slane %v313, 2
    %v345 = vrot.slane %v340, 2
    %v347 = vsel %vm226, %v342, %v345
    %v348 = vxor.u32 %v347, 2147483648
    %v349 = vmul.f32 %v348, 1.442695
    %v350 = vpow.pop %v349
    %v351 = vadd.f32 %v350, 1.0
    %v352 = vrcp.pop %v351
    %v353 = vmul.f32 %v351, %v352
    %v354 = vsub.f32 1.0, %v353
    %v355 = vmul.f32 %v352, %v354
    %v356 = vadd.f32 %v352, %v355
    %vm357 = vweird.f32 %v351
    %vm358 = vweird.f32 %v352
    %vm359 = vmor %vm357, %vm358
    %v360 = vsel %vm359, %v352, %v356
    %v361 = vand.u32 2147483647, %v351
    %vm362 = vcmp.eq.f32.partialorder %v361, 8.507059e+37
    %v363 = vand.u32 %v351, 2147483648
    %v364 = vor.u32 1.1754944e-38, %v363
    %v365 = vsel %vm362, %v364, %v360
    %v366 = vmul.f32 1.0, %v365
    %v367 = vtanh.pop %v347
    %v368 = vld [vmem:[#allocation6] sm:$0xf]
    %370 = vrot.lane.b32.xlu0 %v368, 32
    %v371 = vpop.permute.xlu0 %370
    %v373 = vmul.f32 %v366, %v371
    %375 = vrot.lane.b32.xlu0 %v367, 64
    %v376 = vpop.permute.xlu0 %375
    %v378 = vmul.f32 %v366, %v376
    %380 = vrot.lane.b32.xlu0 %v378, 32
    %v381 = vpop.permute.xlu0 %380
    %v383 = vadd.f32 %v373, %v381
    %v384 = vtanh.pop %v383
    %386 = vrot.lane.b32.xlu0 %v384, 64
    %v387 = vpop.permute.xlu0 %386
    %v389 = vmul.f32 %v366, %v387
    %391 = vrot.lane.b32.xlu0 %v389, 32
    %v392 = vpop.permute.xlu0 %391
    %394 = vst.msk [vmem:[#allocation5] sm:$0xf] %vm157, %v392
    %396 = vrot.lane.b32.xlu0 %v383, 96
    %v397 = vpop.permute.xlu0 %396
    %399 = vst.msk [vmem:[#allocation6] sm:$0xf] %vm157, %v397
    %400 = vst.msk [vmem:[#allocation3 + $0x2] sm:$0x3] %vm280, %v392
    %401 = vst.msk [vmem:[#allocation4 + $0xa] sm:$0xc] %vm282, %v392
    %v402 = vld [vmem:[#allocation2] sm:$0x30]
    %v403 = vld [vmem:[#allocation2 + $0x18] sm:$0xc]
    %v404 = vld [vmem:[#allocation5] sm:$0xf]
    %v406 = vsel %vm171, %v404, 0
    %408 = vmatpush.msra.mxu0 0.0
    %409 = vmatpush.msra.mxu0 0.0
    %410 = vmatpush.msra.mxu0 0.0
    %411 = vmatpush.msra.mxu0 0.0
    %412 = vmatpush.msra.mxu0 0.0
    %413 = vmatpush.msra.mxu0 0.0
    %414 = vmatpush.msra.mxu0 0.0
    %415 = vmatpush.msra.mxu0 0.0
    %416 = vmatpush.msra.mxu0 0.0
    %417 = vmatpush.msra.mxu0 0.0
    %418 = vmatpush.msra.mxu0 0.0
    %419 = vmatpush.msra.mxu0 0.0
    %420 = vmatpush.msra.mxu0 %v163
    %421 = vmatpush.msra.mxu0 %v162
    %422 = vmatpush.msra.mxu0 %v161
    %423 = vmatpush.msra.mxu0 %v160
    %424 = vmatmul.f32.gmra.mxu0 %v406
    %v425 = vpop.f32.mrf.mxu0
    %v426 = vadd.f32 0.0, %v425
    %427 = vdwg.mxu0
    %v429 = vrot.slane %v426, 4
    %v431 = vadd.f32 %v402, %v429
    %v432 = vrot.slane %v404, 2
    %v433 = vsel %vm171, %v432, 0
    %435 = vmatpush.msra.mxu0 0.0
    %436 = vmatpush.msra.mxu0 0.0
    %437 = vmatpush.msra.mxu0 0.0
    %438 = vmatpush.msra.mxu0 0.0
    %439 = vmatpush.msra.mxu0 0.0
    %440 = vmatpush.msra.mxu0 0.0
    %441 = vmatpush.msra.mxu0 0.0
    %442 = vmatpush.msra.mxu0 0.0
    %443 = vmatpush.msra.mxu0 0.0
    %444 = vmatpush.msra.mxu0 0.0
    %445 = vmatpush.msra.mxu0 0.0
    %446 = vmatpush.msra.mxu0 0.0
    %447 = vmatpush.msra.mxu0 %v167
    %448 = vmatpush.msra.mxu0 %v166
    %449 = vmatpush.msra.mxu0 %v165
    %450 = vmatpush.msra.mxu0 %v164
    %451 = vmatmul.f32.gmra.mxu0 %v433
    %v452 = vpop.f32.mrf.mxu0
    %v453 = vadd.f32 0.0, %v452
    %454 = vdwg.mxu0
    %v456 = vrot.slane %v453, 6
    %v458 = vadd.f32 %v403, %v456
    %v460 = vrot.slane %v431, 4
    %v462 = vsel %vm226, %v460, %v458
    %v463 = vxor.u32 %v462, 2147483648
    %v464 = vmul.f32 %v463, 1.442695
    %v465 = vpow.pop %v464
    %v466 = vadd.f32 %v465, 1.0
    %v467 = vrcp.pop %v466
    %v468 = vmul.f32 %v466, %v467
    %v469 = vsub.f32 1.0, %v468
    %v470 = vmul.f32 %v467, %v469
    %v471 = vadd.f32 %v467, %v470
    %vm472 = vweird.f32 %v466
    %vm473 = vweird.f32 %v467
    %vm474 = vmor %vm472, %vm473
    %v475 = vsel %vm474, %v467, %v471
    %v476 = vand.u32 2147483647, %v466
    %vm477 = vcmp.eq.f32.partialorder %v476, 8.507059e+37
    %v478 = vand.u32 %v466, 2147483648
    %v479 = vor.u32 1.1754944e-38, %v478
    %v480 = vsel %vm477, %v479, %v475
    %v481 = vmul.f32 1.0, %v480
    %v482 = vtanh.pop %v462
    %v483 = vld [vmem:[#allocation6] sm:$0xf]
    %485 = vrot.lane.b32.xlu0 %v483, 32
    %v486 = vpop.permute.xlu0 %485
    %v488 = vmul.f32 %v481, %v486
    %490 = vrot.lane.b32.xlu0 %v482, 64
    %v491 = vpop.permute.xlu0 %490
    %v493 = vmul.f32 %v481, %v491
    %495 = vrot.lane.b32.xlu0 %v493, 32
    %v496 = vpop.permute.xlu0 %495
    %v498 = vadd.f32 %v488, %v496
    %v499 = vtanh.pop %v498
    %501 = vrot.lane.b32.xlu0 %v499, 64
    %v502 = vpop.permute.xlu0 %501
    %v504 = vmul.f32 %v481, %v502
    %506 = vrot.lane.b32.xlu0 %v504, 32
    %v507 = vpop.permute.xlu0 %506
    %509 = vst.msk [vmem:[#allocation5] sm:$0xf] %vm157, %v507
    %511 = vrot.lane.b32.xlu0 %v498, 96
    %v512 = vpop.permute.xlu0 %511
    %514 = vst.msk [vmem:[#allocation6] sm:$0xf] %vm157, %v512
    %515 = vst.msk [vmem:[#allocation3 + $0x4] sm:$0x3] %vm280, %v507
    %516 = vst.msk [vmem:[#allocation4 + $0x8] sm:$0xc] %vm282, %v507
    %v517 = vld [vmem:[#allocation2] sm:$0xc0]
    %v518 = vld [vmem:[#allocation2 + $0x18] sm:$0x3]
    %v519 = vld [vmem:[#allocation5] sm:$0xf]
    %v521 = vsel %vm171, %v519, 0
    %523 = vmatpush.msra.mxu0 0.0
    %524 = vmatpush.msra.mxu0 0.0
    %525 = vmatpush.msra.mxu0 0.0
    %526 = vmatpush.msra.mxu0 0.0
    %527 = vmatpush.msra.mxu0 0.0
    %528 = vmatpush.msra.mxu0 0.0
    %529 = vmatpush.msra.mxu0 0.0
    %530 = vmatpush.msra.mxu0 0.0
    %531 = vmatpush.msra.mxu0 0.0
    %532 = vmatpush.msra.mxu0 0.0
    %533 = vmatpush.msra.mxu0 0.0
    %534 = vmatpush.msra.mxu0 0.0
    %535 = vmatpush.msra.mxu0 %v163
    %536 = vmatpush.msra.mxu0 %v162
    %537 = vmatpush.msra.mxu0 %v161
    %538 = vmatpush.msra.mxu0 %v160
    %539 = vmatmul.f32.gmra.mxu0 %v521
    %v540 = vpop.f32.mrf.mxu0
    %v541 = vadd.f32 0.0, %v540
    %542 = vdwg.mxu0
    %v544 = vrot.slane %v541, 2
    %v546 = vadd.f32 %v517, %v544
    %v547 = vrot.slane %v519, 2
    %v548 = vsel %vm171, %v547, 0
    %550 = vmatpush.msra.mxu0 0.0
    %551 = vmatpush.msra.mxu0 0.0
    %552 = vmatpush.msra.mxu0 0.0
    %553 = vmatpush.msra.mxu0 0.0
    %554 = vmatpush.msra.mxu0 0.0
    %555 = vmatpush.msra.mxu0 0.0
    %556 = vmatpush.msra.mxu0 0.0
    %557 = vmatpush.msra.mxu0 0.0
    %558 = vmatpush.msra.mxu0 0.0
    %559 = vmatpush.msra.mxu0 0.0
    %560 = vmatpush.msra.mxu0 0.0
    %561 = vmatpush.msra.mxu0 0.0
    %562 = vmatpush.msra.mxu0 %v167
    %563 = vmatpush.msra.mxu0 %v166
    %564 = vmatpush.msra.mxu0 %v165
    %565 = vmatpush.msra.mxu0 %v164
    %566 = vmatmul.f32.gmra.mxu0 %v548
    %v567 = vpop.f32.mrf.mxu0
    %v568 = vadd.f32 0.0, %v567
    %569 = vdwg.mxu0
    %v570 = vadd.f32 %v518, %v568
    %v572 = vrot.slane %v546, 6
    %v575 = vrot.slane %v570, 6
    %v577 = vsel %vm226, %v572, %v575
    %v578 = vxor.u32 %v577, 2147483648
    %v579 = vmul.f32 %v578, 1.442695
    %v580 = vpow.pop %v579
    %v581 = vadd.f32 %v580, 1.0
    %v582 = vrcp.pop %v581
    %v583 = vmul.f32 %v581, %v582
    %v584 = vsub.f32 1.0, %v583
    %v585 = vmul.f32 %v582, %v584
    %v586 = vadd.f32 %v582, %v585
    %vm587 = vweird.f32 %v581
    %vm588 = vweird.f32 %v582
    %vm589 = vmor %vm587, %vm588
    %v590 = vsel %vm589, %v582, %v586
    %v591 = vand.u32 2147483647, %v581
    %vm592 = vcmp.eq.f32.partialorder %v591, 8.507059e+37
    %v593 = vand.u32 %v581, 2147483648
    %v594 = vor.u32 1.1754944e-38, %v593
    %v595 = vsel %vm592, %v594, %v590
    %v596 = vmul.f32 1.0, %v595
    %v597 = vtanh.pop %v577
    %v598 = vld [vmem:[#allocation6] sm:$0xf]
    %600 = vrot.lane.b32.xlu0 %v598, 32
    %v601 = vpop.permute.xlu0 %600
    %v603 = vmul.f32 %v596, %v601
    %605 = vrot.lane.b32.xlu0 %v597, 64
    %v606 = vpop.permute.xlu0 %605
    %v608 = vmul.f32 %v596, %v606
    %610 = vrot.lane.b32.xlu0 %v608, 32
    %v611 = vpop.permute.xlu0 %610
    %v613 = vadd.f32 %v603, %v611
    %v614 = vtanh.pop %v613
    %616 = vrot.lane.b32.xlu0 %v614, 64
    %v617 = vpop.permute.xlu0 %616
    %v619 = vmul.f32 %v596, %v617
    %621 = vrot.lane.b32.xlu0 %v619, 32
    %v622 = vpop.permute.xlu0 %621
    %624 = vst.msk [vmem:[#allocation5] sm:$0xf] %vm157, %v622
    %626 = vrot.lane.b32.xlu0 %v613, 96
    %v627 = vpop.permute.xlu0 %626
    %629 = vst.msk [vmem:[#allocation6] sm:$0xf] %vm157, %v627
    %630 = vst.msk [vmem:[#allocation3 + $0x6] sm:$0x3] %vm280, %v622
    %631 = vst.msk [vmem:[#allocation4 + $0x6] sm:$0xc] %vm282, %v622
    %v632 = vld [vmem:[#allocation2 + $0x10] sm:$0x3]
    %v633 = vld [vmem:[#allocation2 + $0x8] sm:$0xc0]
    %v634 = vld [vmem:[#allocation5] sm:$0xf]
    %v636 = vsel %vm171, %v634, 0
    %638 = vmatpush.msra.mxu0 0.0
    %639 = vmatpush.msra.mxu0 0.0
    %640 = vmatpush.msra.mxu0 0.0
    %641 = vmatpush.msra.mxu0 0.0
    %642 = vmatpush.msra.mxu0 0.0
    %643 = vmatpush.msra.mxu0 0.0
    %644 = vmatpush.msra.mxu0 0.0
    %645 = vmatpush.msra.mxu0 0.0
    %646 = vmatpush.msra.mxu0 0.0
    %647 = vmatpush.msra.mxu0 0.0
    %648 = vmatpush.msra.mxu0 0.0
    %649 = vmatpush.msra.mxu0 0.0
    %650 = vmatpush.msra.mxu0 %v163
    %651 = vmatpush.msra.mxu0 %v162
    %652 = vmatpush.msra.mxu0 %v161
    %653 = vmatpush.msra.mxu0 %v160
    %654 = vmatmul.f32.gmra.mxu0 %v636
    %v655 = vpop.f32.mrf.mxu0
    %v656 = vadd.f32 0.0, %v655
    %657 = vdwg.mxu0
    %v658 = vadd.f32 %v632, %v656
    %v659 = vrot.slane %v634, 2
    %v660 = vsel %vm171, %v659, 0
    %662 = vmatpush.msra.mxu0 0.0
    %663 = vmatpush.msra.mxu0 0.0
    %664 = vmatpush.msra.mxu0 0.0
    %665 = vmatpush.msra.mxu0 0.0
    %666 = vmatpush.msra.mxu0 0.0
    %667 = vmatpush.msra.mxu0 0.0
    %668 = vmatpush.msra.mxu0 0.0
    %669 = vmatpush.msra.mxu0 0.0
    %670 = vmatpush.msra.mxu0 0.0
    %671 = vmatpush.msra.mxu0 0.0
    %672 = vmatpush.msra.mxu0 0.0
    %673 = vmatpush.msra.mxu0 0.0
    %674 = vmatpush.msra.mxu0 %v167
    %675 = vmatpush.msra.mxu0 %v166
    %676 = vmatpush.msra.mxu0 %v165
    %677 = vmatpush.msra.mxu0 %v164
    %678 = vmatmul.f32.gmra.mxu0 %v660
    %v679 = vpop.f32.mrf.mxu0
    %v680 = vadd.f32 0.0, %v679
    %681 = vdwg.mxu0
    %v683 = vrot.slane %v680, 2
    %v685 = vadd.f32 %v633, %v683
    %v687 = vrot.slane %v685, 4
    %v689 = vsel %vm226, %v658, %v687
    %v690 = vxor.u32 %v689, 2147483648
    %v691 = vmul.f32 %v690, 1.442695
    %v692 = vpow.pop %v691
    %v693 = vadd.f32 %v692, 1.0
    %v694 = vrcp.pop %v693
    %v695 = vmul.f32 %v693, %v694
    %v696 = vsub.f32 1.0, %v695
    %v697 = vmul.f32 %v694, %v696
    %v698 = vadd.f32 %v694, %v697
    %vm699 = vweird.f32 %v693
    %vm700 = vweird.f32 %v694
    %vm701 = vmor %vm699, %vm700
    %v702 = vsel %vm701, %v694, %v698
    %v703 = vand.u32 2147483647, %v693
    %vm704 = vcmp.eq.f32.partialorder %v703, 8.507059e+37
    %v705 = vand.u32 %v693, 2147483648
    %v706 = vor.u32 1.1754944e-38, %v705
    %v707 = vsel %vm704, %v706, %v702
    %v708 = vmul.f32 1.0, %v707
    %v709 = vtanh.pop %v689
    %v710 = vld [vmem:[#allocation6] sm:$0xf]
    %712 = vrot.lane.b32.xlu0 %v710, 32
    %v713 = vpop.permute.xlu0 %712
    %v715 = vmul.f32 %v708, %v713
    %717 = vrot.lane.b32.xlu0 %v709, 64
    %v718 = vpop.permute.xlu0 %717
    %v720 = vmul.f32 %v708, %v718
    %722 = vrot.lane.b32.xlu0 %v720, 32
    %v723 = vpop.permute.xlu0 %722
    %v725 = vadd.f32 %v715, %v723
    %v726 = vtanh.pop %v725
    %728 = vrot.lane.b32.xlu0 %v726, 64
    %v729 = vpop.permute.xlu0 %728
    %v731 = vmul.f32 %v708, %v729
    %733 = vrot.lane.b32.xlu0 %v731, 32
    %v734 = vpop.permute.xlu0 %733
    %736 = vst.msk [vmem:[#allocation5] sm:$0xf] %vm157, %v734
    %738 = vrot.lane.b32.xlu0 %v725, 96
    %v739 = vpop.permute.xlu0 %738
    %741 = vst.msk [vmem:[#allocation6] sm:$0xf] %vm157, %v739
    %742 = vst.msk [vmem:[#allocation3 + $0x8] sm:$0x3] %vm280, %v734
    %743 = vst.msk [vmem:[#allocation4 + $0x4] sm:$0xc] %vm282, %v734
    %v744 = vld [vmem:[#allocation2 + $0x10] sm:$0xc]
    %v745 = vld [vmem:[#allocation2 + $0x8] sm:$0x30]
    %v746 = vld [vmem:[#allocation5] sm:$0xf]
    %v748 = vsel %vm171, %v746, 0
    %750 = vmatpush.msra.mxu0 0.0
    %751 = vmatpush.msra.mxu0 0.0
    %752 = vmatpush.msra.mxu0 0.0
    %753 = vmatpush.msra.mxu0 0.0
    %754 = vmatpush.msra.mxu0 0.0
    %755 = vmatpush.msra.mxu0 0.0
    %756 = vmatpush.msra.mxu0 0.0
    %757 = vmatpush.msra.mxu0 0.0
    %758 = vmatpush.msra.mxu0 0.0
    %759 = vmatpush.msra.mxu0 0.0
    %760 = vmatpush.msra.mxu0 0.0
    %761 = vmatpush.msra.mxu0 0.0
    %762 = vmatpush.msra.mxu0 %v163
    %763 = vmatpush.msra.mxu0 %v162
    %764 = vmatpush.msra.mxu0 %v161
    %765 = vmatpush.msra.mxu0 %v160
    %766 = vmatmul.f32.gmra.mxu0 %v748
    %v767 = vpop.f32.mrf.mxu0
    %v768 = vadd.f32 0.0, %v767
    %769 = vdwg.mxu0
    %v771 = vrot.slane %v768, 6
    %v773 = vadd.f32 %v744, %v771
    %v774 = vrot.slane %v746, 2
    %v775 = vsel %vm171, %v774, 0
    %777 = vmatpush.msra.mxu0 0.0
    %778 = vmatpush.msra.mxu0 0.0
    %779 = vmatpush.msra.mxu0 0.0
    %780 = vmatpush.msra.mxu0 0.0
    %781 = vmatpush.msra.mxu0 0.0
    %782 = vmatpush.msra.mxu0 0.0
    %783 = vmatpush.msra.mxu0 0.0
    %784 = vmatpush.msra.mxu0 0.0
    %785 = vmatpush.msra.mxu0 0.0
    %786 = vmatpush.msra.mxu0 0.0
    %787 = vmatpush.msra.mxu0 0.0
    %788 = vmatpush.msra.mxu0 0.0
    %789 = vmatpush.msra.mxu0 %v167
    %790 = vmatpush.msra.mxu0 %v166
    %791 = vmatpush.msra.mxu0 %v165
    %792 = vmatpush.msra.mxu0 %v164
    %793 = vmatmul.f32.gmra.mxu0 %v775
    %v794 = vpop.f32.mrf.mxu0
    %v795 = vadd.f32 0.0, %v794
    %796 = vdwg.mxu0
    %v798 = vrot.slane %v795, 4
    %v800 = vadd.f32 %v745, %v798
    %v802 = vrot.slane %v773, 2
    %v805 = vrot.slane %v800, 2
    %v807 = vsel %vm226, %v802, %v805
    %v808 = vxor.u32 %v807, 2147483648
    %v809 = vmul.f32 %v808, 1.442695
    %v810 = vpow.pop %v809
    %v811 = vadd.f32 %v810, 1.0
    %v812 = vrcp.pop %v811
    %v813 = vmul.f32 %v811, %v812
    %v814 = vsub.f32 1.0, %v813
    %v815 = vmul.f32 %v812, %v814
    %v816 = vadd.f32 %v812, %v815
    %vm817 = vweird.f32 %v811
    %vm818 = vweird.f32 %v812
    %vm819 = vmor %vm817, %vm818
    %v820 = vsel %vm819, %v812, %v816
    %v821 = vand.u32 2147483647, %v811
    %vm822 = vcmp.eq.f32.partialorder %v821, 8.507059e+37
    %v823 = vand.u32 %v811, 2147483648
    %v824 = vor.u32 1.1754944e-38, %v823
    %v825 = vsel %vm822, %v824, %v820
    %v826 = vmul.f32 1.0, %v825
    %v827 = vtanh.pop %v807
    %v828 = vld [vmem:[#allocation6] sm:$0xf]
    %830 = vrot.lane.b32.xlu0 %v828, 32
    %v831 = vpop.permute.xlu0 %830
    %v833 = vmul.f32 %v826, %v831
    %835 = vrot.lane.b32.xlu0 %v827, 64
    %v836 = vpop.permute.xlu0 %835
    %v838 = vmul.f32 %v826, %v836
    %840 = vrot.lane.b32.xlu0 %v838, 32
    %v841 = vpop.permute.xlu0 %840
    %v843 = vadd.f32 %v833, %v841
    %v844 = vtanh.pop %v843
    %846 = vrot.lane.b32.xlu0 %v844, 64
    %v847 = vpop.permute.xlu0 %846
    %v849 = vmul.f32 %v826, %v847
    %851 = vrot.lane.b32.xlu0 %v849, 32
    %v852 = vpop.permute.xlu0 %851
    %854 = vst.msk [vmem:[#allocation5] sm:$0xf] %vm157, %v852
    %856 = vrot.lane.b32.xlu0 %v843, 96
    %v857 = vpop.permute.xlu0 %856
    %859 = vst.msk [vmem:[#allocation6] sm:$0xf] %vm157, %v857
    %860 = vst.msk [vmem:[#allocation3 + $0xa] sm:$0x3] %vm280, %v852
    %861 = vst.msk [vmem:[#allocation4 + $0x2] sm:$0xc] %vm282, %v852
    %v862 = vld [vmem:[#allocation2 + $0x10] sm:$0x30]
    %v863 = vld [vmem:[#allocation2 + $0x8] sm:$0xc]
    %v864 = vld [vmem:[#allocation5] sm:$0xf]
    %v866 = vsel %vm171, %v864, 0
    %868 = vmatpush.msra.mxu0 0.0
    %869 = vmatpush.msra.mxu0 0.0
    %870 = vmatpush.msra.mxu0 0.0
    %871 = vmatpush.msra.mxu0 0.0
    %872 = vmatpush.msra.mxu0 0.0
    %873 = vmatpush.msra.mxu0 0.0
    %874 = vmatpush.msra.mxu0 0.0
    %875 = vmatpush.msra.mxu0 0.0
    %876 = vmatpush.msra.mxu0 0.0
    %877 = vmatpush.msra.mxu0 0.0
    %878 = vmatpush.msra.mxu0 0.0
    %879 = vmatpush.msra.mxu0 0.0
    %880 = vmatpush.msra.mxu0 %v163
    %881 = vmatpush.msra.mxu0 %v162
    %882 = vmatpush.msra.mxu0 %v161
    %883 = vmatpush.msra.mxu0 %v160
    %884 = vmatmul.f32.gmra.mxu0 %v866
    %v885 = vpop.f32.mrf.mxu0
    %v886 = vadd.f32 0.0, %v885
    %887 = vdwg.mxu0
    %v889 = vrot.slane %v886, 4
    %v891 = vadd.f32 %v862, %v889
    %v892 = vrot.slane %v864, 2
    %v893 = vsel %vm171, %v892, 0
    %895 = vmatpush.msra.mxu0 0.0
    %896 = vmatpush.msra.mxu0 0.0
    %897 = vmatpush.msra.mxu0 0.0
    %898 = vmatpush.msra.mxu0 0.0
    %899 = vmatpush.msra.mxu0 0.0
    %900 = vmatpush.msra.mxu0 0.0
    %901 = vmatpush.msra.mxu0 0.0
    %902 = vmatpush.msra.mxu0 0.0
    %903 = vmatpush.msra.mxu0 0.0
    %904 = vmatpush.msra.mxu0 0.0
    %905 = vmatpush.msra.mxu0 0.0
    %906 = vmatpush.msra.mxu0 0.0
    %907 = vmatpush.msra.mxu0 %v167
    %908 = vmatpush.msra.mxu0 %v166
    %909 = vmatpush.msra.mxu0 %v165
    %910 = vmatpush.msra.mxu0 %v164
    %911 = vmatmul.f32.gmra.mxu0 %v893
    %v912 = vpop.f32.mrf.mxu0
    %v913 = vadd.f32 0.0, %v912
    %914 = vdwg.mxu0
    %v916 = vrot.slane %v913, 6
    %v918 = vadd.f32 %v863, %v916
    %v920 = vrot.slane %v891, 4
    %v922 = vsel %vm226, %v920, %v918
    %v923 = vxor.u32 %v922, 2147483648
    %v924 = vmul.f32 %v923, 1.442695
    %v925 = vpow.pop %v924
    %v926 = vadd.f32 %v925, 1.0
    %v927 = vrcp.pop %v926
    %v928 = vmul.f32 %v926, %v927
    %v929 = vsub.f32 1.0, %v928
    %v930 = vmul.f32 %v927, %v929
    %v931 = vadd.f32 %v927, %v930
    %vm932 = vweird.f32 %v926
    %vm933 = vweird.f32 %v927
    %vm934 = vmor %vm932, %vm933
    %v935 = vsel %vm934, %v927, %v931
    %v936 = vand.u32 2147483647, %v926
    %vm937 = vcmp.eq.f32.partialorder %v936, 8.507059e+37
    %v938 = vand.u32 %v926, 2147483648
    %v939 = vor.u32 1.1754944e-38, %v938
    %v940 = vsel %vm937, %v939, %v935
    %v941 = vmul.f32 1.0, %v940
    %v942 = vtanh.pop %v922
    %v943 = vld [vmem:[#allocation6] sm:$0xf]
    %945 = vrot.lane.b32.xlu0 %v943, 32
    %v946 = vpop.permute.xlu0 %945
    %v948 = vmul.f32 %v941, %v946
    %950 = vrot.lane.b32.xlu0 %v942, 64
    %v951 = vpop.permute.xlu0 %950
    %v953 = vmul.f32 %v941, %v951
    %955 = vrot.lane.b32.xlu0 %v953, 32
    %v956 = vpop.permute.xlu0 %955
    %v958 = vadd.f32 %v948, %v956
    %v959 = vtanh.pop %v958
    %961 = vrot.lane.b32.xlu0 %v959, 64
    %v962 = vpop.permute.xlu0 %961
    %v964 = vmul.f32 %v941, %v962
    %966 = vrot.lane.b32.xlu0 %v964, 32
    %v967 = vpop.permute.xlu0 %966
    %969 = vst.msk [vmem:[#allocation5] sm:$0xf] %vm157, %v967
    %971 = vrot.lane.b32.xlu0 %v958, 96
    %v972 = vpop.permute.xlu0 %971
    %974 = vst.msk [vmem:[#allocation6] sm:$0xf] %vm157, %v972
    %975 = vst.msk [vmem:[#allocation3 + $0xc] sm:$0x3] %vm280, %v967
    %976 = vst.msk [vmem:[#allocation4] sm:$0xc] %vm282, %v967
    %v977 = vld [vmem:[#allocation2 + $0x10] sm:$0xc0]
    %v978 = vld [vmem:[#allocation2 + $0x8] sm:$0x3]
    %v979 = vld [vmem:[#allocation5] sm:$0xf]
    %v981 = vsel %vm171, %v979, 0
    %983 = vmatpush.msra.mxu0 0.0
    %984 = vmatpush.msra.mxu0 0.0
    %985 = vmatpush.msra.mxu0 0.0
    %986 = vmatpush.msra.mxu0 0.0
    %987 = vmatpush.msra.mxu0 0.0
    %988 = vmatpush.msra.mxu0 0.0
    %989 = vmatpush.msra.mxu0 0.0
    %990 = vmatpush.msra.mxu0 0.0
    %991 = vmatpush.msra.mxu0 0.0
    %992 = vmatpush.msra.mxu0 0.0
    %993 = vmatpush.msra.mxu0 0.0
    %994 = vmatpush.msra.mxu0 0.0
    %995 = vmatpush.msra.mxu0 %v163
    %996 = vmatpush.msra.mxu0 %v162
    %997 = vmatpush.msra.mxu0 %v161
    %998 = vmatpush.msra.mxu0 %v160
    %999 = vmatmul.f32.gmra.mxu0 %v981
    %v1000 = vpop.f32.mrf.mxu0
    %v1001 = vadd.f32 0.0, %v1000
    %1002 = vdwg.mxu0
    %v1004 = vrot.slane %v1001, 2
    %v1006 = vadd.f32 %v977, %v1004
    %v1007 = vrot.slane %v979, 2
    %v1008 = vsel %vm171, %v1007, 0
    %1010 = vmatpush.msra.mxu0 0.0
    %1011 = vmatpush.msra.mxu0 0.0
    %1012 = vmatpush.msra.mxu0 0.0
    %1013 = vmatpush.msra.mxu0 0.0
    %1014 = vmatpush.msra.mxu0 0.0
    %1015 = vmatpush.msra.mxu0 0.0
    %1016 = vmatpush.msra.mxu0 0.0
    %1017 = vmatpush.msra.mxu0 0.0
    %1018 = vmatpush.msra.mxu0 0.0
    %1019 = vmatpush.msra.mxu0 0.0
    %1020 = vmatpush.msra.mxu0 0.0
    %1021 = vmatpush.msra.mxu0 0.0
    %1022 = vmatpush.msra.mxu0 %v167
    %1023 = vmatpush.msra.mxu0 %v166
    %1024 = vmatpush.msra.mxu0 %v165
    %1025 = vmatpush.msra.mxu0 %v164
    %1026 = vmatmul.f32.gmra.mxu0 %v1008
    %v1027 = vpop.f32.mrf.mxu0
    %v1028 = vadd.f32 0.0, %v1027
    %1029 = vdwg.mxu0
    %v1030 = vadd.f32 %v978, %v1028
    %v1032 = vrot.slane %v1006, 6
    %v1035 = vrot.slane %v1030, 6
    %v1037 = vsel %vm226, %v1032, %v1035
    %v1038 = vxor.u32 %v1037, 2147483648
    %v1039 = vmul.f32 %v1038, 1.442695
    %v1040 = vpow.pop %v1039
    %v1041 = vadd.f32 %v1040, 1.0
    %v1042 = vrcp.pop %v1041
    %v1043 = vmul.f32 %v1041, %v1042
    %v1044 = vsub.f32 1.0, %v1043
    %v1045 = vmul.f32 %v1042, %v1044
    %v1046 = vadd.f32 %v1042, %v1045
    %vm1047 = vweird.f32 %v1041
    %vm1048 = vweird.f32 %v1042
    %vm1049 = vmor %vm1047, %vm1048
    %v1050 = vsel %vm1049, %v1042, %v1046
    %v1051 = vand.u32 2147483647, %v1041
    %vm1052 = vcmp.eq.f32.partialorder %v1051, 8.507059e+37
    %v1053 = vand.u32 %v1041, 2147483648
    %v1054 = vor.u32 1.1754944e-38, %v1053
    %v1055 = vsel %vm1052, %v1054, %v1050
    %v1056 = vmul.f32 1.0, %v1055
    %v1057 = vtanh.pop %v1037
    %v1058 = vld [vmem:[#allocation6] sm:$0xf]
    %1060 = vrot.lane.b32.xlu0 %v1058, 32
    %v1061 = vpop.permute.xlu0 %1060
    %v1063 = vmul.f32 %v1056, %v1061
    %1065 = vrot.lane.b32.xlu0 %v1057, 64
    %v1066 = vpop.permute.xlu0 %1065
    %v1068 = vmul.f32 %v1056, %v1066
    %1070 = vrot.lane.b32.xlu0 %v1068, 32
    %v1071 = vpop.permute.xlu0 %1070
    %v1073 = vadd.f32 %v1063, %v1071
    %v1074 = vtanh.pop %v1073
    %1076 = vrot.lane.b32.xlu0 %v1074, 64
    %v1077 = vpop.permute.xlu0 %1076
    %v1079 = vmul.f32 %v1056, %v1077
    %1081 = vrot.lane.b32.xlu0 %v1079, 32
    %v1082 = vpop.permute.xlu0 %1081
    %1084 = vst.msk [vmem:[#allocation5] sm:$0xf] %vm157, %v1082
    %1086 = vrot.lane.b32.xlu0 %v1073, 96
    %v1087 = vpop.permute.xlu0 %1086
    %1089 = vst.msk [vmem:[#allocation6] sm:$0xf] %vm157, %v1087
    %1090 = vst.msk [vmem:[#allocation3 + $0xe] sm:$0x3] %vm280, %v1082
    %1091 = vst.msk [vmem:[#allocation4 - $0x2] sm:$0xc] %vm282, %v1082
    %v1092 = vld [vmem:[#allocation3] sm:$0xff]
    %v1093 = vld [vmem:[#allocation3 + $0x8] sm:$0xff]
    %v1094 = vld [vmem:[%s5] sm:$0xff]
    %v1095 = vld [vmem:[%s5 + $0x8] sm:$0xff]
    %v1096 = vld [vmem:[%s5 + $0x10] sm:$0xff]
    %v1097 = vld [vmem:[%s5 + $0x18] sm:$0xff]
    %v1098 = vld [vmem:[%s5 + $0x20] sm:$0xff]
    %v1099 = vld [vmem:[%s5 + $0x28] sm:$0xff]
    %v1100 = vld [vmem:[%s5 + $0x30] sm:$0xff]
    %v1101 = vld [vmem:[%s5 + $0x38] sm:$0xff]
    %v1102 = vld [vmem:[#allocation4] sm:$0xff]
    %v1103 = vld [vmem:[#allocation4 + $0x8] sm:$0xff]
    %v1104 = vld [vmem:[%s5 + $0x40] sm:$0xff]
    %v1105 = vld [vmem:[%s5 + $0x48] sm:$0xff]
    %v1106 = vld [vmem:[%s5 + $0x50] sm:$0xff]
    %v1107 = vld [vmem:[%s5 + $0x58] sm:$0xff]
    %v1108 = vld [vmem:[%s5 + $0x60] sm:$0xff]
    %v1109 = vld [vmem:[%s5 + $0x68] sm:$0xff]
    %v1110 = vld [vmem:[%s5 + $0x70] sm:$0xff]
    %v1111 = vld [vmem:[%s5 + $0x78] sm:$0xff]
    %v1113 = vsel %vm171, %v1102, 0
    %v1116 = vsel %vm171, %v1103, 0
    %1118 = vmatpush.msra.mxu0 0.0
    %1119 = vmatpush.msra.mxu0 0.0
    %1120 = vmatpush.msra.mxu0 0.0
    %1121 = vmatpush.msra.mxu0 0.0
    %1122 = vmatpush.msra.mxu0 0.0
    %1123 = vmatpush.msra.mxu0 0.0
    %1124 = vmatpush.msra.mxu0 0.0
    %1125 = vmatpush.msra.mxu0 0.0
    %1126 = vmatpush.msra.mxu0 0.0
    %1127 = vmatpush.msra.mxu0 0.0
    %1128 = vmatpush.msra.mxu0 0.0
    %1129 = vmatpush.msra.mxu0 0.0
    %1130 = vmatpush.msra.mxu0 %v1110
    %1131 = vmatpush.msra.mxu0 %v1108
    %1132 = vmatpush.msra.mxu0 %v1106
    %1133 = vmatpush.msra.mxu0 %v1104
    %1134 = vmatmul.f32.gmra.mxu0 %v1113
    %v1135 = vpop.f32.mrf.mxu0
    %v1136 = vadd.f32 0.0, %v1135
    %1137 = vmatmul.f32.gmra.mxu0 %v1116
    %v1138 = vpop.f32.mrf.mxu0
    %v1139 = vadd.f32 0.0, %v1138
    %1140 = vdwg.mxu0
    %1141 = vmatpush.msra.mxu0 0.0
    %1142 = vmatpush.msra.mxu0 0.0
    %1143 = vmatpush.msra.mxu0 0.0
    %1144 = vmatpush.msra.mxu0 0.0
    %1145 = vmatpush.msra.mxu0 0.0
    %1146 = vmatpush.msra.mxu0 0.0
    %1147 = vmatpush.msra.mxu0 0.0
    %1148 = vmatpush.msra.mxu0 0.0
    %1149 = vmatpush.msra.mxu0 0.0
    %1150 = vmatpush.msra.mxu0 0.0
    %1151 = vmatpush.msra.mxu0 0.0
    %1152 = vmatpush.msra.mxu0 0.0
    %1153 = vmatpush.msra.mxu0 %v1111
    %1154 = vmatpush.msra.mxu0 %v1109
    %1155 = vmatpush.msra.mxu0 %v1107
    %1156 = vmatpush.msra.mxu0 %v1105
    %1157 = vmatmul.f32.gmra.mxu0 %v1113
    %v1158 = vpop.f32.mrf.mxu0
    %v1159 = vadd.f32 0.0, %v1158
    %1160 = vmatmul.f32.gmra.mxu0 %v1116
    %v1161 = vpop.f32.mrf.mxu0
    %v1162 = vadd.f32 0.0, %v1161
    %1163 = vdwg.mxu0
    %v1165 = vsel %vm171, %v1092, 0
    %v1168 = vsel %vm171, %v1093, 0
    %1170 = vmatpush.msra.mxu0 0.0
    %1171 = vmatpush.msra.mxu0 0.0
    %1172 = vmatpush.msra.mxu0 0.0
    %1173 = vmatpush.msra.mxu0 0.0
    %1174 = vmatpush.msra.mxu0 0.0
    %1175 = vmatpush.msra.mxu0 0.0
    %1176 = vmatpush.msra.mxu0 0.0
    %1177 = vmatpush.msra.mxu0 0.0
    %1178 = vmatpush.msra.mxu0 0.0
    %1179 = vmatpush.msra.mxu0 0.0
    %1180 = vmatpush.msra.mxu0 0.0
    %1181 = vmatpush.msra.mxu0 0.0
    %1182 = vmatpush.msra.mxu0 %v1100
    %1183 = vmatpush.msra.mxu0 %v1098
    %1184 = vmatpush.msra.mxu0 %v1096
    %1185 = vmatpush.msra.mxu0 %v1094
    %1186 = vmatmul.f32.gmra.mxu0 %v1165
    %v1187 = vpop.f32.mrf.mxu0
    %v1188 = vadd.f32 %v1136, %v1187
    %1189 = vmatmul.f32.gmra.mxu0 %v1168
    %v1190 = vpop.f32.mrf.mxu0
    %v1191 = vadd.f32 %v1139, %v1190
    %1192 = vdwg.mxu0
    %1193 = vmatpush.msra.mxu0 0.0
    %1194 = vmatpush.msra.mxu0 0.0
    %1195 = vmatpush.msra.mxu0 0.0
    %1196 = vmatpush.msra.mxu0 0.0
    %1197 = vmatpush.msra.mxu0 0.0
    %1198 = vmatpush.msra.mxu0 0.0
    %1199 = vmatpush.msra.mxu0 0.0
    %1200 = vmatpush.msra.mxu0 0.0
    %1201 = vmatpush.msra.mxu0 0.0
    %1202 = vmatpush.msra.mxu0 0.0
    %1203 = vmatpush.msra.mxu0 0.0
    %1204 = vmatpush.msra.mxu0 0.0
    %1205 = vmatpush.msra.mxu0 %v1101
    %1206 = vmatpush.msra.mxu0 %v1099
    %1207 = vmatpush.msra.mxu0 %v1097
    %1208 = vmatpush.msra.mxu0 %v1095
    %1209 = vmatmul.f32.gmra.mxu0 %v1165
    %v1210 = vpop.f32.mrf.mxu0
    %v1211 = vadd.f32 %v1159, %v1210
    %1212 = vmatmul.f32.gmra.mxu0 %v1168
    %v1213 = vpop.f32.mrf.mxu0
    %v1214 = vadd.f32 %v1162, %v1213
    %1215 = vdwg.mxu0
    %v1216 = vld [vmem:[%s6] sm:$0x3]
    %v1218 = vperm.slane %v1216, 0
    %v1219 = vperm.slane %v1216, 1
    %v1222 = vadd.f32 %v1188, %v1218
    %v1223 = vadd.f32 %v1211, %v1219
    %v1224 = vadd.f32 %v1191, %v1218
    %v1225 = vadd.f32 %v1214, %v1219
    %1226 = vst [vmem:[#allocation2] sm:$0xff] %v1222
    %1227 = vst [vmem:[#allocation2 + $0x8] sm:$0xff] %v1223
    %1228 = vst [vmem:[#allocation2 + $0x10] sm:$0xff] %v1224
    %1229 = vst [vmem:[#allocation2 + $0x18] sm:$0xff] %v1225
    %1230 = vst.msk [vmem:[#allocation5] sm:$0xf] %vm157, 0.0
    %1231 = vst.msk [vmem:[#allocation6] sm:$0xf] %vm157, 0.0
    %v1232 = vld [vmem:[#allocation9] sm:$0xff]
    %v1233 = vld [vmem:[#allocation9 + $0x8] sm:$0xff]
    %v1234 = vld [vmem:[#allocation9 + $0x10] sm:$0xff]
    %v1235 = vld [vmem:[#allocation9 + $0x18] sm:$0xff]
    %v1236 = vld [vmem:[#allocation11] sm:$0xff]
    %v1237 = vld [vmem:[#allocation11 + $0x8] sm:$0xff]
    %v1238 = vld [vmem:[#allocation11 + $0x10] sm:$0xff]
    %v1239 = vld [vmem:[#allocation11 + $0x18] sm:$0xff]
    %v1240 = vld [vmem:[#allocation2] sm:$0x3]
    %v1241 = vld [vmem:[#allocation2 + $0x18] sm:$0xc0]
    %v1242 = vld [vmem:[#allocation5] sm:$0xf]
    %v1244 = vsel %vm171, %v1242, 0
    %1246 = vmatpush.msra.mxu0 0.0
    %1247 = vmatpush.msra.mxu0 0.0
    %1248 = vmatpush.msra.mxu0 0.0
    %1249 = vmatpush.msra.mxu0 0.0
    %1250 = vmatpush.msra.mxu0 0.0
    %1251 = vmatpush.msra.mxu0 0.0
    %1252 = vmatpush.msra.mxu0 0.0
    %1253 = vmatpush.msra.mxu0 0.0
    %1254 = vmatpush.msra.mxu0 0.0
    %1255 = vmatpush.msra.mxu0 0.0
    %1256 = vmatpush.msra.mxu0 0.0
    %1257 = vmatpush.msra.mxu0 0.0
    %1258 = vmatpush.msra.mxu0 %v1235
    %1259 = vmatpush.msra.mxu0 %v1234
    %1260 = vmatpush.msra.mxu0 %v1233
    %1261 = vmatpush.msra.mxu0 %v1232
    %1262 = vmatmul.f32.gmra.mxu0 %v1244
    %v1263 = vpop.f32.mrf.mxu0
    %v1264 = vadd.f32 0.0, %v1263
    %1265 = vdwg.mxu0
    %v1266 = vadd.f32 %v1240, %v1264
    %v1267 = vrot.slane %v1242, 2
    %v1268 = vsel %vm171, %v1267, 0
    %1270 = vmatpush.msra.mxu0 0.0
    %1271 = vmatpush.msra.mxu0 0.0
    %1272 = vmatpush.msra.mxu0 0.0
    %1273 = vmatpush.msra.mxu0 0.0
    %1274 = vmatpush.msra.mxu0 0.0
    %1275 = vmatpush.msra.mxu0 0.0
    %1276 = vmatpush.msra.mxu0 0.0
    %1277 = vmatpush.msra.mxu0 0.0
    %1278 = vmatpush.msra.mxu0 0.0
    %1279 = vmatpush.msra.mxu0 0.0
    %1280 = vmatpush.msra.mxu0 0.0
    %1281 = vmatpush.msra.mxu0 0.0
    %1282 = vmatpush.msra.mxu0 %v1239
    %1283 = vmatpush.msra.mxu0 %v1238
    %1284 = vmatpush.msra.mxu0 %v1237
    %1285 = vmatpush.msra.mxu0 %v1236
    %1286 = vmatmul.f32.gmra.mxu0 %v1268
    %v1287 = vpop.f32.mrf.mxu0
    %v1288 = vadd.f32 0.0, %v1287
    %1289 = vdwg.mxu0
    %v1291 = vrot.slane %v1288, 2
    %v1293 = vadd.f32 %v1241, %v1291
    %v1295 = vrot.slane %v1293, 4
    %v1297 = vsel %vm226, %v1266, %v1295
    %v1298 = vxor.u32 %v1297, 2147483648
    %v1299 = vmul.f32 %v1298, 1.442695
    %v1300 = vpow.pop %v1299
    %v1301 = vadd.f32 %v1300, 1.0
    %v1302 = vrcp.pop %v1301
    %v1303 = vmul.f32 %v1301, %v1302
    %v1304 = vsub.f32 1.0, %v1303
    %v1305 = vmul.f32 %v1302, %v1304
    %v1306 = vadd.f32 %v1302, %v1305
    %vm1307 = vweird.f32 %v1301
    %vm1308 = vweird.f32 %v1302
    %vm1309 = vmor %vm1307, %vm1308
    %v1310 = vsel %vm1309, %v1302, %v1306
    %v1311 = vand.u32 2147483647, %v1301
    %vm1312 = vcmp.eq.f32.partialorder %v1311, 8.507059e+37
    %v1313 = vand.u32 %v1301, 2147483648
    %v1314 = vor.u32 1.1754944e-38, %v1313
    %v1315 = vsel %vm1312, %v1314, %v1310
    %v1316 = vmul.f32 1.0, %v1315
    %v1317 = vtanh.pop %v1297
    %v1318 = vld [vmem:[#allocation6] sm:$0xf]
    %1320 = vrot.lane.b32.xlu0 %v1318, 32
    %v1321 = vpop.permute.xlu0 %1320
    %v1323 = vmul.f32 %v1316, %v1321
    %1325 = vrot.lane.b32.xlu0 %v1317, 64
    %v1326 = vpop.permute.xlu0 %1325
    %v1328 = vmul.f32 %v1316, %v1326
    %1330 = vrot.lane.b32.xlu0 %v1328, 32
    %v1331 = vpop.permute.xlu0 %1330
    %v1333 = vadd.f32 %v1323, %v1331
    %v1334 = vtanh.pop %v1333
    %1336 = vrot.lane.b32.xlu0 %v1334, 64
    %v1337 = vpop.permute.xlu0 %1336
    %v1339 = vmul.f32 %v1316, %v1337
    %1341 = vrot.lane.b32.xlu0 %v1339, 32
    %v1342 = vpop.permute.xlu0 %1341
    %1344 = vst.msk [vmem:[#allocation5] sm:$0xf] %vm157, %v1342
    %1346 = vrot.lane.b32.xlu0 %v1333, 96
    %v1347 = vpop.permute.xlu0 %1346
    %1349 = vst.msk [vmem:[#allocation6] sm:$0xf] %vm157, %v1347
    %1350 = vst.msk [vmem:[#allocation3] sm:$0x3] %vm280, %v1342
    %1351 = vst.msk [vmem:[#allocation4 + $0xc] sm:$0xc] %vm282, %v1342
    %v1352 = vld [vmem:[#allocation2] sm:$0xc]
    %v1353 = vld [vmem:[#allocation2 + $0x18] sm:$0x30]
    %v1354 = vld [vmem:[#allocation5] sm:$0xf]
    %v1356 = vsel %vm171, %v1354, 0
    %1358 = vmatpush.msra.mxu0 0.0
    %1359 = vmatpush.msra.mxu0 0.0
    %1360 = vmatpush.msra.mxu0 0.0
    %1361 = vmatpush.msra.mxu0 0.0
    %1362 = vmatpush.msra.mxu0 0.0
    %1363 = vmatpush.msra.mxu0 0.0
    %1364 = vmatpush.msra.mxu0 0.0
    %1365 = vmatpush.msra.mxu0 0.0
    %1366 = vmatpush.msra.mxu0 0.0
    %1367 = vmatpush.msra.mxu0 0.0
    %1368 = vmatpush.msra.mxu0 0.0
    %1369 = vmatpush.msra.mxu0 0.0
    %1370 = vmatpush.msra.mxu0 %v1235
    %1371 = vmatpush.msra.mxu0 %v1234
    %1372 = vmatpush.msra.mxu0 %v1233
    %1373 = vmatpush.msra.mxu0 %v1232
    %1374 = vmatmul.f32.gmra.mxu0 %v1356
    %v1375 = vpop.f32.mrf.mxu0
    %v1376 = vadd.f32 0.0, %v1375
    %1377 = vdwg.mxu0
    %v1379 = vrot.slane %v1376, 6
    %v1381 = vadd.f32 %v1352, %v1379
    %v1382 = vrot.slane %v1354, 2
    %v1383 = vsel %vm171, %v1382, 0
    %1385 = vmatpush.msra.mxu0 0.0
    %1386 = vmatpush.msra.mxu0 0.0
    %1387 = vmatpush.msra.mxu0 0.0
    %1388 = vmatpush.msra.mxu0 0.0
    %1389 = vmatpush.msra.mxu0 0.0
    %1390 = vmatpush.msra.mxu0 0.0
    %1391 = vmatpush.msra.mxu0 0.0
    %1392 = vmatpush.msra.mxu0 0.0
    %1393 = vmatpush.msra.mxu0 0.0
    %1394 = vmatpush.msra.mxu0 0.0
    %1395 = vmatpush.msra.mxu0 0.0
    %1396 = vmatpush.msra.mxu0 0.0
    %1397 = vmatpush.msra.mxu0 %v1239
    %1398 = vmatpush.msra.mxu0 %v1238
    %1399 = vmatpush.msra.mxu0 %v1237
    %1400 = vmatpush.msra.mxu0 %v1236
    %1401 = vmatmul.f32.gmra.mxu0 %v1383
    %v1402 = vpop.f32.mrf.mxu0
    %v1403 = vadd.f32 0.0, %v1402
    %1404 = vdwg.mxu0
    %v1406 = vrot.slane %v1403, 4
    %v1408 = vadd.f32 %v1353, %v1406
    %v1410 = vrot.slane %v1381, 2
    %v1413 = vrot.slane %v1408, 2
    %v1415 = vsel %vm226, %v1410, %v1413
    %v1416 = vxor.u32 %v1415, 2147483648
    %v1417 = vmul.f32 %v1416, 1.442695
    %v1418 = vpow.pop %v1417
    %v1419 = vadd.f32 %v1418, 1.0
    %v1420 = vrcp.pop %v1419
    %v1421 = vmul.f32 %v1419, %v1420
    %v1422 = vsub.f32 1.0, %v1421
    %v1423 = vmul.f32 %v1420, %v1422
    %v1424 = vadd.f32 %v1420, %v1423
    %vm1425 = vweird.f32 %v1419
    %vm1426 = vweird.f32 %v1420
    %vm1427 = vmor %vm1425, %vm1426
    %v1428 = vsel %vm1427, %v1420, %v1424
    %v1429 = vand.u32 2147483647, %v1419
    %vm1430 = vcmp.eq.f32.partialorder %v1429, 8.507059e+37
    %v1431 = vand.u32 %v1419, 2147483648
    %v1432 = vor.u32 1.1754944e-38, %v1431
    %v1433 = vsel %vm1430, %v1432, %v1428
    %v1434 = vmul.f32 1.0, %v1433
    %v1435 = vtanh.pop %v1415
    %v1436 = vld [vmem:[#allocation6] sm:$0xf]
    %1438 = vrot.lane.b32.xlu0 %v1436, 32
    %v1439 = vpop.permute.xlu0 %1438
    %v1441 = vmul.f32 %v1434, %v1439
    %1443 = vrot.lane.b32.xlu0 %v1435, 64
    %v1444 = vpop.permute.xlu0 %1443
    %v1446 = vmul.f32 %v1434, %v1444
    %1448 = vrot.lane.b32.xlu0 %v1446, 32
    %v1449 = vpop.permute.xlu0 %1448
    %v1451 = vadd.f32 %v1441, %v1449
    %v1452 = vtanh.pop %v1451
    %1454 = vrot.lane.b32.xlu0 %v1452, 64
    %v1455 = vpop.permute.xlu0 %1454
    %v1457 = vmul.f32 %v1434, %v1455
    %1459 = vrot.lane.b32.xlu0 %v1457, 32
    %v1460 = vpop.permute.xlu0 %1459
    %1462 = vst.msk [vmem:[#allocation5] sm:$0xf] %vm157, %v1460
    %1464 = vrot.lane.b32.xlu0 %v1451, 96
    %v1465 = vpop.permute.xlu0 %1464
    %1467 = vst.msk [vmem:[#allocation6] sm:$0xf] %vm157, %v1465
    %1468 = vst.msk [vmem:[#allocation3 + $0x2] sm:$0x3] %vm280, %v1460
    %1469 = vst.msk [vmem:[#allocation4 + $0xa] sm:$0xc] %vm282, %v1460
    %v1470 = vld [vmem:[#allocation2] sm:$0x30]
    %v1471 = vld [vmem:[#allocation2 + $0x18] sm:$0xc]
    %v1472 = vld [vmem:[#allocation5] sm:$0xf]
    %v1474 = vsel %vm171, %v1472, 0
    %1476 = vmatpush.msra.mxu0 0.0
    %1477 = vmatpush.msra.mxu0 0.0
    %1478 = vmatpush.msra.mxu0 0.0
    %1479 = vmatpush.msra.mxu0 0.0
    %1480 = vmatpush.msra.mxu0 0.0
    %1481 = vmatpush.msra.mxu0 0.0
    %1482 = vmatpush.msra.mxu0 0.0
    %1483 = vmatpush.msra.mxu0 0.0
    %1484 = vmatpush.msra.mxu0 0.0
    %1485 = vmatpush.msra.mxu0 0.0
    %1486 = vmatpush.msra.mxu0 0.0
    %1487 = vmatpush.msra.mxu0 0.0
    %1488 = vmatpush.msra.mxu0 %v1235
    %1489 = vmatpush.msra.mxu0 %v1234
    %1490 = vmatpush.msra.mxu0 %v1233
    %1491 = vmatpush.msra.mxu0 %v1232
    %1492 = vmatmul.f32.gmra.mxu0 %v1474
    %v1493 = vpop.f32.mrf.mxu0
    %v1494 = vadd.f32 0.0, %v1493
    %1495 = vdwg.mxu0
    %v1497 = vrot.slane %v1494, 4
    %v1499 = vadd.f32 %v1470, %v1497
    %v1500 = vrot.slane %v1472, 2
    %v1501 = vsel %vm171, %v1500, 0
    %1503 = vmatpush.msra.mxu0 0.0
    %1504 = vmatpush.msra.mxu0 0.0
    %1505 = vmatpush.msra.mxu0 0.0
    %1506 = vmatpush.msra.mxu0 0.0
    %1507 = vmatpush.msra.mxu0 0.0
    %1508 = vmatpush.msra.mxu0 0.0
    %1509 = vmatpush.msra.mxu0 0.0
    %1510 = vmatpush.msra.mxu0 0.0
    %1511 = vmatpush.msra.mxu0 0.0
    %1512 = vmatpush.msra.mxu0 0.0
    %1513 = vmatpush.msra.mxu0 0.0
    %1514 = vmatpush.msra.mxu0 0.0
    %1515 = vmatpush.msra.mxu0 %v1239
    %1516 = vmatpush.msra.mxu0 %v1238
    %1517 = vmatpush.msra.mxu0 %v1237
    %1518 = vmatpush.msra.mxu0 %v1236
    %1519 = vmatmul.f32.gmra.mxu0 %v1501
    %v1520 = vpop.f32.mrf.mxu0
    %v1521 = vadd.f32 0.0, %v1520
    %1522 = vdwg.mxu0
    %v1524 = vrot.slane %v1521, 6
    %v1526 = vadd.f32 %v1471, %v1524
    %v1528 = vrot.slane %v1499, 4
    %v1530 = vsel %vm226, %v1528, %v1526
    %v1531 = vxor.u32 %v1530, 2147483648
    %v1532 = vmul.f32 %v1531, 1.442695
    %v1533 = vpow.pop %v1532
    %v1534 = vadd.f32 %v1533, 1.0
    %v1535 = vrcp.pop %v1534
    %v1536 = vmul.f32 %v1534, %v1535
    %v1537 = vsub.f32 1.0, %v1536
    %v1538 = vmul.f32 %v1535, %v1537
    %v1539 = vadd.f32 %v1535, %v1538
    %vm1540 = vweird.f32 %v1534
    %vm1541 = vweird.f32 %v1535
    %vm1542 = vmor %vm1540, %vm1541
    %v1543 = vsel %vm1542, %v1535, %v1539
    %v1544 = vand.u32 2147483647, %v1534
    %vm1545 = vcmp.eq.f32.partialorder %v1544, 8.507059e+37
    %v1546 = vand.u32 %v1534, 2147483648
    %v1547 = vor.u32 1.1754944e-38, %v1546
    %v1548 = vsel %vm1545, %v1547, %v1543
    %v1549 = vmul.f32 1.0, %v1548
    %v1550 = vtanh.pop %v1530
    %v1551 = vld [vmem:[#allocation6] sm:$0xf]
    %1553 = vrot.lane.b32.xlu0 %v1551, 32
    %v1554 = vpop.permute.xlu0 %1553
    %v1556 = vmul.f32 %v1549, %v1554
    %1558 = vrot.lane.b32.xlu0 %v1550, 64
    %v1559 = vpop.permute.xlu0 %1558
    %v1561 = vmul.f32 %v1549, %v1559
    %1563 = vrot.lane.b32.xlu0 %v1561, 32
    %v1564 = vpop.permute.xlu0 %1563
    %v1566 = vadd.f32 %v1556, %v1564
    %v1567 = vtanh.pop %v1566
    %1569 = vrot.lane.b32.xlu0 %v1567, 64
    %v1570 = vpop.permute.xlu0 %1569
    %v1572 = vmul.f32 %v1549, %v1570
    %1574 = vrot.lane.b32.xlu0 %v1572, 32
    %v1575 = vpop.permute.xlu0 %1574
    %1577 = vst.msk [vmem:[#allocation5] sm:$0xf] %vm157, %v1575
    %1579 = vrot.lane.b32.xlu0 %v1566, 96
    %v1580 = vpop.permute.xlu0 %1579
    %1582 = vst.msk [vmem:[#allocation6] sm:$0xf] %vm157, %v1580
    %1583 = vst.msk [vmem:[#allocation3 + $0x4] sm:$0x3] %vm280, %v1575
    %1584 = vst.msk [vmem:[#allocation4 + $0x8] sm:$0xc] %vm282, %v1575
    %v1585 = vld [vmem:[#allocation2] sm:$0xc0]
    %v1586 = vld [vmem:[#allocation2 + $0x18] sm:$0x3]
    %v1587 = vld [vmem:[#allocation5] sm:$0xf]
    %v1589 = vsel %vm171, %v1587, 0
    %1591 = vmatpush.msra.mxu0 0.0
    %1592 = vmatpush.msra.mxu0 0.0
    %1593 = vmatpush.msra.mxu0 0.0
    %1594 = vmatpush.msra.mxu0 0.0
    %1595 = vmatpush.msra.mxu0 0.0
    %1596 = vmatpush.msra.mxu0 0.0
    %1597 = vmatpush.msra.mxu0 0.0
    %1598 = vmatpush.msra.mxu0 0.0
    %1599 = vmatpush.msra.mxu0 0.0
    %1600 = vmatpush.msra.mxu0 0.0
    %1601 = vmatpush.msra.mxu0 0.0
    %1602 = vmatpush.msra.mxu0 0.0
    %1603 = vmatpush.msra.mxu0 %v1235
    %1604 = vmatpush.msra.mxu0 %v1234
    %1605 = vmatpush.msra.mxu0 %v1233
    %1606 = vmatpush.msra.mxu0 %v1232
    %1607 = vmatmul.f32.gmra.mxu0 %v1589
    %v1608 = vpop.f32.mrf.mxu0
    %v1609 = vadd.f32 0.0, %v1608
    %1610 = vdwg.mxu0
    %v1612 = vrot.slane %v1609, 2
    %v1614 = vadd.f32 %v1585, %v1612
    %v1615 = vrot.slane %v1587, 2
    %v1616 = vsel %vm171, %v1615, 0
    %1618 = vmatpush.msra.mxu0 0.0
    %1619 = vmatpush.msra.mxu0 0.0
    %1620 = vmatpush.msra.mxu0 0.0
    %1621 = vmatpush.msra.mxu0 0.0
    %1622 = vmatpush.msra.mxu0 0.0
    %1623 = vmatpush.msra.mxu0 0.0
    %1624 = vmatpush.msra.mxu0 0.0
    %1625 = vmatpush.msra.mxu0 0.0
    %1626 = vmatpush.msra.mxu0 0.0
    %1627 = vmatpush.msra.mxu0 0.0
    %1628 = vmatpush.msra.mxu0 0.0
    %1629 = vmatpush.msra.mxu0 0.0
    %1630 = vmatpush.msra.mxu0 %v1239
    %1631 = vmatpush.msra.mxu0 %v1238
    %1632 = vmatpush.msra.mxu0 %v1237
    %1633 = vmatpush.msra.mxu0 %v1236
    %1634 = vmatmul.f32.gmra.mxu0 %v1616
    %v1635 = vpop.f32.mrf.mxu0
    %v1636 = vadd.f32 0.0, %v1635
    %1637 = vdwg.mxu0
    %v1638 = vadd.f32 %v1586, %v1636
    %v1640 = vrot.slane %v1614, 6
    %v1643 = vrot.slane %v1638, 6
    %v1645 = vsel %vm226, %v1640, %v1643
    %v1646 = vxor.u32 %v1645, 2147483648
    %v1647 = vmul.f32 %v1646, 1.442695
    %v1648 = vpow.pop %v1647
    %v1649 = vadd.f32 %v1648, 1.0
    %v1650 = vrcp.pop %v1649
    %v1651 = vmul.f32 %v1649, %v1650
    %v1652 = vsub.f32 1.0, %v1651
    %v1653 = vmul.f32 %v1650, %v1652
    %v1654 = vadd.f32 %v1650, %v1653
    %vm1655 = vweird.f32 %v1649
    %vm1656 = vweird.f32 %v1650
    %vm1657 = vmor %vm1655, %vm1656
    %v1658 = vsel %vm1657, %v1650, %v1654
    %v1659 = vand.u32 2147483647, %v1649
    %vm1660 = vcmp.eq.f32.partialorder %v1659, 8.507059e+37
    %v1661 = vand.u32 %v1649, 2147483648
    %v1662 = vor.u32 1.1754944e-38, %v1661
    %v1663 = vsel %vm1660, %v1662, %v1658
    %v1664 = vmul.f32 1.0, %v1663
    %v1665 = vtanh.pop %v1645
    %v1666 = vld [vmem:[#allocation6] sm:$0xf]
    %1668 = vrot.lane.b32.xlu0 %v1666, 32
    %v1669 = vpop.permute.xlu0 %1668
    %v1671 = vmul.f32 %v1664, %v1669
    %1673 = vrot.lane.b32.xlu0 %v1665, 64
    %v1674 = vpop.permute.xlu0 %1673
    %v1676 = vmul.f32 %v1664, %v1674
    %1678 = vrot.lane.b32.xlu0 %v1676, 32
    %v1679 = vpop.permute.xlu0 %1678
    %v1681 = vadd.f32 %v1671, %v1679
    %v1682 = vtanh.pop %v1681
    %1684 = vrot.lane.b32.xlu0 %v1682, 64
    %v1685 = vpop.permute.xlu0 %1684
    %v1687 = vmul.f32 %v1664, %v1685
    %1689 = vrot.lane.b32.xlu0 %v1687, 32
    %v1690 = vpop.permute.xlu0 %1689
    %1692 = vst.msk [vmem:[#allocation5] sm:$0xf] %vm157, %v1690
    %1694 = vrot.lane.b32.xlu0 %v1681, 96
    %v1695 = vpop.permute.xlu0 %1694
    %1697 = vst.msk [vmem:[#allocation6] sm:$0xf] %vm157, %v1695
    %1698 = vst.msk [vmem:[#allocation3 + $0x6] sm:$0x3] %vm280, %v1690
    %1699 = vst.msk [vmem:[#allocation4 + $0x6] sm:$0xc] %vm282, %v1690
    %v1700 = vld [vmem:[#allocation2 + $0x10] sm:$0x3]
    %v1701 = vld [vmem:[#allocation2 + $0x8] sm:$0xc0]
    %v1702 = vld [vmem:[#allocation5] sm:$0xf]
    %v1704 = vsel %vm171, %v1702, 0
    %1706 = vmatpush.msra.mxu0 0.0
    %1707 = vmatpush.msra.mxu0 0.0
    %1708 = vmatpush.msra.mxu0 0.0
    %1709 = vmatpush.msra.mxu0 0.0
    %1710 = vmatpush.msra.mxu0 0.0
    %1711 = vmatpush.msra.mxu0 0.0
    %1712 = vmatpush.msra.mxu0 0.0
    %1713 = vmatpush.msra.mxu0 0.0
    %1714 = vmatpush.msra.mxu0 0.0
    %1715 = vmatpush.msra.mxu0 0.0
    %1716 = vmatpush.msra.mxu0 0.0
    %1717 = vmatpush.msra.mxu0 0.0
    %1718 = vmatpush.msra.mxu0 %v1235
    %1719 = vmatpush.msra.mxu0 %v1234
    %1720 = vmatpush.msra.mxu0 %v1233
    %1721 = vmatpush.msra.mxu0 %v1232
    %1722 = vmatmul.f32.gmra.mxu0 %v1704
    %v1723 = vpop.f32.mrf.mxu0
    %v1724 = vadd.f32 0.0, %v1723
    %1725 = vdwg.mxu0
    %v1726 = vadd.f32 %v1700, %v1724
    %v1727 = vrot.slane %v1702, 2
    %v1728 = vsel %vm171, %v1727, 0
    %1730 = vmatpush.msra.mxu0 0.0
    %1731 = vmatpush.msra.mxu0 0.0
    %1732 = vmatpush.msra.mxu0 0.0
    %1733 = vmatpush.msra.mxu0 0.0
    %1734 = vmatpush.msra.mxu0 0.0
    %1735 = vmatpush.msra.mxu0 0.0
    %1736 = vmatpush.msra.mxu0 0.0
    %1737 = vmatpush.msra.mxu0 0.0
    %1738 = vmatpush.msra.mxu0 0.0
    %1739 = vmatpush.msra.mxu0 0.0
    %1740 = vmatpush.msra.mxu0 0.0
    %1741 = vmatpush.msra.mxu0 0.0
    %1742 = vmatpush.msra.mxu0 %v1239
    %1743 = vmatpush.msra.mxu0 %v1238
    %1744 = vmatpush.msra.mxu0 %v1237
    %1745 = vmatpush.msra.mxu0 %v1236
    %1746 = vmatmul.f32.gmra.mxu0 %v1728
    %v1747 = vpop.f32.mrf.mxu0
    %v1748 = vadd.f32 0.0, %v1747
    %1749 = vdwg.mxu0
    %v1751 = vrot.slane %v1748, 2
    %v1753 = vadd.f32 %v1701, %v1751
    %v1755 = vrot.slane %v1753, 4
    %v1757 = vsel %vm226, %v1726, %v1755
    %v1758 = vxor.u32 %v1757, 2147483648
    %v1759 = vmul.f32 %v1758, 1.442695
    %v1760 = vpow.pop %v1759
    %v1761 = vadd.f32 %v1760, 1.0
    %v1762 = vrcp.pop %v1761
    %v1763 = vmul.f32 %v1761, %v1762
    %v1764 = vsub.f32 1.0, %v1763
    %v1765 = vmul.f32 %v1762, %v1764
    %v1766 = vadd.f32 %v1762, %v1765
    %vm1767 = vweird.f32 %v1761
    %vm1768 = vweird.f32 %v1762
    %vm1769 = vmor %vm1767, %vm1768
    %v1770 = vsel %vm1769, %v1762, %v1766
    %v1771 = vand.u32 2147483647, %v1761
    %vm1772 = vcmp.eq.f32.partialorder %v1771, 8.507059e+37
    %v1773 = vand.u32 %v1761, 2147483648
    %v1774 = vor.u32 1.1754944e-38, %v1773
    %v1775 = vsel %vm1772, %v1774, %v1770
    %v1776 = vmul.f32 1.0, %v1775
    %v1777 = vtanh.pop %v1757
    %v1778 = vld [vmem:[#allocation6] sm:$0xf]
    %1780 = vrot.lane.b32.xlu0 %v1778, 32
    %v1781 = vpop.permute.xlu0 %1780
    %v1783 = vmul.f32 %v1776, %v1781
    %1785 = vrot.lane.b32.xlu0 %v1777, 64
    %v1786 = vpop.permute.xlu0 %1785
    %v1788 = vmul.f32 %v1776, %v1786
    %1790 = vrot.lane.b32.xlu0 %v1788, 32
    %v1791 = vpop.permute.xlu0 %1790
    %v1793 = vadd.f32 %v1783, %v1791
    %v1794 = vtanh.pop %v1793
    %1796 = vrot.lane.b32.xlu0 %v1794, 64
    %v1797 = vpop.permute.xlu0 %1796
    %v1799 = vmul.f32 %v1776, %v1797
    %1801 = vrot.lane.b32.xlu0 %v1799, 32
    %v1802 = vpop.permute.xlu0 %1801
    %1804 = vst.msk [vmem:[#allocation5] sm:$0xf] %vm157, %v1802
    %1806 = vrot.lane.b32.xlu0 %v1793, 96
    %v1807 = vpop.permute.xlu0 %1806
    %1809 = vst.msk [vmem:[#allocation6] sm:$0xf] %vm157, %v1807
    %1810 = vst.msk [vmem:[#allocation3 + $0x8] sm:$0x3] %vm280, %v1802
    %1811 = vst.msk [vmem:[#allocation4 + $0x4] sm:$0xc] %vm282, %v1802
    %v1812 = vld [vmem:[#allocation2 + $0x10] sm:$0xc]
    %v1813 = vld [vmem:[#allocation2 + $0x8] sm:$0x30]
    %v1814 = vld [vmem:[#allocation5] sm:$0xf]
    %v1816 = vsel %vm171, %v1814, 0
    %1818 = vmatpush.msra.mxu0 0.0
    %1819 = vmatpush.msra.mxu0 0.0
    %1820 = vmatpush.msra.mxu0 0.0
    %1821 = vmatpush.msra.mxu0 0.0
    %1822 = vmatpush.msra.mxu0 0.0
    %1823 = vmatpush.msra.mxu0 0.0
    %1824 = vmatpush.msra.mxu0 0.0
    %1825 = vmatpush.msra.mxu0 0.0
    %1826 = vmatpush.msra.mxu0 0.0
    %1827 = vmatpush.msra.mxu0 0.0
    %1828 = vmatpush.msra.mxu0 0.0
    %1829 = vmatpush.msra.mxu0 0.0
    %1830 = vmatpush.msra.mxu0 %v1235
    %1831 = vmatpush.msra.mxu0 %v1234
    %1832 = vmatpush.msra.mxu0 %v1233
    %1833 = vmatpush.msra.mxu0 %v1232
    %1834 = vmatmul.f32.gmra.mxu0 %v1816
    %v1835 = vpop.f32.mrf.mxu0
    %v1836 = vadd.f32 0.0, %v1835
    %1837 = vdwg.mxu0
    %v1839 = vrot.slane %v1836, 6
    %v1841 = vadd.f32 %v1812, %v1839
    %v1842 = vrot.slane %v1814, 2
    %v1843 = vsel %vm171, %v1842, 0
    %1845 = vmatpush.msra.mxu0 0.0
    %1846 = vmatpush.msra.mxu0 0.0
    %1847 = vmatpush.msra.mxu0 0.0
    %1848 = vmatpush.msra.mxu0 0.0
    %1849 = vmatpush.msra.mxu0 0.0
    %1850 = vmatpush.msra.mxu0 0.0
    %1851 = vmatpush.msra.mxu0 0.0
    %1852 = vmatpush.msra.mxu0 0.0
    %1853 = vmatpush.msra.mxu0 0.0
    %1854 = vmatpush.msra.mxu0 0.0
    %1855 = vmatpush.msra.mxu0 0.0
    %1856 = vmatpush.msra.mxu0 0.0
    %1857 = vmatpush.msra.mxu0 %v1239
    %1858 = vmatpush.msra.mxu0 %v1238
    %1859 = vmatpush.msra.mxu0 %v1237
    %1860 = vmatpush.msra.mxu0 %v1236
    %1861 = vmatmul.f32.gmra.mxu0 %v1843
    %v1862 = vpop.f32.mrf.mxu0
    %v1863 = vadd.f32 0.0, %v1862
    %1864 = vdwg.mxu0
    %v1866 = vrot.slane %v1863, 4
    %v1868 = vadd.f32 %v1813, %v1866
    %v1870 = vrot.slane %v1841, 2
    %v1873 = vrot.slane %v1868, 2
    %v1875 = vsel %vm226, %v1870, %v1873
    %v1876 = vxor.u32 %v1875, 2147483648
    %v1877 = vmul.f32 %v1876, 1.442695
    %v1878 = vpow.pop %v1877
    %v1879 = vadd.f32 %v1878, 1.0
    %v1880 = vrcp.pop %v1879
    %v1881 = vmul.f32 %v1879, %v1880
    %v1882 = vsub.f32 1.0, %v1881
    %v1883 = vmul.f32 %v1880, %v1882
    %v1884 = vadd.f32 %v1880, %v1883
    %vm1885 = vweird.f32 %v1879
    %vm1886 = vweird.f32 %v1880
    %vm1887 = vmor %vm1885, %vm1886
    %v1888 = vsel %vm1887, %v1880, %v1884
    %v1889 = vand.u32 2147483647, %v1879
    %vm1890 = vcmp.eq.f32.partialorder %v1889, 8.507059e+37
    %v1891 = vand.u32 %v1879, 2147483648
    %v1892 = vor.u32 1.1754944e-38, %v1891
    %v1893 = vsel %vm1890, %v1892, %v1888
    %v1894 = vmul.f32 1.0, %v1893
    %v1895 = vtanh.pop %v1875
    %v1896 = vld [vmem:[#allocation6] sm:$0xf]
    %1898 = vrot.lane.b32.xlu0 %v1896, 32
    %v1899 = vpop.permute.xlu0 %1898
    %v1901 = vmul.f32 %v1894, %v1899
    %1903 = vrot.lane.b32.xlu0 %v1895, 64
    %v1904 = vpop.permute.xlu0 %1903
    %v1906 = vmul.f32 %v1894, %v1904
    %1908 = vrot.lane.b32.xlu0 %v1906, 32
    %v1909 = vpop.permute.xlu0 %1908
    %v1911 = vadd.f32 %v1901, %v1909
    %v1912 = vtanh.pop %v1911
    %1914 = vrot.lane.b32.xlu0 %v1912, 64
    %v1915 = vpop.permute.xlu0 %1914
    %v1917 = vmul.f32 %v1894, %v1915
    %1919 = vrot.lane.b32.xlu0 %v1917, 32
    %v1920 = vpop.permute.xlu0 %1919
    %1922 = vst.msk [vmem:[#allocation5] sm:$0xf] %vm157, %v1920
    %1924 = vrot.lane.b32.xlu0 %v1911, 96
    %v1925 = vpop.permute.xlu0 %1924
    %1927 = vst.msk [vmem:[#allocation6] sm:$0xf] %vm157, %v1925
    %1928 = vst.msk [vmem:[#allocation3 + $0xa] sm:$0x3] %vm280, %v1920
    %1929 = vst.msk [vmem:[#allocation4 + $0x2] sm:$0xc] %vm282, %v1920
    %v1930 = vld [vmem:[#allocation2 + $0x10] sm:$0x30]
    %v1931 = vld [vmem:[#allocation2 + $0x8] sm:$0xc]
    %v1932 = vld [vmem:[#allocation5] sm:$0xf]
    %v1934 = vsel %vm171, %v1932, 0
    %1936 = vmatpush.msra.mxu0 0.0
    %1937 = vmatpush.msra.mxu0 0.0
    %1938 = vmatpush.msra.mxu0 0.0
    %1939 = vmatpush.msra.mxu0 0.0
    %1940 = vmatpush.msra.mxu0 0.0
    %1941 = vmatpush.msra.mxu0 0.0
    %1942 = vmatpush.msra.mxu0 0.0
    %1943 = vmatpush.msra.mxu0 0.0
    %1944 = vmatpush.msra.mxu0 0.0
    %1945 = vmatpush.msra.mxu0 0.0
    %1946 = vmatpush.msra.mxu0 0.0
    %1947 = vmatpush.msra.mxu0 0.0
    %1948 = vmatpush.msra.mxu0 %v1235
    %1949 = vmatpush.msra.mxu0 %v1234
    %1950 = vmatpush.msra.mxu0 %v1233
    %1951 = vmatpush.msra.mxu0 %v1232
    %1952 = vmatmul.f32.gmra.mxu0 %v1934
    %v1953 = vpop.f32.mrf.mxu0
    %v1954 = vadd.f32 0.0, %v1953
    %1955 = vdwg.mxu0
    %v1957 = vrot.slane %v1954, 4
    %v1959 = vadd.f32 %v1930, %v1957
    %v1960 = vrot.slane %v1932, 2
    %v1961 = vsel %vm171, %v1960, 0
    %1963 = vmatpush.msra.mxu0 0.0
    %1964 = vmatpush.msra.mxu0 0.0
    %1965 = vmatpush.msra.mxu0 0.0
    %1966 = vmatpush.msra.mxu0 0.0
    %1967 = vmatpush.msra.mxu0 0.0
    %1968 = vmatpush.msra.mxu0 0.0
    %1969 = vmatpush.msra.mxu0 0.0
    %1970 = vmatpush.msra.mxu0 0.0
    %1971 = vmatpush.msra.mxu0 0.0
    %1972 = vmatpush.msra.mxu0 0.0
    %1973 = vmatpush.msra.mxu0 0.0
    %1974 = vmatpush.msra.mxu0 0.0
    %1975 = vmatpush.msra.mxu0 %v1239
    %1976 = vmatpush.msra.mxu0 %v1238
    %1977 = vmatpush.msra.mxu0 %v1237
    %1978 = vmatpush.msra.mxu0 %v1236
    %1979 = vmatmul.f32.gmra.mxu0 %v1961
    %v1980 = vpop.f32.mrf.mxu0
    %v1981 = vadd.f32 0.0, %v1980
    %1982 = vdwg.mxu0
    %v1984 = vrot.slane %v1981, 6
    %v1986 = vadd.f32 %v1931, %v1984
    %v1988 = vrot.slane %v1959, 4
    %v1990 = vsel %vm226, %v1988, %v1986
    %v1991 = vxor.u32 %v1990, 2147483648
    %v1992 = vmul.f32 %v1991, 1.442695
    %v1993 = vpow.pop %v1992
    %v1994 = vadd.f32 %v1993, 1.0
    %v1995 = vrcp.pop %v1994
    %v1996 = vmul.f32 %v1994, %v1995
    %v1997 = vsub.f32 1.0, %v1996
    %v1998 = vmul.f32 %v1995, %v1997
    %v1999 = vadd.f32 %v1995, %v1998
    %vm2000 = vweird.f32 %v1994
    %vm2001 = vweird.f32 %v1995
    %vm2002 = vmor %vm2000, %vm2001
    %v2003 = vsel %vm2002, %v1995, %v1999
    %v2004 = vand.u32 2147483647, %v1994
    %vm2005 = vcmp.eq.f32.partialorder %v2004, 8.507059e+37
    %v2006 = vand.u32 %v1994, 2147483648
    %v2007 = vor.u32 1.1754944e-38, %v2006
    %v2008 = vsel %vm2005, %v2007, %v2003
    %v2009 = vmul.f32 1.0, %v2008
    %v2010 = vtanh.pop %v1990
    %v2011 = vld [vmem:[#allocation6] sm:$0xf]
    %2013 = vrot.lane.b32.xlu0 %v2011, 32
    %v2014 = vpop.permute.xlu0 %2013
    %v2016 = vmul.f32 %v2009, %v2014
    %2018 = vrot.lane.b32.xlu0 %v2010, 64
    %v2019 = vpop.permute.xlu0 %2018
    %v2021 = vmul.f32 %v2009, %v2019
    %2023 = vrot.lane.b32.xlu0 %v2021, 32
    %v2024 = vpop.permute.xlu0 %2023
    %v2026 = vadd.f32 %v2016, %v2024
    %v2027 = vtanh.pop %v2026
    %2029 = vrot.lane.b32.xlu0 %v2027, 64
    %v2030 = vpop.permute.xlu0 %2029
    %v2032 = vmul.f32 %v2009, %v2030
    %2034 = vrot.lane.b32.xlu0 %v2032, 32
    %v2035 = vpop.permute.xlu0 %2034
    %2037 = vst.msk [vmem:[#allocation5] sm:$0xf] %vm157, %v2035
    %2039 = vrot.lane.b32.xlu0 %v2026, 96
    %v2040 = vpop.permute.xlu0 %2039
    %2042 = vst.msk [vmem:[#allocation6] sm:$0xf] %vm157, %v2040
    %2043 = vst.msk [vmem:[#allocation3 + $0xc] sm:$0x3] %vm280, %v2035
    %2044 = vst.msk [vmem:[#allocation4] sm:$0xc] %vm282, %v2035
    %v2045 = vld [vmem:[#allocation2 + $0x10] sm:$0xc0]
    %v2046 = vld [vmem:[#allocation2 + $0x8] sm:$0x3]
    %v2047 = vld [vmem:[#allocation5] sm:$0xf]
    %v2049 = vsel %vm171, %v2047, 0
    %2051 = vmatpush.msra.mxu0 0.0
    %2052 = vmatpush.msra.mxu0 0.0
    %2053 = vmatpush.msra.mxu0 0.0
    %2054 = vmatpush.msra.mxu0 0.0
    %2055 = vmatpush.msra.mxu0 0.0
    %2056 = vmatpush.msra.mxu0 0.0
    %2057 = vmatpush.msra.mxu0 0.0
    %2058 = vmatpush.msra.mxu0 0.0
    %2059 = vmatpush.msra.mxu0 0.0
    %2060 = vmatpush.msra.mxu0 0.0
    %2061 = vmatpush.msra.mxu0 0.0
    %2062 = vmatpush.msra.mxu0 0.0
    %2063 = vmatpush.msra.mxu0 %v1235
    %2064 = vmatpush.msra.mxu0 %v1234
    %2065 = vmatpush.msra.mxu0 %v1233
    %2066 = vmatpush.msra.mxu0 %v1232
    %2067 = vmatmul.f32.gmra.mxu0 %v2049
    %v2068 = vpop.f32.mrf.mxu0
    %v2069 = vadd.f32 0.0, %v2068
    %2070 = vdwg.mxu0
    %v2072 = vrot.slane %v2069, 2
    %v2074 = vadd.f32 %v2045, %v2072
    %v2075 = vrot.slane %v2047, 2
    %v2076 = vsel %vm171, %v2075, 0
    %2078 = vmatpush.msra.mxu0 0.0
    %2079 = vmatpush.msra.mxu0 0.0
    %2080 = vmatpush.msra.mxu0 0.0
    %2081 = vmatpush.msra.mxu0 0.0
    %2082 = vmatpush.msra.mxu0 0.0
    %2083 = vmatpush.msra.mxu0 0.0
    %2084 = vmatpush.msra.mxu0 0.0
    %2085 = vmatpush.msra.mxu0 0.0
    %2086 = vmatpush.msra.mxu0 0.0
    %2087 = vmatpush.msra.mxu0 0.0
    %2088 = vmatpush.msra.mxu0 0.0
    %2089 = vmatpush.msra.mxu0 0.0
    %2090 = vmatpush.msra.mxu0 %v1239
    %2091 = vmatpush.msra.mxu0 %v1238
    %2092 = vmatpush.msra.mxu0 %v1237
    %2093 = vmatpush.msra.mxu0 %v1236
    %2094 = vmatmul.f32.gmra.mxu0 %v2076
    %v2095 = vpop.f32.mrf.mxu0
    %v2096 = vadd.f32 0.0, %v2095
    %2097 = vdwg.mxu0
    %v2098 = vadd.f32 %v2046, %v2096
    %v2100 = vrot.slane %v2074, 6
    %v2103 = vrot.slane %v2098, 6
    %v2105 = vsel %vm226, %v2100, %v2103
    %v2106 = vxor.u32 %v2105, 2147483648
    %v2107 = vmul.f32 %v2106, 1.442695
    %v2108 = vpow.pop %v2107
    %v2109 = vadd.f32 %v2108, 1.0
    %v2110 = vrcp.pop %v2109
    %v2111 = vmul.f32 %v2109, %v2110
    %v2112 = vsub.f32 1.0, %v2111
    %v2113 = vmul.f32 %v2110, %v2112
    %v2114 = vadd.f32 %v2110, %v2113
    %vm2115 = vweird.f32 %v2109
    %vm2116 = vweird.f32 %v2110
    %vm2117 = vmor %vm2115, %vm2116
    %v2118 = vsel %vm2117, %v2110, %v2114
    %v2119 = vand.u32 2147483647, %v2109
    %vm2120 = vcmp.eq.f32.partialorder %v2119, 8.507059e+37
    %v2121 = vand.u32 %v2109, 2147483648
    %v2122 = vor.u32 1.1754944e-38, %v2121
    %v2123 = vsel %vm2120, %v2122, %v2118
    %v2124 = vmul.f32 1.0, %v2123
    %v2125 = vtanh.pop %v2105
    %v2126 = vld [vmem:[#allocation6] sm:$0xf]
    %2128 = vrot.lane.b32.xlu0 %v2126, 32
    %v2129 = vpop.permute.xlu0 %2128
    %v2131 = vmul.f32 %v2124, %v2129
    %2133 = vrot.lane.b32.xlu0 %v2125, 64
    %v2134 = vpop.permute.xlu0 %2133
    %v2136 = vmul.f32 %v2124, %v2134
    %2138 = vrot.lane.b32.xlu0 %v2136, 32
    %v2139 = vpop.permute.xlu0 %2138
    %v2141 = vadd.f32 %v2131, %v2139
    %v2142 = vtanh.pop %v2141
    %2144 = vrot.lane.b32.xlu0 %v2142, 64
    %v2145 = vpop.permute.xlu0 %2144
    %v2147 = vmul.f32 %v2124, %v2145
    %2149 = vrot.lane.b32.xlu0 %v2147, 32
    %v2150 = vpop.permute.xlu0 %2149
    %2152 = vst.msk [vmem:[#allocation5] sm:$0xf] %vm157, %v2150
    %2154 = vrot.lane.b32.xlu0 %v2141, 96
    %v2155 = vpop.permute.xlu0 %2154
    %2157 = vst.msk [vmem:[#allocation6] sm:$0xf] %vm157, %v2155
    %2158 = vst.msk [vmem:[#allocation3 + $0xe] sm:$0x3] %vm280, %v2150
    %2159 = vst.msk [vmem:[#allocation4 - $0x2] sm:$0xc] %vm282, %v2150
    %v2160 = vld [vmem:[%s9] sm:$0xff]
    %v2161 = vld [vmem:[%s9 + $0x8] sm:$0xff]
    %v2162 = vld [vmem:[%s9 + $0x10] sm:$0xff]
    %v2163 = vld [vmem:[%s9 + $0x18] sm:$0xff]
    %v2164 = vld [vmem:[%s9 + $0x20] sm:$0xff]
    %v2165 = vld [vmem:[%s9 + $0x28] sm:$0xff]
    %v2166 = vld [vmem:[%s9 + $0x30] sm:$0xff]
    %v2167 = vld [vmem:[%s9 + $0x38] sm:$0xff]
    %v2168 = vld [vmem:[%s10] sm:$0x1]
    %v2169 = vld [vmem:[%s11] sm:$0x1]
    %v2170 = vld [vmem:[#allocation3] sm:$0x3]
    %v2171 = vld [vmem:[#allocation4] sm:$0x3]
    %v2173 = vsel %vm171, %v2171, 0
    %2175 = vmatpush.msra.mxu0 0.0
    %2176 = vmatpush.msra.mxu0 0.0
    %2177 = vmatpush.msra.mxu0 0.0
    %2178 = vmatpush.msra.mxu0 0.0
    %2179 = vmatpush.msra.mxu0 0.0
    %2180 = vmatpush.msra.mxu0 0.0
    %2181 = vmatpush.msra.mxu0 0.0
    %2182 = vmatpush.msra.mxu0 0.0
    %2183 = vmatpush.msra.mxu0 0.0
    %2184 = vmatpush.msra.mxu0 0.0
    %2185 = vmatpush.msra.mxu0 0.0
    %2186 = vmatpush.msra.mxu0 0.0
    %2187 = vmatpush.msra.mxu0 %v2167
    %2188 = vmatpush.msra.mxu0 %v2166
    %2189 = vmatpush.msra.mxu0 %v2165
    %2190 = vmatpush.msra.mxu0 %v2164
    %2191 = vmatmul.f32.gmra.mxu0 %v2173
    %v2192 = vpop.f32.mrf.mxu0
    %v2193 = vadd.f32 0.0, %v2192
    %2194 = vdwg.mxu0
    %v2196 = vsel %vm171, %v2170, 0
    %2198 = vmatpush.msra.mxu0 0.0
    %2199 = vmatpush.msra.mxu0 0.0
    %2200 = vmatpush.msra.mxu0 0.0
    %2201 = vmatpush.msra.mxu0 0.0
    %2202 = vmatpush.msra.mxu0 0.0
    %2203 = vmatpush.msra.mxu0 0.0
    %2204 = vmatpush.msra.mxu0 0.0
    %2205 = vmatpush.msra.mxu0 0.0
    %2206 = vmatpush.msra.mxu0 0.0
    %2207 = vmatpush.msra.mxu0 0.0
    %2208 = vmatpush.msra.mxu0 0.0
    %2209 = vmatpush.msra.mxu0 0.0
    %2210 = vmatpush.msra.mxu0 %v2163
    %2211 = vmatpush.msra.mxu0 %v2162
    %2212 = vmatpush.msra.mxu0 %v2161
    %2213 = vmatpush.msra.mxu0 %v2160
    %2214 = vmatmul.f32.gmra.mxu0 %v2196
    %v2215 = vpop.f32.mrf.mxu0
    %v2216 = vadd.f32 %v2193, %v2215
    %2217 = vdwg.mxu0
    %v2219 = vperm.slane %v2169, 0
    %v2221 = vadd.f32 %v2216, %v2219
    %v2223 = vperm.slane %v2168, 0
    %v2225 = vmul.f32 %v2223, 0.0
    %v2226 = vadd.f32 %v2221, %v2225
    %v2227 = vsel %vm226, %v2226, -inf
    %2228 = vmax.xlane.f32.xlu0 %v2227
    %v2229 = vpop.xlane.xlu0 %2228
    %v2230 = vsub.f32 %v2226, %v2229
    %v2231 = vmul.f32 %v2230, 1.442695
    %v2232 = vpow.pop %v2231
    %v2233 = vsel %vm226, %v2232, 0.0
    %2234 = vadd.xlane.f32.xlu0 %v2233
    %v2235 = vpop.xlane.xlu0 %2234
    %v2236 = vlog2.pop %v2235
    %v2237 = vmul.f32 %v2236, 0.6931472
    %v2238 = vsub.f32 %v2230, %v2237
    %2239 = vst [vmem:[%s12] sm:$0x3] %v2238
    %v2240 = vlaneseq
    %v2241 = vand.u32 %v2240, 127
    %v2242 = vcvt.s32.f32 %v2241
    %vm2243 = vcmp.eq.f32.partialorder %v2226, %v2229
    %v2244 = vsel %vm2243, %v2242, 128.0
    %v2245 = vsel %vm226, %v2244, inf
    %2246 = vmin.xlane.f32.xlu0 %v2245
    %v2247 = vpop.xlane.xlu0 %2246
    %v2248 = vld [vmem:[#allocation3 + $0x2] sm:$0x3]
    %v2249 = vld [vmem:[#allocation4 + $0x2] sm:$0x3]
    %v2251 = vsel %vm171, %v2249, 0
    %2253 = vmatpush.msra.mxu0 0.0
    %2254 = vmatpush.msra.mxu0 0.0
    %2255 = vmatpush.msra.mxu0 0.0
    %2256 = vmatpush.msra.mxu0 0.0
    %2257 = vmatpush.msra.mxu0 0.0
    %2258 = vmatpush.msra.mxu0 0.0
    %2259 = vmatpush.msra.mxu0 0.0
    %2260 = vmatpush.msra.mxu0 0.0
    %2261 = vmatpush.msra.mxu0 0.0
    %2262 = vmatpush.msra.mxu0 0.0
    %2263 = vmatpush.msra.mxu0 0.0
    %2264 = vmatpush.msra.mxu0 0.0
    %2265 = vmatpush.msra.mxu0 %v2167
    %2266 = vmatpush.msra.mxu0 %v2166
    %2267 = vmatpush.msra.mxu0 %v2165
    %2268 = vmatpush.msra.mxu0 %v2164
    %2269 = vmatmul.f32.gmra.mxu0 %v2251
    %v2270 = vpop.f32.mrf.mxu0
    %v2271 = vadd.f32 0.0, %v2270
    %2272 = vdwg.mxu0
    %v2274 = vsel %vm171, %v2248, 0
    %2276 = vmatpush.msra.mxu0 0.0
    %2277 = vmatpush.msra.mxu0 0.0
    %2278 = vmatpush.msra.mxu0 0.0
    %2279 = vmatpush.msra.mxu0 0.0
    %2280 = vmatpush.msra.mxu0 0.0
    %2281 = vmatpush.msra.mxu0 0.0
    %2282 = vmatpush.msra.mxu0 0.0
    %2283 = vmatpush.msra.mxu0 0.0
    %2284 = vmatpush.msra.mxu0 0.0
    %2285 = vmatpush.msra.mxu0 0.0
    %2286 = vmatpush.msra.mxu0 0.0
    %2287 = vmatpush.msra.mxu0 0.0
    %2288 = vmatpush.msra.mxu0 %v2163
    %2289 = vmatpush.msra.mxu0 %v2162
    %2290 = vmatpush.msra.mxu0 %v2161
    %2291 = vmatpush.msra.mxu0 %v2160
    %2292 = vmatmul.f32.gmra.mxu0 %v2274
    %v2293 = vpop.f32.mrf.mxu0
    %v2294 = vadd.f32 %v2271, %v2293
    %2295 = vdwg.mxu0
    %v2296 = vadd.f32 %v2294, %v2219
    %v2297 = vmul.f32 %v2247, %v2223
    %v2298 = vadd.f32 %v2296, %v2297
    %v2299 = vsel %vm226, %v2298, -inf
    %2300 = vmax.xlane.f32.xlu0 %v2299
    %v2301 = vpop.xlane.xlu0 %2300
    %v2302 = vsub.f32 %v2298, %v2301
    %v2303 = vmul.f32 %v2302, 1.442695
    %v2304 = vpow.pop %v2303
    %v2305 = vsel %vm226, %v2304, 0.0
    %2306 = vadd.xlane.f32.xlu0 %v2305
    %v2307 = vpop.xlane.xlu0 %2306
    %v2308 = vlog2.pop %v2307
    %v2309 = vmul.f32 %v2308, 0.6931472
    %v2310 = vsub.f32 %v2302, %v2309
    %2311 = vst [vmem:[%s12 + $0x2] sm:$0x3] %v2310
    %vm2312 = vcmp.eq.f32.partialorder %v2298, %v2301
    %v2313 = vsel %vm2312, %v2242, 128.0
    %v2314 = vsel %vm226, %v2313, inf
    %2315 = vmin.xlane.f32.xlu0 %v2314
    %v2316 = vpop.xlane.xlu0 %2315
    %v2317 = vld [vmem:[#allocation3 + $0x4] sm:$0x3]
    %v2318 = vld [vmem:[#allocation4 + $0x4] sm:$0x3]
    %v2320 = vsel %vm171, %v2318, 0
    %2322 = vmatpush.msra.mxu0 0.0
    %2323 = vmatpush.msra.mxu0 0.0
    %2324 = vmatpush.msra.mxu0 0.0
    %2325 = vmatpush.msra.mxu0 0.0
    %2326 = vmatpush.msra.mxu0 0.0
    %2327 = vmatpush.msra.mxu0 0.0
    %2328 = vmatpush.msra.mxu0 0.0
    %2329 = vmatpush.msra.mxu0 0.0
    %2330 = vmatpush.msra.mxu0 0.0
    %2331 = vmatpush.msra.mxu0 0.0
    %2332 = vmatpush.msra.mxu0 0.0
    %2333 = vmatpush.msra.mxu0 0.0
    %2334 = vmatpush.msra.mxu0 %v2167
    %2335 = vmatpush.msra.mxu0 %v2166
    %2336 = vmatpush.msra.mxu0 %v2165
    %2337 = vmatpush.msra.mxu0 %v2164
    %2338 = vmatmul.f32.gmra.mxu0 %v2320
    %v2339 = vpop.f32.mrf.mxu0
    %v2340 = vadd.f32 0.0, %v2339
    %2341 = vdwg.mxu0
    %v2343 = vsel %vm171, %v2317, 0
    %2345 = vmatpush.msra.mxu0 0.0
    %2346 = vmatpush.msra.mxu0 0.0
    %2347 = vmatpush.msra.mxu0 0.0
    %2348 = vmatpush.msra.mxu0 0.0
    %2349 = vmatpush.msra.mxu0 0.0
    %2350 = vmatpush.msra.mxu0 0.0
    %2351 = vmatpush.msra.mxu0 0.0
    %2352 = vmatpush.msra.mxu0 0.0
    %2353 = vmatpush.msra.mxu0 0.0
    %2354 = vmatpush.msra.mxu0 0.0
    %2355 = vmatpush.msra.mxu0 0.0
    %2356 = vmatpush.msra.mxu0 0.0
    %2357 = vmatpush.msra.mxu0 %v2163
    %2358 = vmatpush.msra.mxu0 %v2162
    %2359 = vmatpush.msra.mxu0 %v2161
    %2360 = vmatpush.msra.mxu0 %v2160
    %2361 = vmatmul.f32.gmra.mxu0 %v2343
    %v2362 = vpop.f32.mrf.mxu0
    %v2363 = vadd.f32 %v2340, %v2362
    %2364 = vdwg.mxu0
    %v2365 = vadd.f32 %v2363, %v2219
    %v2366 = vmul.f32 %v2316, %v2223
    %v2367 = vadd.f32 %v2365, %v2366
    %v2368 = vsel %vm226, %v2367, -inf
    %2369 = vmax.xlane.f32.xlu0 %v2368
    %v2370 = vpop.xlane.xlu0 %2369
    %v2371 = vsub.f32 %v2367, %v2370
    %v2372 = vmul.f32 %v2371, 1.442695
    %v2373 = vpow.pop %v2372
    %v2374 = vsel %vm226, %v2373, 0.0
    %2375 = vadd.xlane.f32.xlu0 %v2374
    %v2376 = vpop.xlane.xlu0 %2375
    %v2377 = vlog2.pop %v2376
    %v2378 = vmul.f32 %v2377, 0.6931472
    %v2379 = vsub.f32 %v2371, %v2378
    %2380 = vst [vmem:[%s12 + $0x4] sm:$0x3] %v2379
    %vm2381 = vcmp.eq.f32.partialorder %v2367, %v2370
    %v2382 = vsel %vm2381, %v2242, 128.0
    %v2383 = vsel %vm226, %v2382, inf
    %2384 = vmin.xlane.f32.xlu0 %v2383
    %v2385 = vpop.xlane.xlu0 %2384
    %v2386 = vld [vmem:[#allocation3 + $0x6] sm:$0x3]
    %v2387 = vld [vmem:[#allocation4 + $0x6] sm:$0x3]
    %v2389 = vsel %vm171, %v2387, 0
    %2391 = vmatpush.msra.mxu0 0.0
    %2392 = vmatpush.msra.mxu0 0.0
    %2393 = vmatpush.msra.mxu0 0.0
    %2394 = vmatpush.msra.mxu0 0.0
    %2395 = vmatpush.msra.mxu0 0.0
    %2396 = vmatpush.msra.mxu0 0.0
    %2397 = vmatpush.msra.mxu0 0.0
    %2398 = vmatpush.msra.mxu0 0.0
    %2399 = vmatpush.msra.mxu0 0.0
    %2400 = vmatpush.msra.mxu0 0.0
    %2401 = vmatpush.msra.mxu0 0.0
    %2402 = vmatpush.msra.mxu0 0.0
    %2403 = vmatpush.msra.mxu0 %v2167
    %2404 = vmatpush.msra.mxu0 %v2166
    %2405 = vmatpush.msra.mxu0 %v2165
    %2406 = vmatpush.msra.mxu0 %v2164
    %2407 = vmatmul.f32.gmra.mxu0 %v2389
    %v2408 = vpop.f32.mrf.mxu0
    %v2409 = vadd.f32 0.0, %v2408
    %2410 = vdwg.mxu0
    %v2412 = vsel %vm171, %v2386, 0
    %2414 = vmatpush.msra.mxu0 0.0
    %2415 = vmatpush.msra.mxu0 0.0
    %2416 = vmatpush.msra.mxu0 0.0
    %2417 = vmatpush.msra.mxu0 0.0
    %2418 = vmatpush.msra.mxu0 0.0
    %2419 = vmatpush.msra.mxu0 0.0
    %2420 = vmatpush.msra.mxu0 0.0
    %2421 = vmatpush.msra.mxu0 0.0
    %2422 = vmatpush.msra.mxu0 0.0
    %2423 = vmatpush.msra.mxu0 0.0
    %2424 = vmatpush.msra.mxu0 0.0
    %2425 = vmatpush.msra.mxu0 0.0
    %2426 = vmatpush.msra.mxu0 %v2163
    %2427 = vmatpush.msra.mxu0 %v2162
    %2428 = vmatpush.msra.mxu0 %v2161
    %2429 = vmatpush.msra.mxu0 %v2160
    %2430 = vmatmul.f32.gmra.mxu0 %v2412
    %v2431 = vpop.f32.mrf.mxu0
    %v2432 = vadd.f32 %v2409, %v2431
    %2433 = vdwg.mxu0
    %v2434 = vadd.f32 %v2432, %v2219
    %v2435 = vmul.f32 %v2385, %v2223
    %v2436 = vadd.f32 %v2434, %v2435
    %v2437 = vsel %vm226, %v2436, -inf
    %2438 = vmax.xlane.f32.xlu0 %v2437
    %v2439 = vpop.xlane.xlu0 %2438
    %v2440 = vsub.f32 %v2436, %v2439
    %v2441 = vmul.f32 %v2440, 1.442695
    %v2442 = vpow.pop %v2441
    %v2443 = vsel %vm226, %v2442, 0.0
    %2444 = vadd.xlane.f32.xlu0 %v2443
    %v2445 = vpop.xlane.xlu0 %2444
    %v2446 = vlog2.pop %v2445
    %v2447 = vmul.f32 %v2446, 0.6931472
    %v2448 = vsub.f32 %v2440, %v2447
    %2449 = vst [vmem:[%s12 + $0x6] sm:$0x3] %v2448
    %vm2450 = vcmp.eq.f32.partialorder %v2436, %v2439
    %v2451 = vsel %vm2450, %v2242, 128.0
    %v2452 = vsel %vm226, %v2451, inf
    %2453 = vmin.xlane.f32.xlu0 %v2452
    %v2454 = vpop.xlane.xlu0 %2453
    %v2455 = vld [vmem:[#allocation3 + $0x8] sm:$0x3]
    %v2456 = vld [vmem:[#allocation4 + $0x8] sm:$0x3]
    %v2458 = vsel %vm171, %v2456, 0
    %2460 = vmatpush.msra.mxu0 0.0
    %2461 = vmatpush.msra.mxu0 0.0
    %2462 = vmatpush.msra.mxu0 0.0
    %2463 = vmatpush.msra.mxu0 0.0
    %2464 = vmatpush.msra.mxu0 0.0
    %2465 = vmatpush.msra.mxu0 0.0
    %2466 = vmatpush.msra.mxu0 0.0
    %2467 = vmatpush.msra.mxu0 0.0
    %2468 = vmatpush.msra.mxu0 0.0
    %2469 = vmatpush.msra.mxu0 0.0
    %2470 = vmatpush.msra.mxu0 0.0
    %2471 = vmatpush.msra.mxu0 0.0
    %2472 = vmatpush.msra.mxu0 %v2167
    %2473 = vmatpush.msra.mxu0 %v2166
    %2474 = vmatpush.msra.mxu0 %v2165
    %2475 = vmatpush.msra.mxu0 %v2164
    %2476 = vmatmul.f32.gmra.mxu0 %v2458
    %v2477 = vpop.f32.mrf.mxu0
    %v2478 = vadd.f32 0.0, %v2477
    %2479 = vdwg.mxu0
    %v2481 = vsel %vm171, %v2455, 0
    %2483 = vmatpush.msra.mxu0 0.0
    %2484 = vmatpush.msra.mxu0 0.0
    %2485 = vmatpush.msra.mxu0 0.0
    %2486 = vmatpush.msra.mxu0 0.0
    %2487 = vmatpush.msra.mxu0 0.0
    %2488 = vmatpush.msra.mxu0 0.0
    %2489 = vmatpush.msra.mxu0 0.0
    %2490 = vmatpush.msra.mxu0 0.0
    %2491 = vmatpush.msra.mxu0 0.0
    %2492 = vmatpush.msra.mxu0 0.0
    %2493 = vmatpush.msra.mxu0 0.0
    %2494 = vmatpush.msra.mxu0 0.0
    %2495 = vmatpush.msra.mxu0 %v2163
    %2496 = vmatpush.msra.mxu0 %v2162
    %2497 = vmatpush.msra.mxu0 %v2161
    %2498 = vmatpush.msra.mxu0 %v2160
    %2499 = vmatmul.f32.gmra.mxu0 %v2481
    %v2500 = vpop.f32.mrf.mxu0
    %v2501 = vadd.f32 %v2478, %v2500
    %2502 = vdwg.mxu0
    %v2503 = vadd.f32 %v2501, %v2219
    %v2504 = vmul.f32 %v2454, %v2223
    %v2505 = vadd.f32 %v2503, %v2504
    %v2506 = vsel %vm226, %v2505, -inf
    %2507 = vmax.xlane.f32.xlu0 %v2506
    %v2508 = vpop.xlane.xlu0 %2507
    %v2509 = vsub.f32 %v2505, %v2508
    %v2510 = vmul.f32 %v2509, 1.442695
    %v2511 = vpow.pop %v2510
    %v2512 = vsel %vm226, %v2511, 0.0
    %2513 = vadd.xlane.f32.xlu0 %v2512
    %v2514 = vpop.xlane.xlu0 %2513
    %v2515 = vlog2.pop %v2514
    %v2516 = vmul.f32 %v2515, 0.6931472
    %v2517 = vsub.f32 %v2509, %v2516
    %2518 = vst [vmem:[%s12 + $0x8] sm:$0x3] %v2517
    %vm2519 = vcmp.eq.f32.partialorder %v2505, %v2508
    %v2520 = vsel %vm2519, %v2242, 128.0
    %v2521 = vsel %vm226, %v2520, inf
    %2522 = vmin.xlane.f32.xlu0 %v2521
    %v2523 = vpop.xlane.xlu0 %2522
    %v2524 = vld [vmem:[#allocation3 + $0xa] sm:$0x3]
    %v2525 = vld [vmem:[#allocation4 + $0xa] sm:$0x3]
    %v2527 = vsel %vm171, %v2525, 0
    %2529 = vmatpush.msra.mxu0 0.0
    %2530 = vmatpush.msra.mxu0 0.0
    %2531 = vmatpush.msra.mxu0 0.0
    %2532 = vmatpush.msra.mxu0 0.0
    %2533 = vmatpush.msra.mxu0 0.0
    %2534 = vmatpush.msra.mxu0 0.0
    %2535 = vmatpush.msra.mxu0 0.0
    %2536 = vmatpush.msra.mxu0 0.0
    %2537 = vmatpush.msra.mxu0 0.0
    %2538 = vmatpush.msra.mxu0 0.0
    %2539 = vmatpush.msra.mxu0 0.0
    %2540 = vmatpush.msra.mxu0 0.0
    %2541 = vmatpush.msra.mxu0 %v2167
    %2542 = vmatpush.msra.mxu0 %v2166
    %2543 = vmatpush.msra.mxu0 %v2165
    %2544 = vmatpush.msra.mxu0 %v2164
    %2545 = vmatmul.f32.gmra.mxu0 %v2527
    %v2546 = vpop.f32.mrf.mxu0
    %v2547 = vadd.f32 0.0, %v2546
    %2548 = vdwg.mxu0
    %v2550 = vsel %vm171, %v2524, 0
    %2552 = vmatpush.msra.mxu0 0.0
    %2553 = vmatpush.msra.mxu0 0.0
    %2554 = vmatpush.msra.mxu0 0.0
    %2555 = vmatpush.msra.mxu0 0.0
    %2556 = vmatpush.msra.mxu0 0.0
    %2557 = vmatpush.msra.mxu0 0.0
    %2558 = vmatpush.msra.mxu0 0.0
    %2559 = vmatpush.msra.mxu0 0.0
    %2560 = vmatpush.msra.mxu0 0.0
    %2561 = vmatpush.msra.mxu0 0.0
    %2562 = vmatpush.msra.mxu0 0.0
    %2563 = vmatpush.msra.mxu0 0.0
    %2564 = vmatpush.msra.mxu0 %v2163
    %2565 = vmatpush.msra.mxu0 %v2162
    %2566 = vmatpush.msra.mxu0 %v2161
    %2567 = vmatpush.msra.mxu0 %v2160
    %2568 = vmatmul.f32.gmra.mxu0 %v2550
    %v2569 = vpop.f32.mrf.mxu0
    %v2570 = vadd.f32 %v2547, %v2569
    %2571 = vdwg.mxu0
    %v2572 = vadd.f32 %v2570, %v2219
    %v2573 = vmul.f32 %v2523, %v2223
    %v2574 = vadd.f32 %v2572, %v2573
    %v2575 = vsel %vm226, %v2574, -inf
    %2576 = vmax.xlane.f32.xlu0 %v2575
    %v2577 = vpop.xlane.xlu0 %2576
    %v2578 = vsub.f32 %v2574, %v2577
    %v2579 = vmul.f32 %v2578, 1.442695
    %v2580 = vpow.pop %v2579
    %v2581 = vsel %vm226, %v2580, 0.0
    %2582 = vadd.xlane.f32.xlu0 %v2581
    %v2583 = vpop.xlane.xlu0 %2582
    %v2584 = vlog2.pop %v2583
    %v2585 = vmul.f32 %v2584, 0.6931472
    %v2586 = vsub.f32 %v2578, %v2585
    %2587 = vst [vmem:[%s12 + $0xa] sm:$0x3] %v2586
    %vm2588 = vcmp.eq.f32.partialorder %v2574, %v2577
    %v2589 = vsel %vm2588, %v2242, 128.0
    %v2590 = vsel %vm226, %v2589, inf
    %2591 = vmin.xlane.f32.xlu0 %v2590
    %v2592 = vpop.xlane.xlu0 %2591
    %v2593 = vld [vmem:[#allocation3 + $0xc] sm:$0x3]
    %v2594 = vld [vmem:[#allocation4 + $0xc] sm:$0x3]
    %v2596 = vsel %vm171, %v2594, 0
    %2598 = vmatpush.msra.mxu0 0.0
    %2599 = vmatpush.msra.mxu0 0.0
    %2600 = vmatpush.msra.mxu0 0.0
    %2601 = vmatpush.msra.mxu0 0.0
    %2602 = vmatpush.msra.mxu0 0.0
    %2603 = vmatpush.msra.mxu0 0.0
    %2604 = vmatpush.msra.mxu0 0.0
    %2605 = vmatpush.msra.mxu0 0.0
    %2606 = vmatpush.msra.mxu0 0.0
    %2607 = vmatpush.msra.mxu0 0.0
    %2608 = vmatpush.msra.mxu0 0.0
    %2609 = vmatpush.msra.mxu0 0.0
    %2610 = vmatpush.msra.mxu0 %v2167
    %2611 = vmatpush.msra.mxu0 %v2166
    %2612 = vmatpush.msra.mxu0 %v2165
    %2613 = vmatpush.msra.mxu0 %v2164
    %2614 = vmatmul.f32.gmra.mxu0 %v2596
    %v2615 = vpop.f32.mrf.mxu0
    %v2616 = vadd.f32 0.0, %v2615
    %2617 = vdwg.mxu0
    %v2619 = vsel %vm171, %v2593, 0
    %2621 = vmatpush.msra.mxu0 0.0
    %2622 = vmatpush.msra.mxu0 0.0
    %2623 = vmatpush.msra.mxu0 0.0
    %2624 = vmatpush.msra.mxu0 0.0
    %2625 = vmatpush.msra.mxu0 0.0
    %2626 = vmatpush.msra.mxu0 0.0
    %2627 = vmatpush.msra.mxu0 0.0
    %2628 = vmatpush.msra.mxu0 0.0
    %2629 = vmatpush.msra.mxu0 0.0
    %2630 = vmatpush.msra.mxu0 0.0
    %2631 = vmatpush.msra.mxu0 0.0
    %2632 = vmatpush.msra.mxu0 0.0
    %2633 = vmatpush.msra.mxu0 %v2163
    %2634 = vmatpush.msra.mxu0 %v2162
    %2635 = vmatpush.msra.mxu0 %v2161
    %2636 = vmatpush.msra.mxu0 %v2160
    %2637 = vmatmul.f32.gmra.mxu0 %v2619
    %v2638 = vpop.f32.mrf.mxu0
    %v2639 = vadd.f32 %v2616, %v2638
    %2640 = vdwg.mxu0
    %v2641 = vadd.f32 %v2639, %v2219
    %v2642 = vmul.f32 %v2592, %v2223
    %v2643 = vadd.f32 %v2641, %v2642
    %v2644 = vsel %vm226, %v2643, -inf
    %2645 = vmax.xlane.f32.xlu0 %v2644
    %v2646 = vpop.xlane.xlu0 %2645
    %v2647 = vsub.f32 %v2643, %v2646
    %v2648 = vmul.f32 %v2647, 1.442695
    %v2649 = vpow.pop %v2648
    %v2650 = vsel %vm226, %v2649, 0.0
    %2651 = vadd.xlane.f32.xlu0 %v2650
    %v2652 = vpop.xlane.xlu0 %2651
    %v2653 = vlog2.pop %v2652
    %v2654 = vmul.f32 %v2653, 0.6931472
    %v2655 = vsub.f32 %v2647, %v2654
    %2656 = vst [vmem:[%s12 + $0xc] sm:$0x3] %v2655
    %vm2657 = vcmp.eq.f32.partialorder %v2643, %v2646
    %v2658 = vsel %vm2657, %v2242, 128.0
    %v2659 = vsel %vm226, %v2658, inf
    %2660 = vmin.xlane.f32.xlu0 %v2659
    %v2661 = vpop.xlane.xlu0 %2660
    %v2662 = vld [vmem:[#allocation3 + $0xe] sm:$0x3]
    %v2663 = vld [vmem:[#allocation4 + $0xe] sm:$0x3]
    %v2665 = vsel %vm171, %v2663, 0
    %2667 = vmatpush.msra.mxu0 0.0
    %2668 = vmatpush.msra.mxu0 0.0
    %2669 = vmatpush.msra.mxu0 0.0
    %2670 = vmatpush.msra.mxu0 0.0
    %2671 = vmatpush.msra.mxu0 0.0
    %2672 = vmatpush.msra.mxu0 0.0
    %2673 = vmatpush.msra.mxu0 0.0
    %2674 = vmatpush.msra.mxu0 0.0
    %2675 = vmatpush.msra.mxu0 0.0
    %2676 = vmatpush.msra.mxu0 0.0
    %2677 = vmatpush.msra.mxu0 0.0
    %2678 = vmatpush.msra.mxu0 0.0
    %2679 = vmatpush.msra.mxu0 %v2167
    %2680 = vmatpush.msra.mxu0 %v2166
    %2681 = vmatpush.msra.mxu0 %v2165
    %2682 = vmatpush.msra.mxu0 %v2164
    %2683 = vmatmul.f32.gmra.mxu0 %v2665
    %v2684 = vpop.f32.mrf.mxu0
    %v2685 = vadd.f32 0.0, %v2684
    %2686 = vdwg.mxu0
    %v2688 = vsel %vm171, %v2662, 0
    %2690 = vmatpush.msra.mxu0 0.0
    %2691 = vmatpush.msra.mxu0 0.0
    %2692 = vmatpush.msra.mxu0 0.0
    %2693 = vmatpush.msra.mxu0 0.0
    %2694 = vmatpush.msra.mxu0 0.0
    %2695 = vmatpush.msra.mxu0 0.0
    %2696 = vmatpush.msra.mxu0 0.0
    %2697 = vmatpush.msra.mxu0 0.0
    %2698 = vmatpush.msra.mxu0 0.0
    %2699 = vmatpush.msra.mxu0 0.0
    %2700 = vmatpush.msra.mxu0 0.0
    %2701 = vmatpush.msra.mxu0 0.0
    %2702 = vmatpush.msra.mxu0 %v2163
    %2703 = vmatpush.msra.mxu0 %v2162
    %2704 = vmatpush.msra.mxu0 %v2161
    %2705 = vmatpush.msra.mxu0 %v2160
    %2706 = vmatmul.f32.gmra.mxu0 %v2688
    %v2707 = vpop.f32.mrf.mxu0
    %v2708 = vadd.f32 %v2685, %v2707
    %2709 = vdwg.mxu0
    %v2710 = vadd.f32 %v2708, %v2219
    %v2711 = vmul.f32 %v2661, %v2223
    %v2712 = vadd.f32 %v2710, %v2711
    %v2713 = vsel %vm226, %v2712, -inf
    %2714 = vmax.xlane.f32.xlu0 %v2713
    %v2715 = vpop.xlane.xlu0 %2714
    %v2716 = vsub.f32 %v2712, %v2715
    %v2717 = vmul.f32 %v2716, 1.442695
    %v2718 = vpow.pop %v2717
    %v2719 = vsel %vm226, %v2718, 0.0
    %2720 = vadd.xlane.f32.xlu0 %v2719
    %v2721 = vpop.xlane.xlu0 %2720
    %v2722 = vlog2.pop %v2721
    %v2723 = vmul.f32 %v2722, 0.6931472
    %v2724 = vsub.f32 %v2716, %v2723
    %2725 = vst [vmem:[%s12 + $0xe] sm:$0x3] %v2724
    // Predicated region
    $region62: #{lstm_ner_tf_forward.1} parent=1 // pred_check
      _
    $region63: #{lstm_ner_tf_forward.1} parent=1 // pred_check_branch
      %2727 = sbr.rel (0) target = $region65
    $region64: #{lstm_ner_tf_forward.1} parent=1 // pred_region
      _
    $region65: #{lstm_ner_tf_forward.1} parent=1 // pred_fallthru
      _
    // Predicated region
    $region66: #{lstm_ner_tf_forward.1} parent=1 // pred_check
      _
    $region67: #{lstm_ner_tf_forward.1} parent=1 // pred_check_branch
      %2729 = sbr.rel (0) target = $region69
    $region68: #{lstm_ner_tf_forward.1} parent=1 // pred_region
      _
    $region69: #{lstm_ner_tf_forward.1} parent=1 // pred_fallthru
      _
    %2730 = vsyncpa [#allocation8], 1
    %2731 = vsyncpa [#allocation10], 1

</llo_original>
